<compile_context>
chip_gen: v7x
topology: tpu7x:2x2x1
jax: 0.10.0
libtpu: 0.0.40
codegen_flags: <defaults>
</compile_context>

<pallas_src>
import jax
import jax.numpy as jnp
from jax.experimental import pallas as pl
from jax.experimental.pallas import tpu as pltpu


# ----------------------------- Pallas kernel --------------------------------


def fused_gnn_kernel(h0_ref, a_ref, nes_ref, w1_ref, w2_ref,
                     b1_ref, b2_ref, gamma_ref, beta_ref,
                     mask_ref, p_ref, hw_ref, hb_ref,
                     out_ref, h_scr):
    """One grid step == one GIN layer; last step also does pool + head."""
    l = pl.program_id(0)
    last = pl.num_programs(0) - 1

    @pl.when(l == 0)
    def _():
        h_scr[...] = h0_ref[...]

    h = h_scr[...]                                                   # [Np, D] f32

    # --- message passing: aggr = A @ h + segment_sum(edge_emb -> dst) --------
    aggr = (jnp.dot(a_ref[...], h.astype(jnp.bfloat16),
                    preferred_element_type=jnp.float32)
            + nes_ref[0].astype(jnp.float32))                        # [Np, D]

    # --- GIN MLP: Linear(D,2D) -> ReLU -> Linear(2D,D) -----------------------
    hid = (jnp.dot(aggr.astype(jnp.bfloat16), w1_ref[0],
                   preferred_element_type=jnp.float32) + b1_ref[l])  # [Np, 2D]
    hid = jnp.maximum(hid, 0.0)
    out = (jnp.dot(hid.astype(jnp.bfloat16), w2_ref[0],
                   preferred_element_type=jnp.float32) + b2_ref[l])  # [Np, D]

    # --- BatchNorm1d (train-mode batch stats) over REAL nodes only -----------
    # mask_ref carries 1/N_real on real rows, 0 on padding rows.
    mask_n = mask_ref[...]                                           # [Np, 1]
    mean = jnp.sum(out * mask_n, axis=0, keepdims=True)              # [1, D]
    diff = out - mean
    var = jnp.sum(diff * diff * mask_n, axis=0, keepdims=True)       # [1, D]
    hbn = gamma_ref[l] * diff * jax.lax.rsqrt(var + 1e-5) + beta_ref[l]

    # ReLU on all layers except the last (drop_ratio=0 -> dropout is identity)
    @pl.when(l != last)
    def _():
        h_scr[...] = jnp.maximum(hbn, 0.0)

    # --- last layer: mean graph pooling + prediction head (bf16 MXU) ---------
    @pl.when(l == last)
    def _():
        pooled = jnp.dot(p_ref[...], hbn.astype(jnp.bfloat16),
                         preferred_element_type=jnp.float32)          # [B, D]
        out_ref[...] = (jnp.dot(pooled.astype(jnp.bfloat16), hw_ref[...],
                                preferred_element_type=jnp.float32)
                        + hb_ref[...])


# ------------------------------- wrapper -------------------------------------


def _round_up(x, m):
    return (x + m - 1) // m * m


def fused_gnn_graphpred(h0, A, nes, w1, w2, b1, b2, gamma, beta, mask_n, P,
                        head_w, head_b):
    num_layer = nes.shape[0]
    Np, D = h0.shape
    B = P.shape[0]
    Tp = head_w.shape[1]

    # ---- explicit VMEM budget (resident operands + double-buffered streams
    #      + live f32 intermediates), with ~50% headroom. -----------------
    est = (A.size * A.dtype.itemsize            # resident adjacency (bf16)
           + 2 * Np * D * 4                     # h0 + h_scr (f32)
           + 2 * Np * D * 2                     # nes double-buffer (bf16)
           + 2 * (D * 2 * D + 2 * D * D) * 2    # w1/w2 double-buffers (bf16)
           + 24 * Np * D                        # live f32 MLP/BN temporaries
           + 16 * Np * 2                        # P (bf16, padded sublanes)
           + D * Tp * 2 + Np * 128 * 4          # head_w + mask (lane-padded)
           + (b1.size + b2.size + gamma.size + beta.size) * 4
           + 4 * 8 * 128 * 4)                   # head_b / out / misc
    vmem_limit = int(min(100 * 2 ** 20, max(32 * 2 ** 20, int(est * 1.5))))

    flops = (num_layer * (2 * Np * Np * D + 8 * Np * D * D)
             + 2 * B * Np * D + 2 * B * D * Tp)
    bytes_accessed = int(sum(a.size * a.dtype.itemsize for a in
                             (h0, A, nes, w1, w2, b1, b2, gamma, beta,
                              mask_n, P, head_w, head_b))
                         + B * Tp * 4)
    cost = pl.CostEstimate(flops=flops,
                           transcendentals=num_layer * D,
                           bytes_accessed=bytes_accessed)

    def build(pm_resident):
        def resident(a):
            # Same block every grid step -> stays in VMEM, ideally 1 buffer.
            if a.ndim == 2:
                imap = lambda l: (0, 0)
            else:
                imap = lambda l: (0, 0, 0)
            return pl.BlockSpec(a.shape, imap, pipeline_mode=pm_resident)

        def per_layer(a):
            # Stacked [L, ...]; stream the layer slice (double-buffered).
            return pl.BlockSpec((1,) + a.shape[1:], lambda l: (l, 0, 0))

        return pl.pallas_call(
            fused_gnn_kernel,
            out_shape=jax.ShapeDtypeStruct((B, Tp), jnp.float32),
            grid_spec=pltpu.PrefetchScalarGridSpec(
                num_scalar_prefetch=0,
                grid=(num_layer,),
                in_specs=[
                    resident(h0), resident(A),
                    per_layer(nes), per_layer(w1), per_layer(w2),
                    resident(b1), resident(b2),
                    resident(gamma), resident(beta),
                    resident(mask_n), resident(P),
                    resident(head_w), resident(head_b),
                ],
                out_specs=pl.BlockSpec((B, Tp), lambda l: (0, 0)),
                scratch_shapes=[pltpu.VMEM((Np, D), jnp.float32)],
            ),
            compiler_params=pltpu.CompilerParams(
                dimension_semantics=("arbitrary",),
                vmem_limit_bytes=vmem_limit),
            cost_estimate=cost,
        )

    args = (h0, A, nes, w1, w2, b1, b2, gamma, beta, mask_n, P, head_w, head_b)
    try:
        return build(pl.Buffered(1))(*args)
    except Exception:
        # Fallback: identical kernel with default (double) buffering, in case
        # this JAX build rejects single-buffered BlockSpecs.
        return build(None)(*args)


def gnn_graphpred_forward(params, x_atom, edge_index, edge_attr, batch,
                          num_graphs):
    """Full GNN_graphpred forward (gin, JK='last', mean pool, drop_ratio=0)."""
    N = x_atom.shape[0]
    D = params["emb_dim"]
    L = params["num_layer"]
    T = params["head_w"].shape[1]
    Np = _round_up(N, 128)    # MXU / lane friendly node padding
    Tp = _round_up(T, 128)    # lane-dense head output

    # --- AtomEncoder: sum of per-feature embedding lookups (plain-JAX glue) --
    h0 = jnp.zeros((N, D), jnp.float32)
    for f in range(x_atom.shape[1]):
        h0 = h0 + params["atom_emb"][f][x_atom[:, f]]
    h0 = jnp.pad(h0, ((0, Np - N), (0, 0)))

    src, dst = edge_index[0], edge_index[1]

    # --- dense adjacency counts A[v,u] = #edges u->v ---------------------------
    # bf16 represents the multiplicity exactly only up to 256 parallel edges
    # per (dst, src) pair; fine for molecular graphs.
    # TODO(synk): hoist/cache this O(Np^2) build when the graph batch is reused,
    # or build per-graph diagonal blocks only.
    A = (jnp.zeros((Np, Np), jnp.float32).at[dst, src].add(1.0)
         .astype(jnp.bfloat16))

    # --- per-layer BondEncoder + scatter-add of edge embeddings to dst -------
    nes_list = []
    for layer in range(L):
        lp = params["layers"][layer]
        ee = jnp.zeros((edge_attr.shape[0], D), jnp.float32)
        for f in range(edge_attr.shape[1]):
            ee = ee + lp["bond_emb"][f][edge_attr[:, f]]
        nes_list.append(jnp.zeros((Np, D), jnp.float32).at[dst].add(ee))
    nes = jnp.stack(nes_list).astype(jnp.bfloat16)                    # [L, Np, D]

    w1 = jnp.stack([lp["w1"] for lp in params["layers"]]).astype(jnp.bfloat16)
    w2 = jnp.stack([lp["w2"] for lp in params["layers"]]).astype(jnp.bfloat16)
    b1 = jnp.stack([lp["b1"] for lp in params["layers"]])             # [L,1,2D]
    b2 = jnp.stack([lp["b2"] for lp in params["layers"]])             # [L,1,D]
    gamma = jnp.stack([lp["bn_gamma"] for lp in params["layers"]])    # [L,1,D]
    beta = jnp.stack([lp["bn_beta"] for lp in params["layers"]])      # [L,1,D]

    # masked-BN normalization vector: 1/N on real nodes, 0 on padding rows.
    mask_n = jnp.concatenate(
        [jnp.full((N, 1), 1.0 / N, jnp.float32),
         jnp.zeros((Np - N, 1), jnp.float32)], axis=0)

    # mean graph pooling matrix P: [B, Np] (zero weight on padding rows).
    one_hot_b = jax.nn.one_hot(batch, num_graphs, dtype=jnp.float32)  # [N, B]
    counts = jnp.maximum(one_hot_b.sum(axis=0), 1.0)                  # [B]
    P = (jnp.pad((one_hot_b / counts[None, :]).T, ((0, 0), (0, Np - N)))
         .astype(jnp.bfloat16))

    head_w = jnp.pad(params["head_w"], ((0, 0), (0, Tp - T))).astype(jnp.bfloat16)
    head_b = jnp.pad(params["head_b"], ((0, 0), (0, Tp - T)))

    out_padded = fused_gnn_graphpred(h0, A, nes, w1, w2, b1, b2, gamma, beta,
                                     mask_n, P, head_w, head_b)
    return out_padded[:, :T]


# ------------------------------ param setup ----------------------------------


def init_params(key, *, num_layer, emb_dim, num_tasks,
                atom_feat_dims, bond_feat_dims):
    keys = jax.random.split(key, 4 + num_layer)
    glorot = lambda k, shape: (jax.random.normal(k, shape, jnp.float32)
                               * (2.0 / (shape[-2] + shape[-1])) ** 0.5)
    params = {"num_layer": num_layer, "emb_dim": emb_dim}
    params["atom_emb"] = [
        jax.random.normal(k, (v, emb_dim), jnp.float32) * 0.1
        for k, v in zip(jax.random.split(keys[0], len(atom_feat_dims)),
                        atom_feat_dims)
    ]
    layers = []
    for l in range(num_layer):
        lk = jax.random.split(keys[4 + l], 8)
        layers.append({
            "bond_emb": [
                jax.random.normal(k, (v, emb_dim), jnp.float32) * 0.1
                for k, v in zip(jax.random.split(lk[0], len(bond_feat_dims)),
                                bond_feat_dims)
            ],
            "w1": glorot(lk[1], (emb_dim, 2 * emb_dim)),
            "b1": jnp.zeros((1, 2 * emb_dim), jnp.float32),
            "w2": glorot(lk[2], (2 * emb_dim, emb_dim)),
            "b2": jnp.zeros((1, emb_dim), jnp.float32),
            "bn_gamma": jnp.ones((1, emb_dim), jnp.float32),
            "bn_beta": jnp.zeros((1, emb_dim), jnp.float32),
        })
    params["layers"] = layers
    params["head_w"] = glorot(keys[1], (emb_dim, num_tasks))
    params["head_b"] = jnp.zeros((1, num_tasks), jnp.float32)
    return params


# --------------------------------- main ---------------------------------------


if __name__ == "__main__":
    key = jax.random.PRNGKey(0)
    k_param, k_x, k_ei, k_ea = jax.random.split(key, 4)

    NUM_LAYER = 2
    EMB_DIM = 128
    NUM_TASKS = 8
    N_NODES = 16
    N_EDGES = 32
    N_GRAPHS = 2
    ATOM_FEAT_DIMS = [16] * 9   # 9 categorical atom features (AtomEncoder)
    BOND_FEAT_DIMS = [8] * 3    # 3 categorical bond features (BondEncoder)

    params = init_params(
        k_param, num_layer=NUM_LAYER, emb_dim=EMB_DIM, num_tasks=NUM_TASKS,
        atom_feat_dims=ATOM_FEAT_DIMS, bond_feat_dims=BOND_FEAT_DIMS)

    x_atom = jax.random.randint(k_x, (N_NODES, len(ATOM_FEAT_DIMS)), 0, 16,
                                dtype=jnp.int32)
    edge_index = jax.random.randint(k_ei, (2, N_EDGES), 0, N_NODES,
                                    dtype=jnp.int32)
    edge_attr = jax.random.randint(k_ea, (N_EDGES, len(BOND_FEAT_DIMS)), 0, 8,
                                   dtype=jnp.int32)
    batch = jnp.concatenate([
        jnp.zeros((N_NODES // 2,), jnp.int32),
        jnp.ones((N_NODES - N_NODES // 2,), jnp.int32),
    ])

    out = gnn_graphpred_forward(params, x_atom, edge_index, edge_attr, batch,
                                N_GRAPHS)
    out = jax.block_until_ready(out)
    assert out.shape == (N_GRAPHS, NUM_TASKS)
    assert jnp.all(jnp.isfinite(out))
    print("KERNEL_OK")
</pallas_src>

<mosaic_0001>
module attributes {stable_mosaic.version = 11 : i64} {
  func.func @fused_gnn_kernel(%arg0: i32, %arg1: memref<128x128xf32, #tpu.memory_space<vmem>>, %arg2: memref<128x128xbf16, #tpu.memory_space<vmem>>, %arg3: memref<1x128x128xbf16, #tpu.memory_space<vmem>>, %arg4: memref<1x128x256xbf16, #tpu.memory_space<vmem>>, %arg5: memref<1x256x128xbf16, #tpu.memory_space<vmem>>, %arg6: memref<2x1x256xf32, #tpu.memory_space<vmem>>, %arg7: memref<2x1x128xf32, #tpu.memory_space<vmem>>, %arg8: memref<2x1x128xf32, #tpu.memory_space<vmem>>, %arg9: memref<2x1x128xf32, #tpu.memory_space<vmem>>, %arg10: memref<128x1xf32, #tpu.memory_space<vmem>>, %arg11: memref<2x128xbf16, #tpu.memory_space<vmem>>, %arg12: memref<128x128xbf16, #tpu.memory_space<vmem>>, %arg13: memref<1x128xf32, #tpu.memory_space<vmem>>, %arg14: memref<2x128xf32, #tpu.memory_space<vmem>>, %arg15: memref<128x128xf32, #tpu.memory_space<vmem>>) attributes {dimension_semantics = [#tpu.dimension_semantics<arbitrary>], iteration_bounds = array<i64: 2>, scalar_prefetch = 0 : i64, scratch_operands = 1 : i64, tpu.core_type = #tpu.core_type<tc>, window_params = [{pipeline_mode = #tpu.pipeline_mode<synchronous>, transform_indices = @transform_0, window_bounds = array<i64: 128, 128>}, {pipeline_mode = #tpu.pipeline_mode<synchronous>, transform_indices = @transform_1, window_bounds = array<i64: 128, 128>}, {transform_indices = @transform_2, window_bounds = array<i64: 1, 128, 128>}, {transform_indices = @transform_3, window_bounds = array<i64: 1, 128, 256>}, {transform_indices = @transform_4, window_bounds = array<i64: 1, 256, 128>}, {pipeline_mode = #tpu.pipeline_mode<synchronous>, transform_indices = @transform_5, window_bounds = array<i64: 2, 1, 256>}, {pipeline_mode = #tpu.pipeline_mode<synchronous>, transform_indices = @transform_6, window_bounds = array<i64: 2, 1, 128>}, {pipeline_mode = #tpu.pipeline_mode<synchronous>, transform_indices = @transform_7, window_bounds = array<i64: 2, 1, 128>}, {pipeline_mode = #tpu.pipeline_mode<synchronous>, transform_indices = @transform_8, window_bounds = array<i64: 2, 1, 128>}, {pipeline_mode = #tpu.pipeline_mode<synchronous>, transform_indices = @transform_9, window_bounds = array<i64: 128, 1>}, {pipeline_mode = #tpu.pipeline_mode<synchronous>, transform_indices = @transform_10, window_bounds = array<i64: 2, 128>}, {pipeline_mode = #tpu.pipeline_mode<synchronous>, transform_indices = @transform_11, window_bounds = array<i64: 128, 128>}, {pipeline_mode = #tpu.pipeline_mode<synchronous>, transform_indices = @transform_12, window_bounds = array<i64: 1, 128>}, {pipeline_mode = #tpu.pipeline_mode<synchronous>, transform_indices = @transform_13, window_bounds = array<i64: 2, 128>}]} {
    %c0_i32 = arith.constant 0 : i32
    %0 = arith.cmpi eq, %arg0, %c0_i32 : i32
    %1 = arith.extui %0 : i1 to i32
    %c0_i32_0 = arith.constant 0 : i32
    %2 = arith.cmpi ne, %1, %c0_i32_0 : i32
    scf.if %2 {
      %c0_32 = arith.constant 0 : index
      %c0_33 = arith.constant 0 : index
      %64 = vector.load %arg1[%c0_32, %c0_33] : memref<128x128xf32, #tpu.memory_space<vmem>>, vector<128x128xf32>
      %c0_34 = arith.constant 0 : index
      %c0_35 = arith.constant 0 : index
      %65 = vector.load %arg15[%c0_34, %c0_35] : memref<128x128xf32, #tpu.memory_space<vmem>>, vector<128x128xf32>
      tpu.vector_store %arg15[%c0_34, %c0_35], %64 {strides = array<i32>} : memref<128x128xf32, #tpu.memory_space<vmem>>, vector<128x128xf32>,
    } else {
    }
    %c0 = arith.constant 0 : index
    %c0_1 = arith.constant 0 : index
    %3 = vector.load %arg15[%c0, %c0_1] : memref<128x128xf32, #tpu.memory_space<vmem>>, vector<128x128xf32>
    %c0_2 = arith.constant 0 : index
    %c0_3 = arith.constant 0 : index
    %4 = vector.load %arg2[%c0_2, %c0_3] : memref<128x128xbf16, #tpu.memory_space<vmem>>, vector<128x128xbf16>
    %5 = arith.truncf %3 : vector<128x128xf32> to vector<128x128xbf16>
    %cst = arith.constant dense<0.000000e+00> : vector<128x128xf32>
    %6 = tpu.matmul %4, %5, %cst {dimension_numbers = #tpu.dot_dimension_numbers<[1], [0], [0], [1], [0, 0, 1, 1], [], []>} : vector<128x128xbf16>, vector<128x128xbf16>, vector<128x128xf32> -> vector<128x128xf32>
    %c0_4 = arith.constant 0 : index
    %c0_5 = arith.constant 0 : index
    %c0_6 = arith.constant 0 : index
    %7 = vector.load %arg3[%c0_4, %c0_5, %c0_6] : memref<1x128x128xbf16, #tpu.memory_space<vmem>>, vector<1x128x128xbf16>
    %8 = vector.shape_cast %7 : vector<1x128x128xbf16> to vector<128x128xbf16>
    %9 = arith.extf %8 : vector<128x128xbf16> to vector<128x128xf32>
    %10 = arith.addf %6, %9 : vector<128x128xf32>
    %11 = arith.truncf %10 : vector<128x128xf32> to vector<128x128xbf16>
    %c0_7 = arith.constant 0 : index
    %c0_8 = arith.constant 0 : index
    %c0_9 = arith.constant 0 : index
    %12 = vector.load %arg4[%c0_7, %c0_8, %c0_9] : memref<1x128x256xbf16, #tpu.memory_space<vmem>>, vector<1x128x256xbf16>
    %13 = vector.shape_cast %12 : vector<1x128x256xbf16> to vector<128x256xbf16>
    %cst_10 = arith.constant dense<0.000000e+00> : vector<128x256xf32>
    %14 = tpu.matmul %11, %13, %cst_10 {dimension_numbers = #tpu.dot_dimension_numbers<[1], [0], [0], [1], [0, 0, 1, 1], [], []>} : vector<128x128xbf16>, vector<128x256xbf16>, vector<128x256xf32> -> vector<128x256xf32>
    %15 = arith.index_cast %arg0 : i32 to index
    %c0_11 = arith.constant 0 : index
    %c0_12 = arith.constant 0 : index
    %16 = vector.load %arg6[%15, %c0_11, %c0_12] : memref<2x1x256xf32, #tpu.memory_space<vmem>>, vector<1x1x256xf32>
    %17 = vector.shape_cast %16 : vector<1x1x256xf32> to vector<1x256xf32>
    %18 = vector.broadcast %17 : vector<1x256xf32> to vector<128x256xf32>
    %19 = arith.addf %14, %18 : vector<128x256xf32>
    %cst_13 = arith.constant 0.000000e+00 : f32
    %20 = vector.broadcast %cst_13 : f32 to vector<128x256xf32>
    %21 = arith.maximumf %19, %20 : vector<128x256xf32>
    %22 = arith.truncf %21 : vector<128x256xf32> to vector<128x256xbf16>
    %c0_14 = arith.constant 0 : index
    %c0_15 = arith.constant 0 : index
    %c0_16 = arith.constant 0 : index
    %23 = vector.load %arg5[%c0_14, %c0_15, %c0_16] : memref<1x256x128xbf16, #tpu.memory_space<vmem>>, vector<1x256x128xbf16>
    %24 = vector.shape_cast %23 : vector<1x256x128xbf16> to vector<256x128xbf16>
    %cst_17 = arith.constant dense<0.000000e+00> : vector<128x128xf32>
    %25 = tpu.matmul %22, %24, %cst_17 {dimension_numbers = #tpu.dot_dimension_numbers<[1], [0], [0], [1], [0, 0, 1, 1], [], []>} : vector<128x256xbf16>, vector<256x128xbf16>, vector<128x128xf32> -> vector<128x128xf32>
    %26 = arith.index_cast %arg0 : i32 to index
    %c0_18 = arith.constant 0 : index
    %c0_19 = arith.constant 0 : index
    %27 = vector.load %arg7[%26, %c0_18, %c0_19] : memref<2x1x128xf32, #tpu.memory_space<vmem>>, vector<1x1x128xf32>
    %28 = vector.shape_cast %27 : vector<1x1x128xf32> to vector<1x128xf32>
    %29 = vector.broadcast %28 : vector<1x128xf32> to vector<128x128xf32>
    %30 = arith.addf %25, %29 : vector<128x128xf32>
    %c0_20 = arith.constant 0 : index
    %c0_21 = arith.constant 0 : index
    %31 = vector.load %arg10[%c0_20, %c0_21] : memref<128x1xf32, #tpu.memory_space<vmem>>, vector<128x1xf32>
    %32 = vector.broadcast %31 : vector<128x1xf32> to vector<128x128xf32>
    %33 = arith.mulf %30, %32 : vector<128x128xf32>
    %cst_22 = arith.constant dense<0.000000e+00> : vector<128xf32>
    %34 = vector.multi_reduction <add>, %33, %cst_22 [0] : vector<128x128xf32> to vector<128xf32>
    %35 = vector.shape_cast %34 : vector<128xf32> to vector<1x128xf32>
    %36 = vector.broadcast %35 : vector<1x128xf32> to vector<128x128xf32>
    %37 = arith.subf %30, %36 : vector<128x128xf32>
    %38 = arith.mulf %37, %37 : vector<128x128xf32>
    %39 = vector.broadcast %31 : vector<128x1xf32> to vector<128x128xf32>
    %40 = arith.mulf %38, %39 : vector<128x128xf32>
    %cst_23 = arith.constant dense<0.000000e+00> : vector<128xf32>
    %41 = vector.multi_reduction <add>, %40, %cst_23 [0] : vector<128x128xf32> to vector<128xf32>
    %42 = vector.shape_cast %41 : vector<128xf32> to vector<1x128xf32>
    %43 = arith.index_cast %arg0 : i32 to index
    %c0_24 = arith.constant 0 : index
    %c0_25 = arith.constant 0 : index
    %44 = vector.load %arg8[%43, %c0_24, %c0_25] : memref<2x1x128xf32, #tpu.memory_space<vmem>>, vector<1x1x128xf32>
    %45 = vector.shape_cast %44 : vector<1x1x128xf32> to vector<1x128xf32>
    %46 = vector.broadcast %45 : vector<1x128xf32> to vector<128x128xf32>
    %47 = arith.mulf %46, %37 : vector<128x128xf32>
    %cst_26 = arith.constant 9.99999974E-6 : f32
    %48 = vector.broadcast %cst_26 : f32 to vector<1x128xf32>
    %49 = arith.addf %42, %48 : vector<1x128xf32>
    %50 = math.rsqrt %49 : vector<1x128xf32>
    %51 = vector.broadcast %50 : vector<1x128xf32> to vector<128x128xf32>
    %52 = arith.mulf %47, %51 : vector<128x128xf32>
    %53 = arith.index_cast %arg0 : i32 to index
    %c0_27 = arith.constant 0 : index
    %c0_28 = arith.constant 0 : index
    %54 = vector.load %arg9[%53, %c0_27, %c0_28] : memref<2x1x128xf32, #tpu.memory_space<vmem>>, vector<1x1x128xf32>
    %55 = vector.shape_cast %54 : vector<1x1x128xf32> to vector<1x128xf32>
    %56 = vector.broadcast %55 : vector<1x128xf32> to vector<128x128xf32>
    %57 = arith.addf %52, %56 : vector<128x128xf32>
    %c1_i32 = arith.constant 1 : i32
    %58 = arith.cmpi ne, %arg0, %c1_i32 : i32
    %59 = arith.extui %58 : i1 to i32
    %c0_i32_29 = arith.constant 0 : i32
    %60 = arith.cmpi ne, %59, %c0_i32_29 : i32
    scf.if %60 {
      %cst_32 = arith.constant 0.000000e+00 : f32
      %64 = vector.broadcast %cst_32 : f32 to vector<128x128xf32>
      %65 = arith.maximumf %57, %64 : vector<128x128xf32>
      %c0_33 = arith.constant 0 : index
      %c0_34 = arith.constant 0 : index
      %66 = vector.load %arg15[%c0_33, %c0_34] : memref<128x128xf32, #tpu.memory_space<vmem>>, vector<128x128xf32>
      tpu.vector_store %arg15[%c0_33, %c0_34], %65 {strides = array<i32>} : memref<128x128xf32, #tpu.memory_space<vmem>>, vector<128x128xf32>,
    } else {
    }
    %c1_i32_30 = arith.constant 1 : i32
    %61 = arith.cmpi eq, %arg0, %c1_i32_30 : i32
    %62 = arith.extui %61 : i1 to i32
    %c0_i32_31 = arith.constant 0 : i32
    %63 = arith.cmpi ne, %62, %c0_i32_31 : i32
    scf.if %63 {
      %c0_32 = arith.constant 0 : index
      %c0_33 = arith.constant 0 : index
      %64 = vector.load %arg11[%c0_32, %c0_33] : memref<2x128xbf16, #tpu.memory_space<vmem>>, vector<2x128xbf16>
      %65 = arith.truncf %57 : vector<128x128xf32> to vector<128x128xbf16>
      %cst_34 = arith.constant dense<0.000000e+00> : vector<2x128xf32>
      %66 = tpu.matmul %64, %65, %cst_34 {dimension_numbers = #tpu.dot_dimension_numbers<[1], [0], [0], [1], [0, 0, 1, 1], [], []>} : vector<2x128xbf16>, vector<128x128xbf16>, vector<2x128xf32> -> vector<2x128xf32>
      %67 = arith.truncf %66 : vector<2x128xf32> to vector<2x128xbf16>
      %c0_35 = arith.constant 0 : index
      %c0_36 = arith.constant 0 : index
      %68 = vector.load %arg12[%c0_35, %c0_36] : memref<128x128xbf16, #tpu.memory_space<vmem>>, vector<128x128xbf16>
      %cst_37 = arith.constant dense<0.000000e+00> : vector<2x128xf32>
      %69 = tpu.matmul %67, %68, %cst_37 {dimension_numbers = #tpu.dot_dimension_numbers<[1], [0], [0], [1], [0, 0, 1, 1], [], []>} : vector<2x128xbf16>, vector<128x128xbf16>, vector<2x128xf32> -> vector<2x128xf32>
      %c0_38 = arith.constant 0 : index
      %c0_39 = arith.constant 0 : index
      %70 = vector.load %arg13[%c0_38, %c0_39] : memref<1x128xf32, #tpu.memory_space<vmem>>, vector<1x128xf32>
      %71 = vector.broadcast %70 : vector<1x128xf32> to vector<2x128xf32>
      %72 = arith.addf %69, %71 : vector<2x128xf32>
      %c0_40 = arith.constant 0 : index
      %c0_41 = arith.constant 0 : index
      %73 = vector.load %arg14[%c0_40, %c0_41] : memref<2x128xf32, #tpu.memory_space<vmem>>, vector<2x128xf32>
      tpu.vector_store %arg14[%c0_40, %c0_41], %72 {strides = array<i32>} : memref<2x128xf32, #tpu.memory_space<vmem>>, vector<2x128xf32>,
    } else {
    }
    return
  }
  func.func @transform_0(%arg0: i32) -> (i32, i32) {
    %c0_i32 = arith.constant 0 : i32
    %c0_i32_0 = arith.constant 0 : i32
    %c0_i32_1 = arith.constant 0 : i32
    return %c0_i32, %c0_i32_0 : i32, i32
  }
  func.func @transform_1(%arg0: i32) -> (i32, i32) {
    %c0_i32 = arith.constant 0 : i32
    %c0_i32_0 = arith.constant 0 : i32
    %c0_i32_1 = arith.constant 0 : i32
    return %c0_i32, %c0_i32_0 : i32, i32
  }
  func.func @transform_2(%arg0: i32) -> (i32, i32, i32) {
    %c0_i32 = arith.constant 0 : i32
    %c0_i32_0 = arith.constant 0 : i32
    %c0_i32_1 = arith.constant 0 : i32
    return %arg0, %c0_i32, %c0_i32_0 : i32, i32, i32
  }
  func.func @transform_3(%arg0: i32) -> (i32, i32, i32) {
    %c0_i32 = arith.constant 0 : i32
    %c0_i32_0 = arith.constant 0 : i32
    %c0_i32_1 = arith.constant 0 : i32
    return %arg0, %c0_i32, %c0_i32_0 : i32, i32, i32
  }
  func.func @transform_4(%arg0: i32) -> (i32, i32, i32) {
    %c0_i32 = arith.constant 0 : i32
    %c0_i32_0 = arith.constant 0 : i32
    %c0_i32_1 = arith.constant 0 : i32
    return %arg0, %c0_i32, %c0_i32_0 : i32, i32, i32
  }
  func.func @transform_5(%arg0: i32) -> (i32, i32, i32) {
    %c0_i32 = arith.constant 0 : i32
    %c0_i32_0 = arith.constant 0 : i32
    %c0_i32_1 = arith.constant 0 : i32
    %c0_i32_2 = arith.constant 0 : i32
    return %c0_i32, %c0_i32_0, %c0_i32_1 : i32, i32, i32
  }
  func.func @transform_6(%arg0: i32) -> (i32, i32, i32) {
    %c0_i32 = arith.constant 0 : i32
    %c0_i32_0 = arith.constant 0 : i32
    %c0_i32_1 = arith.constant 0 : i32
    %c0_i32_2 = arith.constant 0 : i32
    return %c0_i32, %c0_i32_0, %c0_i32_1 : i32, i32, i32
  }
  func.func @transform_7(%arg0: i32) -> (i32, i32, i32) {
    %c0_i32 = arith.constant 0 : i32
    %c0_i32_0 = arith.constant 0 : i32
    %c0_i32_1 = arith.constant 0 : i32
    %c0_i32_2 = arith.constant 0 : i32
    return %c0_i32, %c0_i32_0, %c0_i32_1 : i32, i32, i32
  }
  func.func @transform_8(%arg0: i32) -> (i32, i32, i32) {
    %c0_i32 = arith.constant 0 : i32
    %c0_i32_0 = arith.constant 0 : i32
    %c0_i32_1 = arith.constant 0 : i32
    %c0_i32_2 = arith.constant 0 : i32
    return %c0_i32, %c0_i32_0, %c0_i32_1 : i32, i32, i32
  }
  func.func @transform_9(%arg0: i32) -> (i32, i32) {
    %c0_i32 = arith.constant 0 : i32
    %c0_i32_0 = arith.constant 0 : i32
    %c0_i32_1 = arith.constant 0 : i32
    return %c0_i32, %c0_i32_0 : i32, i32
  }
  func.func @transform_10(%arg0: i32) -> (i32, i32) {
    %c0_i32 = arith.constant 0 : i32
    %c0_i32_0 = arith.constant 0 : i32
    %c0_i32_1 = arith.constant 0 : i32
    return %c0_i32, %c0_i32_0 : i32, i32
  }
  func.func @transform_11(%arg0: i32) -> (i32, i32) {
    %c0_i32 = arith.constant 0 : i32
    %c0_i32_0 = arith.constant 0 : i32
    %c0_i32_1 = arith.constant 0 : i32
    return %c0_i32, %c0_i32_0 : i32, i32
  }
  func.func @transform_12(%arg0: i32) -> (i32, i32) {
    %c0_i32 = arith.constant 0 : i32
    %c0_i32_0 = arith.constant 0 : i32
    %c0_i32_1 = arith.constant 0 : i32
    return %c0_i32, %c0_i32_0 : i32, i32
  }
  func.func @transform_13(%arg0: i32) -> (i32, i32) {
    %c0_i32 = arith.constant 0 : i32
    %c0_i32_0 = arith.constant 0 : i32
    %c0_i32_1 = arith.constant 0 : i32
    return %c0_i32, %c0_i32_0 : i32, i32
  }
}

module attributes {stable_mosaic.version = 11 : i64} {
  func.func @fused_gnn_kernel(%arg0: i32, %arg1: memref<128x128xf32, #tpu.memory_space<vmem>>, %arg2: memref<128x128xbf16, #tpu.memory_space<vmem>>, %arg3: memref<1x128x128xbf16, #tpu.memory_space<vmem>>, %arg4: memref<1x128x256xbf16, #tpu.memory_space<vmem>>, %arg5: memref<1x256x128xbf16, #tpu.memory_space<vmem>>, %arg6: memref<2x1x256xf32, #tpu.memory_space<vmem>>, %arg7: memref<2x1x128xf32, #tpu.memory_space<vmem>>, %arg8: memref<2x1x128xf32, #tpu.memory_space<vmem>>, %arg9: memref<2x1x128xf32, #tpu.memory_space<vmem>>, %arg10: memref<128x1xf32, #tpu.memory_space<vmem>>, %arg11: memref<2x128xbf16, #tpu.memory_space<vmem>>, %arg12: memref<128x128xbf16, #tpu.memory_space<vmem>>, %arg13: memref<1x128xf32, #tpu.memory_space<vmem>>, %arg14: memref<2x128xf32, #tpu.memory_space<vmem>>, %arg15: memref<128x128xf32, #tpu.memory_space<vmem>>) attributes {dimension_semantics = [#tpu.dimension_semantics<arbitrary>], iteration_bounds = array<i64: 2>, scalar_prefetch = 0 : i64, scratch_operands = 1 : i64, tpu.core_type = #tpu.core_type<tc>, window_params = [{pipeline_mode = #tpu.pipeline_mode<synchronous>, transform_indices = @transform_0, window_bounds = array<i64: 128, 128>}, {pipeline_mode = #tpu.pipeline_mode<synchronous>, transform_indices = @transform_1, window_bounds = array<i64: 128, 128>}, {transform_indices = @transform_2, window_bounds = array<i64: 1, 128, 128>}, {transform_indices = @transform_3, window_bounds = array<i64: 1, 128, 256>}, {transform_indices = @transform_4, window_bounds = array<i64: 1, 256, 128>}, {pipeline_mode = #tpu.pipeline_mode<synchronous>, transform_indices = @transform_5, window_bounds = array<i64: 2, 1, 256>}, {pipeline_mode = #tpu.pipeline_mode<synchronous>, transform_indices = @transform_6, window_bounds = array<i64: 2, 1, 128>}, {pipeline_mode = #tpu.pipeline_mode<synchronous>, transform_indices = @transform_7, window_bounds = array<i64: 2, 1, 128>}, {pipeline_mode = #tpu.pipeline_mode<synchronous>, transform_indices = @transform_8, window_bounds = array<i64: 2, 1, 128>}, {pipeline_mode = #tpu.pipeline_mode<synchronous>, transform_indices = @transform_9, window_bounds = array<i64: 128, 1>}, {pipeline_mode = #tpu.pipeline_mode<synchronous>, transform_indices = @transform_10, window_bounds = array<i64: 2, 128>}, {pipeline_mode = #tpu.pipeline_mode<synchronous>, transform_indices = @transform_11, window_bounds = array<i64: 128, 128>}, {pipeline_mode = #tpu.pipeline_mode<synchronous>, transform_indices = @transform_12, window_bounds = array<i64: 1, 128>}, {pipeline_mode = #tpu.pipeline_mode<synchronous>, transform_indices = @transform_13, window_bounds = array<i64: 2, 128>}]} {
    %c0_i32 = arith.constant 0 : i32
    %0 = arith.cmpi eq, %arg0, %c0_i32 : i32
    %1 = arith.extui %0 : i1 to i32
    %c0_i32_0 = arith.constant 0 : i32
    %2 = arith.cmpi ne, %1, %c0_i32_0 : i32
    scf.if %2 {
      %c0_32 = arith.constant 0 : index
      %c0_33 = arith.constant 0 : index
      %64 = vector.load %arg1[%c0_32, %c0_33] : memref<128x128xf32, #tpu.memory_space<vmem>>, vector<128x128xf32>
      %c0_34 = arith.constant 0 : index
      %c0_35 = arith.constant 0 : index
      %65 = vector.load %arg15[%c0_34, %c0_35] : memref<128x128xf32, #tpu.memory_space<vmem>>, vector<128x128xf32>
      tpu.vector_store %arg15[%c0_34, %c0_35], %64 {strides = array<i32>} : memref<128x128xf32, #tpu.memory_space<vmem>>, vector<128x128xf32>,
    } else {
    }
    %c0 = arith.constant 0 : index
    %c0_1 = arith.constant 0 : index
    %3 = vector.load %arg15[%c0, %c0_1] : memref<128x128xf32, #tpu.memory_space<vmem>>, vector<128x128xf32>
    %c0_2 = arith.constant 0 : index
    %c0_3 = arith.constant 0 : index
    %4 = vector.load %arg2[%c0_2, %c0_3] : memref<128x128xbf16, #tpu.memory_space<vmem>>, vector<128x128xbf16>
    %5 = arith.truncf %3 : vector<128x128xf32> to vector<128x128xbf16>
    %cst = arith.constant dense<0.000000e+00> : vector<128x128xf32>
    %6 = tpu.matmul %4, %5, %cst {dimension_numbers = #tpu.dot_dimension_numbers<[1], [0], [0], [1], [0, 0, 1, 1], [], []>} : vector<128x128xbf16>, vector<128x128xbf16>, vector<128x128xf32> -> vector<128x128xf32>
    %c0_4 = arith.constant 0 : index
    %c0_5 = arith.constant 0 : index
    %c0_6 = arith.constant 0 : index
    %7 = vector.load %arg3[%c0_4, %c0_5, %c0_6] : memref<1x128x128xbf16, #tpu.memory_space<vmem>>, vector<1x128x128xbf16>
    %8 = vector.shape_cast %7 : vector<1x128x128xbf16> to vector<128x128xbf16>
    %9 = arith.extf %8 : vector<128x128xbf16> to vector<128x128xf32>
    %10 = arith.addf %6, %9 : vector<128x128xf32>
    %11 = arith.truncf %10 : vector<128x128xf32> to vector<128x128xbf16>
    %c0_7 = arith.constant 0 : index
    %c0_8 = arith.constant 0 : index
    %c0_9 = arith.constant 0 : index
    %12 = vector.load %arg4[%c0_7, %c0_8, %c0_9] : memref<1x128x256xbf16, #tpu.memory_space<vmem>>, vector<1x128x256xbf16>
    %13 = vector.shape_cast %12 : vector<1x128x256xbf16> to vector<128x256xbf16>
    %cst_10 = arith.constant dense<0.000000e+00> : vector<128x256xf32>
    %14 = tpu.matmul %11, %13, %cst_10 {dimension_numbers = #tpu.dot_dimension_numbers<[1], [0], [0], [1], [0, 0, 1, 1], [], []>} : vector<128x128xbf16>, vector<128x256xbf16>, vector<128x256xf32> -> vector<128x256xf32>
    %15 = arith.index_cast %arg0 : i32 to index
    %c0_11 = arith.constant 0 : index
    %c0_12 = arith.constant 0 : index
    %16 = vector.load %arg6[%15, %c0_11, %c0_12] : memref<2x1x256xf32, #tpu.memory_space<vmem>>, vector<1x1x256xf32>
    %17 = vector.shape_cast %16 : vector<1x1x256xf32> to vector<1x256xf32>
    %18 = vector.broadcast %17 : vector<1x256xf32> to vector<128x256xf32>
    %19 = arith.addf %14, %18 : vector<128x256xf32>
    %cst_13 = arith.constant 0.000000e+00 : f32
    %20 = vector.broadcast %cst_13 : f32 to vector<128x256xf32>
    %21 = arith.maximumf %19, %20 : vector<128x256xf32>
    %22 = arith.truncf %21 : vector<128x256xf32> to vector<128x256xbf16>
    %c0_14 = arith.constant 0 : index
    %c0_15 = arith.constant 0 : index
    %c0_16 = arith.constant 0 : index
    %23 = vector.load %arg5[%c0_14, %c0_15, %c0_16] : memref<1x256x128xbf16, #tpu.memory_space<vmem>>, vector<1x256x128xbf16>
    %24 = vector.shape_cast %23 : vector<1x256x128xbf16> to vector<256x128xbf16>
    %cst_17 = arith.constant dense<0.000000e+00> : vector<128x128xf32>
    %25 = tpu.matmul %22, %24, %cst_17 {dimension_numbers = #tpu.dot_dimension_numbers<[1], [0], [0], [1], [0, 0, 1, 1], [], []>} : vector<128x256xbf16>, vector<256x128xbf16>, vector<128x128xf32> -> vector<128x128xf32>
    %26 = arith.index_cast %arg0 : i32 to index
    %c0_18 = arith.constant 0 : index
    %c0_19 = arith.constant 0 : index
    %27 = vector.load %arg7[%26, %c0_18, %c0_19] : memref<2x1x128xf32, #tpu.memory_space<vmem>>, vector<1x1x128xf32>
    %28 = vector.shape_cast %27 : vector<1x1x128xf32> to vector<1x128xf32>
    %29 = vector.broadcast %28 : vector<1x128xf32> to vector<128x128xf32>
    %30 = arith.addf %25, %29 : vector<128x128xf32>
    %c0_20 = arith.constant 0 : index
    %c0_21 = arith.constant 0 : index
    %31 = vector.load %arg10[%c0_20, %c0_21] : memref<128x1xf32, #tpu.memory_space<vmem>>, vector<128x1xf32>
    %32 = vector.broadcast %31 : vector<128x1xf32> to vector<128x128xf32>
    %33 = arith.mulf %30, %32 : vector<128x128xf32>
    %cst_22 = arith.constant dense<0.000000e+00> : vector<128xf32>
    %34 = vector.multi_reduction <add>, %33, %cst_22 [0] : vector<128x128xf32> to vector<128xf32>
    %35 = vector.shape_cast %34 : vector<128xf32> to vector<1x128xf32>
    %36 = vector.broadcast %35 : vector<1x128xf32> to vector<128x128xf32>
    %37 = arith.subf %30, %36 : vector<128x128xf32>
    %38 = arith.mulf %37, %37 : vector<128x128xf32>
    %39 = vector.broadcast %31 : vector<128x1xf32> to vector<128x128xf32>
    %40 = arith.mulf %38, %39 : vector<128x128xf32>
    %cst_23 = arith.constant dense<0.000000e+00> : vector<128xf32>
    %41 = vector.multi_reduction <add>, %40, %cst_23 [0] : vector<128x128xf32> to vector<128xf32>
    %42 = vector.shape_cast %41 : vector<128xf32> to vector<1x128xf32>
    %43 = arith.index_cast %arg0 : i32 to index
    %c0_24 = arith.constant 0 : index
    %c0_25 = arith.constant 0 : index
    %44 = vector.load %arg8[%43, %c0_24, %c0_25] : memref<2x1x128xf32, #tpu.memory_space<vmem>>, vector<1x1x128xf32>
    %45 = vector.shape_cast %44 : vector<1x1x128xf32> to vector<1x128xf32>
    %46 = vector.broadcast %45 : vector<1x128xf32> to vector<128x128xf32>
    %47 = arith.mulf %46, %37 : vector<128x128xf32>
    %cst_26 = arith.constant 9.99999974E-6 : f32
    %48 = vector.broadcast %cst_26 : f32 to vector<1x128xf32>
    %49 = arith.addf %42, %48 : vector<1x128xf32>
    %50 = math.rsqrt %49 : vector<1x128xf32>
    %51 = vector.broadcast %50 : vector<1x128xf32> to vector<128x128xf32>
    %52 = arith.mulf %47, %51 : vector<128x128xf32>
    %53 = arith.index_cast %arg0 : i32 to index
    %c0_27 = arith.constant 0 : index
    %c0_28 = arith.constant 0 : index
    %54 = vector.load %arg9[%53, %c0_27, %c0_28] : memref<2x1x128xf32, #tpu.memory_space<vmem>>, vector<1x1x128xf32>
    %55 = vector.shape_cast %54 : vector<1x1x128xf32> to vector<1x128xf32>
    %56 = vector.broadcast %55 : vector<1x128xf32> to vector<128x128xf32>
    %57 = arith.addf %52, %56 : vector<128x128xf32>
    %c1_i32 = arith.constant 1 : i32
    %58 = arith.cmpi ne, %arg0, %c1_i32 : i32
    %59 = arith.extui %58 : i1 to i32
    %c0_i32_29 = arith.constant 0 : i32
    %60 = arith.cmpi ne, %59, %c0_i32_29 : i32
    scf.if %60 {
      %cst_32 = arith.constant 0.000000e+00 : f32
      %64 = vector.broadcast %cst_32 : f32 to vector<128x128xf32>
      %65 = arith.maximumf %57, %64 : vector<128x128xf32>
      %c0_33 = arith.constant 0 : index
      %c0_34 = arith.constant 0 : index
      %66 = vector.load %arg15[%c0_33, %c0_34] : memref<128x128xf32, #tpu.memory_space<vmem>>, vector<128x128xf32>
      tpu.vector_store %arg15[%c0_33, %c0_34], %65 {strides = array<i32>} : memref<128x128xf32, #tpu.memory_space<vmem>>, vector<128x128xf32>,
    } else {
    }
    %c1_i32_30 = arith.constant 1 : i32
    %61 = arith.cmpi eq, %arg0, %c1_i32_30 : i32
    %62 = arith.extui %61 : i1 to i32
    %c0_i32_31 = arith.constant 0 : i32
    %63 = arith.cmpi ne, %62, %c0_i32_31 : i32
    scf.if %63 {
      %c0_32 = arith.constant 0 : index
      %c0_33 = arith.constant 0 : index
      %64 = vector.load %arg11[%c0_32, %c0_33] : memref<2x128xbf16, #tpu.memory_space<vmem>>, vector<2x128xbf16>
      %65 = arith.truncf %57 : vector<128x128xf32> to vector<128x128xbf16>
      %cst_34 = arith.constant dense<0.000000e+00> : vector<2x128xf32>
      %66 = tpu.matmul %64, %65, %cst_34 {dimension_numbers = #tpu.dot_dimension_numbers<[1], [0], [0], [1], [0, 0, 1, 1], [], []>} : vector<2x128xbf16>, vector<128x128xbf16>, vector<2x128xf32> -> vector<2x128xf32>
      %67 = arith.truncf %66 : vector<2x128xf32> to vector<2x128xbf16>
      %c0_35 = arith.constant 0 : index
      %c0_36 = arith.constant 0 : index
      %68 = vector.load %arg12[%c0_35, %c0_36] : memref<128x128xbf16, #tpu.memory_space<vmem>>, vector<128x128xbf16>
      %cst_37 = arith.constant dense<0.000000e+00> : vector<2x128xf32>
      %69 = tpu.matmul %67, %68, %cst_37 {dimension_numbers = #tpu.dot_dimension_numbers<[1], [0], [0], [1], [0, 0, 1, 1], [], []>} : vector<2x128xbf16>, vector<128x128xbf16>, vector<2x128xf32> -> vector<2x128xf32>
      %c0_38 = arith.constant 0 : index
      %c0_39 = arith.constant 0 : index
      %70 = vector.load %arg13[%c0_38, %c0_39] : memref<1x128xf32, #tpu.memory_space<vmem>>, vector<1x128xf32>
      %71 = vector.broadcast %70 : vector<1x128xf32> to vector<2x128xf32>
      %72 = arith.addf %69, %71 : vector<2x128xf32>
      %c0_40 = arith.constant 0 : index
      %c0_41 = arith.constant 0 : index
      %73 = vector.load %arg14[%c0_40, %c0_41] : memref<2x128xf32, #tpu.memory_space<vmem>>, vector<2x128xf32>
      tpu.vector_store %arg14[%c0_40, %c0_41], %72 {strides = array<i32>} : memref<2x128xf32, #tpu.memory_space<vmem>>, vector<2x128xf32>,
    } else {
    }
    return
  }
  func.func @transform_0(%arg0: i32) -> (i32, i32) {
    %c0_i32 = arith.constant 0 : i32
    %c0_i32_0 = arith.constant 0 : i32
    %c0_i32_1 = arith.constant 0 : i32
    return %c0_i32, %c0_i32_0 : i32, i32
  }
  func.func @transform_1(%arg0: i32) -> (i32, i32) {
    %c0_i32 = arith.constant 0 : i32
    %c0_i32_0 = arith.constant 0 : i32
    %c0_i32_1 = arith.constant 0 : i32
    return %c0_i32, %c0_i32_0 : i32, i32
  }
  func.func @transform_2(%arg0: i32) -> (i32, i32, i32) {
    %c0_i32 = arith.constant 0 : i32
    %c0_i32_0 = arith.constant 0 : i32
    %c0_i32_1 = arith.constant 0 : i32
    return %arg0, %c0_i32, %c0_i32_0 : i32, i32, i32
  }
  func.func @transform_3(%arg0: i32) -> (i32, i32, i32) {
    %c0_i32 = arith.constant 0 : i32
    %c0_i32_0 = arith.constant 0 : i32
    %c0_i32_1 = arith.constant 0 : i32
    return %arg0, %c0_i32, %c0_i32_0 : i32, i32, i32
  }
  func.func @transform_4(%arg0: i32) -> (i32, i32, i32) {
    %c0_i32 = arith.constant 0 : i32
    %c0_i32_0 = arith.constant 0 : i32
    %c0_i32_1 = arith.constant 0 : i32
    return %arg0, %c0_i32, %c0_i32_0 : i32, i32, i32
  }
  func.func @transform_5(%arg0: i32) -> (i32, i32, i32) {
    %c0_i32 = arith.constant 0 : i32
    %c0_i32_0 = arith.constant 0 : i32
    %c0_i32_1 = arith.constant 0 : i32
    %c0_i32_2 = arith.constant 0 : i32
    return %c0_i32, %c0_i32_0, %c0_i32_1 : i32, i32, i32
  }
  func.func @transform_6(%arg0: i32) -> (i32, i32, i32) {
    %c0_i32 = arith.constant 0 : i32
    %c0_i32_0 = arith.constant 0 : i32
    %c0_i32_1 = arith.constant 0 : i32
    %c0_i32_2 = arith.constant 0 : i32
    return %c0_i32, %c0_i32_0, %c0_i32_1 : i32, i32, i32
  }
  func.func @transform_7(%arg0: i32) -> (i32, i32, i32) {
    %c0_i32 = arith.constant 0 : i32
    %c0_i32_0 = arith.constant 0 : i32
    %c0_i32_1 = arith.constant 0 : i32
    %c0_i32_2 = arith.constant 0 : i32
    return %c0_i32, %c0_i32_0, %c0_i32_1 : i32, i32, i32
  }
  func.func @transform_8(%arg0: i32) -> (i32, i32, i32) {
    %c0_i32 = arith.constant 0 : i32
    %c0_i32_0 = arith.constant 0 : i32
    %c0_i32_1 = arith.constant 0 : i32
    %c0_i32_2 = arith.constant 0 : i32
    return %c0_i32, %c0_i32_0, %c0_i32_1 : i32, i32, i32
  }
  func.func @transform_9(%arg0: i32) -> (i32, i32) {
    %c0_i32 = arith.constant 0 : i32
    %c0_i32_0 = arith.constant 0 : i32
    %c0_i32_1 = arith.constant 0 : i32
    return %c0_i32, %c0_i32_0 : i32, i32
  }
  func.func @transform_10(%arg0: i32) -> (i32, i32) {
    %c0_i32 = arith.constant 0 : i32
    %c0_i32_0 = arith.constant 0 : i32
    %c0_i32_1 = arith.constant 0 : i32
    return %c0_i32, %c0_i32_0 : i32, i32
  }
  func.func @transform_11(%arg0: i32) -> (i32, i32) {
    %c0_i32 = arith.constant 0 : i32
    %c0_i32_0 = arith.constant 0 : i32
    %c0_i32_1 = arith.constant 0 : i32
    return %c0_i32, %c0_i32_0 : i32, i32
  }
  func.func @transform_12(%arg0: i32) -> (i32, i32) {
    %c0_i32 = arith.constant 0 : i32
    %c0_i32_0 = arith.constant 0 : i32
    %c0_i32_1 = arith.constant 0 : i32
    return %c0_i32, %c0_i32_0 : i32, i32
  }
  func.func @transform_13(%arg0: i32) -> (i32, i32) {
    %c0_i32 = arith.constant 0 : i32
    %c0_i32_0 = arith.constant 0 : i32
    %c0_i32_1 = arith.constant 0 : i32
    return %c0_i32, %c0_i32_0 : i32, i32
  }
}

</mosaic_0001>

<llo_original>
// kernel: tpu_custom_call.1
$region0: #{tpu_custom_call.1}
  #allocation0 [shape = 'u32[]', space=smem, size = 0x4, offset = 0x4, fixed_abs, tag = 'smem constant byte address 0x4 - core index']
  #allocation1 [shape = 'u32[144,128]{1,0:T(1,128)}', space=vmem, size = 0x12000, scoped, tag = 'internal scratch']
  #allocation2 [shape = 'f32[128,128]{1,0:T(8,128)}', space=vmem, size = 0x10000, scoped, tag = 'scratch operand']
  %s0 = inlined_call_operand.vmem [shape: f32[128,128], index: 0, kind: input, shape index: {}]
  %s1 = inlined_call_operand.hbm [shape: bf16[128,128], index: 1, kind: input, shape index: {}]
  %s2 = inlined_call_operand.hbm [shape: bf16[2,128,128], index: 2, kind: input, shape index: {}]
  %s3 = inlined_call_operand.hbm [shape: bf16[2,128,256], index: 3, kind: input, shape index: {}]
  %s4 = inlined_call_operand.hbm [shape: bf16[2,256,128], index: 4, kind: input, shape index: {}]
  %s5 = inlined_call_operand.vmem [shape: f32[2,1,256], index: 5, kind: input, shape index: {}]
  %s6 = inlined_call_operand.vmem [shape: f32[2,1,128], index: 6, kind: input, shape index: {}]
  %s7 = inlined_call_operand.vmem [shape: f32[2,1,128], index: 7, kind: input, shape index: {}]
  %s8 = inlined_call_operand.vmem [shape: f32[2,1,128], index: 8, kind: input, shape index: {}]
  %s9 = inlined_call_operand.vmem [shape: f32[128,1], index: 9, kind: input, shape index: {}]
  %s10 = inlined_call_operand.vmem [shape: bf16[2,128], index: 10, kind: input, shape index: {}]
  %s11 = inlined_call_operand.hbm [shape: bf16[128,128], index: 11, kind: input, shape index: {}]
  %s12 = inlined_call_operand.vmem [shape: f32[1,128], index: 12, kind: input, shape index: {}]
  %s13 = inlined_call_operand.hbm [shape: f32[2,128], index: 13, kind: output, shape index: {}]
  %s14 = sld [smem:[#allocation0]]
  $region117: #{tpu_custom_call.1} parent=0
    _
  %s16 = ssub.s32 1, %s14
  %s17 = scalar_select 0, %s16, %s14
  $region1: #{tpu_custom_call.1} parent=0
    #allocation3 [shape = 'u8[32768]{0}', space=vmem, size = 0x8000, scoped, tag = 'input window, operand 1, single buffered']
    #allocation4 [shape = 's32[2]{0}', space=sflag, size = 0x8, scoped, tag = 'scoped memory for tpu_custom_call.1']
    #allocation5 [shape = 's32[2]{0}', space=sflag, size = 0x8, scoped, tag = 'scoped memory for tpu_custom_call.1']
    #allocation6 [shape = 'u8[65536]{0}', space=vmem, size = 0x10000, scoped, tag = 'input window, operand 2']
    #allocation7 [shape = 's32[2]{0}', space=sflag, size = 0x8, scoped, tag = 'scoped memory for tpu_custom_call.1']
    #allocation8 [shape = 'u8[131072]{0}', space=vmem, size = 0x20000, scoped, tag = 'input window, operand 3']
    #allocation9 [shape = 'u8[131072]{0}', space=vmem, size = 0x20000, scoped, tag = 'input window, operand 4']
    #allocation10 [shape = 's32[2]{0}', space=sflag, size = 0x8, scoped, tag = 'scoped memory for tpu_custom_call.1']
    #allocation11 [shape = 'u8[32768]{0}', space=vmem, size = 0x8000, scoped, tag = 'input window, operand 11, single buffered']
    #allocation12 [shape = 'u8[1024]{0}', space=vmem, size = 0x400, scoped, tag = 'output window, operand 0, single buffered']
    %18 = vsyncpa [#allocation4], 0
    %19 = vsyncpa [#allocation7], 0
    %s20 = scalar_lea.sflag [#allocation7], 1
    %21 = vsyncpa %s20, 0
    %22 = vsyncpa [#allocation10], 0
    %s23 = scalar_lea.sflag [#allocation10], 1
    %24 = vsyncpa %s23, 0
    %25 = vsyncpa [#allocation5], 0
    loop: start=0, step=1, limit=4
    $region2: #{tpu_custom_call.1} parent=1 // loop_pre_header
      _
    $region3: #{tpu_custom_call.1} parent=1 // loop_header
      %s27 = sphi 0, %s31
      %p28 = scmp.ge.s32.totalorder %s27, 4
      %s35 = sphi 0, %s35
      %s37 = sphi 0, %s35
      %s38 = sphi 0, %s37
      %s52 = sphi 0, %s38
      %s56 = sphi 0, %s56
      %s58 = sphi 0, %s56
      %s59 = sphi 0, %s58
      %s73 = sphi 0, %s59
      %s79 = sphi 0, %s81
      %s82 = sphi 0, %s79
      %s83 = sphi 0, %s82
      %s99 = sphi 0, %s83
      %s105 = sphi 0, %s107
      %s108 = sphi 0, %s105
      %s109 = sphi 0, %s108
      %s125 = sphi 0, %s109
      %s131 = sphi 0, %s133
      %s134 = sphi 0, %s131
      %s135 = sphi 0, %s134
      %s151 = sphi 0, %s135
      %s155 = sphi 0, %s155
      %s157 = sphi 0, %s155
      %s158 = sphi 0, %s157
      %s172 = sphi 0, %s158
      %s176 = sphi 0, %s176
      %s178 = sphi 0, %s176
      %s179 = sphi 0, %s178
      %s193 = sphi 0, %s179
      %s197 = sphi 0, %s197
      %s199 = sphi 0, %s197
      %s200 = sphi 0, %s199
      %s214 = sphi 0, %s200
      %s218 = sphi 0, %s218
      %s220 = sphi 0, %s218
      %s221 = sphi 0, %s220
      %s235 = sphi 0, %s221
      %s239 = sphi 0, %s239
      %s241 = sphi 0, %s239
      %s242 = sphi 0, %s241
      %s256 = sphi 0, %s242
      %s260 = sphi 0, %s260
      %s262 = sphi 0, %s260
      %s263 = sphi 0, %s262
      %s277 = sphi 0, %s263
      %s281 = sphi 0, %s281
      %s283 = sphi 0, %s281
      %s284 = sphi 0, %s283
      %s298 = sphi 0, %s284
      %s302 = sphi 0, %s302
      %s304 = sphi 0, %s302
      %s305 = sphi 0, %s304
      %s319 = sphi 0, %s305
      %s323 = sphi 0, %s323
      %s325 = sphi 0, %s323
      %s326 = sphi 0, %s325
      %s340 = sphi 0, %s326
    $region4: #{tpu_custom_call.1} parent=1 // loop_header_branch
      %30 = sbr.rel (%p28) target = $region8
    $region5: #{tpu_custom_call.1} parent=1 // loop_body
      %s32 = ssub.s32 %s27, 1
      %s33 = ssub.s32 %s27, 2
      %s34 = sadd.s32 %s27, 1
      %s36 = sadd.s32 %s35, 1
      %p39 = scmp.eq.s32.totalorder %s27, 1
      %p40 = scmp.ne.s32.totalorder %s35, %s37
      %p41 = scmp.eq.s32.totalorder %s27, 0
      %p42 = por %p40, %p41
      %p43 = scmp.ne.s32.totalorder %s35, %s37
      %p44 = scmp.eq.s32.totalorder %s32, 1
      %p45 = por %p43, %p44
      %p46 = scmp.ne.s32.totalorder %s37, %s38
      %p47 = scmp.eq.s32.totalorder %s32, 0
      %p48 = por %p46, %p47
      %p49 = scmp.ne.s32.totalorder %s37, %s38
      %p50 = scmp.eq.s32.totalorder %s33, 1
      %p51 = por %p49, %p50
      %p53 = scmp.ne.s32.totalorder %s38, %s52
      %p54 = scmp.eq.s32.totalorder %s33, 0
      %p55 = por %p53, %p54
      %s57 = sadd.s32 %s56, 1
      %p60 = scmp.eq.s32.totalorder %s27, 1
      %p61 = scmp.ne.s32.totalorder %s56, %s58
      %p62 = scmp.eq.s32.totalorder %s27, 0
      %p63 = por %p61, %p62
      %p64 = scmp.ne.s32.totalorder %s56, %s58
      %p65 = scmp.eq.s32.totalorder %s32, 1
      %p66 = por %p64, %p65
      %p67 = scmp.ne.s32.totalorder %s58, %s59
      %p68 = scmp.eq.s32.totalorder %s32, 0
      %p69 = por %p67, %p68
      %p70 = scmp.ne.s32.totalorder %s58, %s59
      %p71 = scmp.eq.s32.totalorder %s33, 1
      %p72 = por %p70, %p71
      %p74 = scmp.ne.s32.totalorder %s59, %s73
      %p75 = scmp.eq.s32.totalorder %s33, 0
      %p76 = por %p74, %p75
      %s77 = ssub.s32 %s27, %s34
      %p78 = scmp.eq.s32.totalorder %s77, 0
      %s80 = sadd.s32 %s79, 1
      %s81 = scalar_select %p78, %s79, %s80
      %p84 = pneg %p78
      %p85 = scmp.eq.s32.totalorder %s27, 1
      %p86 = por %p84, %p85
      %p87 = scmp.ne.s32.totalorder %s79, %s82
      %p88 = scmp.eq.s32.totalorder %s27, 0
      %p89 = por %p87, %p88
      %p90 = scmp.ne.s32.totalorder %s79, %s82
      %p91 = scmp.eq.s32.totalorder %s32, 1
      %p92 = por %p90, %p91
      %p93 = scmp.ne.s32.totalorder %s82, %s83
      %p94 = scmp.eq.s32.totalorder %s32, 0
      %p95 = por %p93, %p94
      %p96 = scmp.ne.s32.totalorder %s82, %s83
      %p97 = scmp.eq.s32.totalorder %s33, 1
      %p98 = por %p96, %p97
      %p100 = scmp.ne.s32.totalorder %s83, %s99
      %p101 = scmp.eq.s32.totalorder %s33, 0
      %p102 = por %p100, %p101
      %s103 = ssub.s32 %s27, %s34
      %p104 = scmp.eq.s32.totalorder %s103, 0
      %s106 = sadd.s32 %s105, 1
      %s107 = scalar_select %p104, %s105, %s106
      %p110 = pneg %p104
      %p111 = scmp.eq.s32.totalorder %s27, 1
      %p112 = por %p110, %p111
      %p113 = scmp.ne.s32.totalorder %s105, %s108
      %p114 = scmp.eq.s32.totalorder %s27, 0
      %p115 = por %p113, %p114
      %p116 = scmp.ne.s32.totalorder %s105, %s108
      %p117 = scmp.eq.s32.totalorder %s32, 1
      %p118 = por %p116, %p117
      %p119 = scmp.ne.s32.totalorder %s108, %s109
      %p120 = scmp.eq.s32.totalorder %s32, 0
      %p121 = por %p119, %p120
      %p122 = scmp.ne.s32.totalorder %s108, %s109
      %p123 = scmp.eq.s32.totalorder %s33, 1
      %p124 = por %p122, %p123
      %p126 = scmp.ne.s32.totalorder %s109, %s125
      %p127 = scmp.eq.s32.totalorder %s33, 0
      %p128 = por %p126, %p127
      %s129 = ssub.s32 %s27, %s34
      %p130 = scmp.eq.s32.totalorder %s129, 0
      %s132 = sadd.s32 %s131, 1
      %s133 = scalar_select %p130, %s131, %s132
      %p136 = pneg %p130
      %p137 = scmp.eq.s32.totalorder %s27, 1
      %p138 = por %p136, %p137
      %p139 = scmp.ne.s32.totalorder %s131, %s134
      %p140 = scmp.eq.s32.totalorder %s27, 0
      %p141 = por %p139, %p140
      %p142 = scmp.ne.s32.totalorder %s131, %s134
      %p143 = scmp.eq.s32.totalorder %s32, 1
      %p144 = por %p142, %p143
      %p145 = scmp.ne.s32.totalorder %s134, %s135
      %p146 = scmp.eq.s32.totalorder %s32, 0
      %p147 = por %p145, %p146
      %p148 = scmp.ne.s32.totalorder %s134, %s135
      %p149 = scmp.eq.s32.totalorder %s33, 1
      %p150 = por %p148, %p149
      %p152 = scmp.ne.s32.totalorder %s135, %s151
      %p153 = scmp.eq.s32.totalorder %s33, 0
      %p154 = por %p152, %p153
      %s156 = sadd.s32 %s155, 1
      %p159 = scmp.eq.s32.totalorder %s27, 1
      %p160 = scmp.ne.s32.totalorder %s155, %s157
      %p161 = scmp.eq.s32.totalorder %s27, 0
      %p162 = por %p160, %p161
      %p163 = scmp.ne.s32.totalorder %s155, %s157
      %p164 = scmp.eq.s32.totalorder %s32, 1
      %p165 = por %p163, %p164
      %p166 = scmp.ne.s32.totalorder %s157, %s158
      %p167 = scmp.eq.s32.totalorder %s32, 0
      %p168 = por %p166, %p167
      %p169 = scmp.ne.s32.totalorder %s157, %s158
      %p170 = scmp.eq.s32.totalorder %s33, 1
      %p171 = por %p169, %p170
      %p173 = scmp.ne.s32.totalorder %s158, %s172
      %p174 = scmp.eq.s32.totalorder %s33, 0
      %p175 = por %p173, %p174
      %s177 = sadd.s32 %s176, 1
      %p180 = scmp.eq.s32.totalorder %s27, 1
      %p181 = scmp.ne.s32.totalorder %s176, %s178
      %p182 = scmp.eq.s32.totalorder %s27, 0
      %p183 = por %p181, %p182
      %p184 = scmp.ne.s32.totalorder %s176, %s178
      %p185 = scmp.eq.s32.totalorder %s32, 1
      %p186 = por %p184, %p185
      %p187 = scmp.ne.s32.totalorder %s178, %s179
      %p188 = scmp.eq.s32.totalorder %s32, 0
      %p189 = por %p187, %p188
      %p190 = scmp.ne.s32.totalorder %s178, %s179
      %p191 = scmp.eq.s32.totalorder %s33, 1
      %p192 = por %p190, %p191
      %p194 = scmp.ne.s32.totalorder %s179, %s193
      %p195 = scmp.eq.s32.totalorder %s33, 0
      %p196 = por %p194, %p195
      %s198 = sadd.s32 %s197, 1
      %p201 = scmp.eq.s32.totalorder %s27, 1
      %p202 = scmp.ne.s32.totalorder %s197, %s199
      %p203 = scmp.eq.s32.totalorder %s27, 0
      %p204 = por %p202, %p203
      %p205 = scmp.ne.s32.totalorder %s197, %s199
      %p206 = scmp.eq.s32.totalorder %s32, 1
      %p207 = por %p205, %p206
      %p208 = scmp.ne.s32.totalorder %s199, %s200
      %p209 = scmp.eq.s32.totalorder %s32, 0
      %p210 = por %p208, %p209
      %p211 = scmp.ne.s32.totalorder %s199, %s200
      %p212 = scmp.eq.s32.totalorder %s33, 1
      %p213 = por %p211, %p212
      %p215 = scmp.ne.s32.totalorder %s200, %s214
      %p216 = scmp.eq.s32.totalorder %s33, 0
      %p217 = por %p215, %p216
      %s219 = sadd.s32 %s218, 1
      %p222 = scmp.eq.s32.totalorder %s27, 1
      %p223 = scmp.ne.s32.totalorder %s218, %s220
      %p224 = scmp.eq.s32.totalorder %s27, 0
      %p225 = por %p223, %p224
      %p226 = scmp.ne.s32.totalorder %s218, %s220
      %p227 = scmp.eq.s32.totalorder %s32, 1
      %p228 = por %p226, %p227
      %p229 = scmp.ne.s32.totalorder %s220, %s221
      %p230 = scmp.eq.s32.totalorder %s32, 0
      %p231 = por %p229, %p230
      %p232 = scmp.ne.s32.totalorder %s220, %s221
      %p233 = scmp.eq.s32.totalorder %s33, 1
      %p234 = por %p232, %p233
      %p236 = scmp.ne.s32.totalorder %s221, %s235
      %p237 = scmp.eq.s32.totalorder %s33, 0
      %p238 = por %p236, %p237
      %s240 = sadd.s32 %s239, 1
      %p243 = scmp.eq.s32.totalorder %s27, 1
      %p244 = scmp.ne.s32.totalorder %s239, %s241
      %p245 = scmp.eq.s32.totalorder %s27, 0
      %p246 = por %p244, %p245
      %p247 = scmp.ne.s32.totalorder %s239, %s241
      %p248 = scmp.eq.s32.totalorder %s32, 1
      %p249 = por %p247, %p248
      %p250 = scmp.ne.s32.totalorder %s241, %s242
      %p251 = scmp.eq.s32.totalorder %s32, 0
      %p252 = por %p250, %p251
      %p253 = scmp.ne.s32.totalorder %s241, %s242
      %p254 = scmp.eq.s32.totalorder %s33, 1
      %p255 = por %p253, %p254
      %p257 = scmp.ne.s32.totalorder %s242, %s256
      %p258 = scmp.eq.s32.totalorder %s33, 0
      %p259 = por %p257, %p258
      %s261 = sadd.s32 %s260, 1
      %p264 = scmp.eq.s32.totalorder %s27, 1
      %p265 = scmp.ne.s32.totalorder %s260, %s262
      %p266 = scmp.eq.s32.totalorder %s27, 0
      %p267 = por %p265, %p266
      %p268 = scmp.ne.s32.totalorder %s260, %s262
      %p269 = scmp.eq.s32.totalorder %s32, 1
      %p270 = por %p268, %p269
      %p271 = scmp.ne.s32.totalorder %s262, %s263
      %p272 = scmp.eq.s32.totalorder %s32, 0
      %p273 = por %p271, %p272
      %p274 = scmp.ne.s32.totalorder %s262, %s263
      %p275 = scmp.eq.s32.totalorder %s33, 1
      %p276 = por %p274, %p275
      %p278 = scmp.ne.s32.totalorder %s263, %s277
      %p279 = scmp.eq.s32.totalorder %s33, 0
      %p280 = por %p278, %p279
      %s282 = sadd.s32 %s281, 1
      %p285 = scmp.eq.s32.totalorder %s27, 1
      %p286 = scmp.ne.s32.totalorder %s281, %s283
      %p287 = scmp.eq.s32.totalorder %s27, 0
      %p288 = por %p286, %p287
      %p289 = scmp.ne.s32.totalorder %s281, %s283
      %p290 = scmp.eq.s32.totalorder %s32, 1
      %p291 = por %p289, %p290
      %p292 = scmp.ne.s32.totalorder %s283, %s284
      %p293 = scmp.eq.s32.totalorder %s32, 0
      %p294 = por %p292, %p293
      %p295 = scmp.ne.s32.totalorder %s283, %s284
      %p296 = scmp.eq.s32.totalorder %s33, 1
      %p297 = por %p295, %p296
      %p299 = scmp.ne.s32.totalorder %s284, %s298
      %p300 = scmp.eq.s32.totalorder %s33, 0
      %p301 = por %p299, %p300
      %s303 = sadd.s32 %s302, 1
      %p306 = scmp.eq.s32.totalorder %s27, 1
      %p307 = scmp.ne.s32.totalorder %s302, %s304
      %p308 = scmp.eq.s32.totalorder %s27, 0
      %p309 = por %p307, %p308
      %p310 = scmp.ne.s32.totalorder %s302, %s304
      %p311 = scmp.eq.s32.totalorder %s32, 1
      %p312 = por %p310, %p311
      %p313 = scmp.ne.s32.totalorder %s304, %s305
      %p314 = scmp.eq.s32.totalorder %s32, 0
      %p315 = por %p313, %p314
      %p316 = scmp.ne.s32.totalorder %s304, %s305
      %p317 = scmp.eq.s32.totalorder %s33, 1
      %p318 = por %p316, %p317
      %p320 = scmp.ne.s32.totalorder %s305, %s319
      %p321 = scmp.eq.s32.totalorder %s33, 0
      %p322 = por %p320, %p321
      %s324 = sadd.s32 %s323, 1
      %p327 = scmp.eq.s32.totalorder %s27, 1
      %p328 = scmp.ne.s32.totalorder %s323, %s325
      %p329 = scmp.eq.s32.totalorder %s27, 0
      %p330 = por %p328, %p329
      %p331 = scmp.ne.s32.totalorder %s323, %s325
      %p332 = scmp.eq.s32.totalorder %s32, 1
      %p333 = por %p331, %p332
      %p334 = scmp.ne.s32.totalorder %s325, %s326
      %p335 = scmp.eq.s32.totalorder %s32, 0
      %p336 = por %p334, %p335
      %p337 = scmp.ne.s32.totalorder %s325, %s326
      %p338 = scmp.eq.s32.totalorder %s33, 1
      %p339 = por %p337, %p338
      %p341 = scmp.ne.s32.totalorder %s326, %s340
      %p342 = scmp.eq.s32.totalorder %s33, 0
      %p343 = por %p341, %p342
      %p344 = scmp.le.s32.totalorder 1, %s27
      %p345 = scmp.lt.s32.totalorder %s27, 3
      %p346 = pnand %p344, %p345
      %p347 = pneg %p346
      // Predicated region
      $region9: #{tpu_custom_call.1} parent=5 // pred_check
        _
      $region10: #{tpu_custom_call.1} parent=5 // pred_check_branch
        %349 = sbr.rel (%p346) target = $region12
      $region11: #{tpu_custom_call.1} parent=5 // pred_region
        %s350 = ssub.s32 %s27, 1
        // Predicated region
        $region13: #{tpu_custom_call.1} parent=11 // pred_check
          %p351 = pneg %p48
        $region14: #{tpu_custom_call.1} parent=11 // pred_check_branch
          %353 = sbr.rel (%p351) target = $region16
        $region15: #{tpu_custom_call.1} parent=11 // pred_region
          _
        $region16: #{tpu_custom_call.1} parent=11 // pred_fallthru
          _
        // Predicated region
        $region17: #{tpu_custom_call.1} parent=11 // pred_check
          %p354 = pneg %p69
        $region18: #{tpu_custom_call.1} parent=11 // pred_check_branch
          %356 = sbr.rel (%p354) target = $region20
        $region19: #{tpu_custom_call.1} parent=11 // pred_region
          %s358 = ssub.s32 1024, 1024
          %359 = vsyncadd [#allocation4], %s358
          %s360 = sshll.u32 [#allocation3], 4
          %s361 = int_to_ptr.vmem [resolvable:$true] %s360
          %366 = dma.hbm_to_vmem [thread:$0]  %s1, 1024, %s361, [#allocation4], 64, 64, 4
        $region20: #{tpu_custom_call.1} parent=11 // pred_fallthru
          _
        // Predicated region
        $region21: #{tpu_custom_call.1} parent=11 // pred_check
          %p367 = pneg %p168
        $region22: #{tpu_custom_call.1} parent=11 // pred_check_branch
          %369 = sbr.rel (%p367) target = $region24
        $region23: #{tpu_custom_call.1} parent=11 // pred_region
          _
        $region24: #{tpu_custom_call.1} parent=11 // pred_fallthru
          _
        // Predicated region
        $region25: #{tpu_custom_call.1} parent=11 // pred_check
          %p370 = pneg %p189
        $region26: #{tpu_custom_call.1} parent=11 // pred_check_branch
          %372 = sbr.rel (%p370) target = $region28
        $region27: #{tpu_custom_call.1} parent=11 // pred_region
          _
        $region28: #{tpu_custom_call.1} parent=11 // pred_fallthru
          _
        // Predicated region
        $region29: #{tpu_custom_call.1} parent=11 // pred_check
          %p373 = pneg %p210
        $region30: #{tpu_custom_call.1} parent=11 // pred_check_branch
          %375 = sbr.rel (%p373) target = $region32
        $region31: #{tpu_custom_call.1} parent=11 // pred_region
          _
        $region32: #{tpu_custom_call.1} parent=11 // pred_fallthru
          _
        // Predicated region
        $region33: #{tpu_custom_call.1} parent=11 // pred_check
          %p376 = pneg %p231
        $region34: #{tpu_custom_call.1} parent=11 // pred_check_branch
          %378 = sbr.rel (%p376) target = $region36
        $region35: #{tpu_custom_call.1} parent=11 // pred_region
          _
        $region36: #{tpu_custom_call.1} parent=11 // pred_fallthru
          _
        // Predicated region
        $region37: #{tpu_custom_call.1} parent=11 // pred_check
          %p379 = pneg %p252
        $region38: #{tpu_custom_call.1} parent=11 // pred_check_branch
          %381 = sbr.rel (%p379) target = $region40
        $region39: #{tpu_custom_call.1} parent=11 // pred_region
          _
        $region40: #{tpu_custom_call.1} parent=11 // pred_fallthru
          _
        // Predicated region
        $region41: #{tpu_custom_call.1} parent=11 // pred_check
          %p382 = pneg %p273
        $region42: #{tpu_custom_call.1} parent=11 // pred_check_branch
          %384 = sbr.rel (%p382) target = $region44
        $region43: #{tpu_custom_call.1} parent=11 // pred_region
          _
        $region44: #{tpu_custom_call.1} parent=11 // pred_fallthru
          _
        // Predicated region
        $region45: #{tpu_custom_call.1} parent=11 // pred_check
          %p385 = pneg %p294
        $region46: #{tpu_custom_call.1} parent=11 // pred_check_branch
          %387 = sbr.rel (%p385) target = $region48
        $region47: #{tpu_custom_call.1} parent=11 // pred_region
          %s389 = ssub.s32 1024, 1024
          %390 = vsyncadd [#allocation10], %s389
          %s391 = sshll.u32 [#allocation11], 4
          %s392 = int_to_ptr.vmem [resolvable:$true] %s391
          %397 = dma.hbm_to_vmem [thread:$0]  %s11, 1024, %s392, [#allocation10], 64, 64, 4
        $region48: #{tpu_custom_call.1} parent=11 // pred_fallthru
          _
        // Predicated region
        $region49: #{tpu_custom_call.1} parent=11 // pred_check
          %p398 = pneg %p315
        $region50: #{tpu_custom_call.1} parent=11 // pred_check_branch
          %400 = sbr.rel (%p398) target = $region52
        $region51: #{tpu_custom_call.1} parent=11 // pred_region
          _
        $region52: #{tpu_custom_call.1} parent=11 // pred_fallthru
          _
      $region12: #{tpu_custom_call.1} parent=5 // pred_fallthru
        _
      %p401 = scmp.lt.s32.totalorder %s27, 2
      // Predicated region
      $region53: #{tpu_custom_call.1} parent=5 // pred_check
        %p402 = pneg %p401
      $region54: #{tpu_custom_call.1} parent=5 // pred_check_branch
        %404 = sbr.rel (%p402) target = $region56
      $region55: #{tpu_custom_call.1} parent=5 // pred_region
        // Predicated region
        $region57: #{tpu_custom_call.1} parent=55 // pred_check
          %p405 = pneg %p89
        $region58: #{tpu_custom_call.1} parent=55 // pred_check_branch
          %407 = sbr.rel (%p405) target = $region60
        $region59: #{tpu_custom_call.1} parent=55 // pred_region
          %s408 = sand.u32 %s27, 1
          %s409 = scalar_lea.sflag [#allocation7], %s408
          %s410 = sand.u32 %s79, 1
          %s411 = smul.addr %s410, 64
          %s412 = scalar_lea.vmem [#allocation6], %s411
          %s414 = ssub.s32 1024, 1024
          %415 = vsyncadd %s409, %s414
          %s416 = smul.addr %s27, 16
          %s417 = smul.addr %s416, 64
          %s418 = scalar_lea.hbm %s2, %s417
          %s419 = sshll.u32 %s412, 4
          %s420 = int_to_ptr.vmem [resolvable:$true] %s419
          %425 = dma.hbm_to_vmem [thread:$0]  %s418, 1024, %s420, %s409, 64, 64, 4
        $region60: #{tpu_custom_call.1} parent=55 // pred_fallthru
          _
        // Predicated region
        $region61: #{tpu_custom_call.1} parent=55 // pred_check
          %p426 = pneg %p115
        $region62: #{tpu_custom_call.1} parent=55 // pred_check_branch
          %428 = sbr.rel (%p426) target = $region64
        $region63: #{tpu_custom_call.1} parent=55 // pred_region
          %s429 = sand.u32 %s27, 1
          %s430 = scalar_lea.sflag [#allocation7], %s429
          %s431 = sand.u32 %s105, 1
          %s432 = smul.addr %s431, 128
          %s433 = scalar_lea.vmem [#allocation8], %s432
          %s435 = ssub.s32 2048, 2048
          %436 = vsyncadd %s430, %s435
          %s437 = smul.addr %s27, 32
          %s438 = smul.addr %s437, 64
          %s439 = scalar_lea.hbm %s3, %s438
          %s440 = sshll.u32 %s433, 4
          %s441 = int_to_ptr.vmem [resolvable:$true] %s440
          %446 = dma.hbm_to_vmem [thread:$0]  %s439, 2048, %s441, %s430, 128, 128, 8
        $region64: #{tpu_custom_call.1} parent=55 // pred_fallthru
          _
        // Predicated region
        $region65: #{tpu_custom_call.1} parent=55 // pred_check
          %p447 = pneg %p141
        $region66: #{tpu_custom_call.1} parent=55 // pred_check_branch
          %449 = sbr.rel (%p447) target = $region68
        $region67: #{tpu_custom_call.1} parent=55 // pred_region
          %s450 = sand.u32 %s27, 1
          %s451 = scalar_lea.sflag [#allocation10], %s450
          %s452 = sand.u32 %s131, 1
          %s453 = smul.addr %s452, 128
          %s454 = scalar_lea.vmem [#allocation9], %s453
          %s456 = ssub.s32 2048, 2048
          %457 = vsyncadd %s451, %s456
          %s458 = smul.addr %s27, 32
          %s459 = smul.addr %s458, 64
          %s460 = scalar_lea.hbm %s4, %s459
          %s461 = sshll.u32 %s454, 4
          %s462 = int_to_ptr.vmem [resolvable:$true] %s461
          %467 = dma.hbm_to_vmem [thread:$0]  %s460, 2048, %s462, %s451, 64, 64, 4
        $region68: #{tpu_custom_call.1} parent=55 // pred_fallthru
          _
      $region56: #{tpu_custom_call.1} parent=5 // pred_fallthru
        _
      %p468 = scmp.le.s32.totalorder 1, %s27
      %p469 = scmp.lt.s32.totalorder %s27, 3
      %p470 = pnand %p468, %p469
      %p471 = pneg %p470
      // Predicated region
      $region69: #{tpu_custom_call.1} parent=5 // pred_check
        _
      $region70: #{tpu_custom_call.1} parent=5 // pred_check_branch
        %473 = sbr.rel (%p470) target = $region72
      $region71: #{tpu_custom_call.1} parent=5 // pred_region
        %s474 = ssub.s32 %s27, 1
        // Predicated region
        $region73: #{tpu_custom_call.1} parent=71 // pred_check
          %p475 = pneg %p69
        $region74: #{tpu_custom_call.1} parent=71 // pred_check_branch
          %477 = sbr.rel (%p475) target = $region76
        $region75: #{tpu_custom_call.1} parent=71 // pred_region
          %478 = dma.done [#allocation4], 1024
        $region76: #{tpu_custom_call.1} parent=71 // pred_fallthru
          _
        %s479 = sand.u32 %s32, 1
        %s480 = scalar_lea.sflag [#allocation7], %s479
        %s481 = sand.u32 %s82, 1
        %s482 = smul.addr %s481, 64
        %s483 = scalar_lea.vmem [#allocation6], %s482
        // Predicated region
        $region77: #{tpu_custom_call.1} parent=71 // pred_check
          %p484 = pneg %p95
        $region78: #{tpu_custom_call.1} parent=71 // pred_check_branch
          %486 = sbr.rel (%p484) target = $region80
        $region79: #{tpu_custom_call.1} parent=71 // pred_region
          %487 = dma.done %s480, 1024
        $region80: #{tpu_custom_call.1} parent=71 // pred_fallthru
          _
        %s488 = sand.u32 %s32, 1
        %s489 = scalar_lea.sflag [#allocation7], %s488
        %s490 = sand.u32 %s108, 1
        %s491 = smul.addr %s490, 128
        %s492 = scalar_lea.vmem [#allocation8], %s491
        // Predicated region
        $region81: #{tpu_custom_call.1} parent=71 // pred_check
          %p493 = pneg %p121
        $region82: #{tpu_custom_call.1} parent=71 // pred_check_branch
          %495 = sbr.rel (%p493) target = $region84
        $region83: #{tpu_custom_call.1} parent=71 // pred_region
          %496 = dma.done %s489, 2048
        $region84: #{tpu_custom_call.1} parent=71 // pred_fallthru
          _
        %s497 = sand.u32 %s32, 1
        %s498 = scalar_lea.sflag [#allocation10], %s497
        %s499 = sand.u32 %s134, 1
        %s500 = smul.addr %s499, 128
        %s501 = scalar_lea.vmem [#allocation9], %s500
        // Predicated region
        $region85: #{tpu_custom_call.1} parent=71 // pred_check
          %p502 = pneg %p147
        $region86: #{tpu_custom_call.1} parent=71 // pred_check_branch
          %504 = sbr.rel (%p502) target = $region88
        $region87: #{tpu_custom_call.1} parent=71 // pred_region
          %505 = dma.done %s498, 2048
        $region88: #{tpu_custom_call.1} parent=71 // pred_fallthru
          _
        // Predicated region
        $region89: #{tpu_custom_call.1} parent=71 // pred_check
          %p506 = pneg %p294
        $region90: #{tpu_custom_call.1} parent=71 // pred_check_branch
          %508 = sbr.rel (%p506) target = $region92
        $region91: #{tpu_custom_call.1} parent=71 // pred_region
          %509 = dma.done [#allocation10], 1024
        $region92: #{tpu_custom_call.1} parent=71 // pred_fallthru
          _
        %p510 = pneg %p48
        %p511 = pneg %p45
        %p512 = pneg %p69
        %p513 = pneg %p66
        %s514 = sand.u32 %s32, 1
        %s515 = scalar_lea.sflag [#allocation7], %s514
        %s516 = sand.u32 %s82, 1
        %s517 = smul.addr %s516, 64
        %s518 = scalar_lea.vmem [#allocation6], %s517
        %p519 = pneg %p95
        %p520 = pneg %p92
        %s521 = sand.u32 %s32, 1
        %s522 = scalar_lea.sflag [#allocation7], %s521
        %s523 = sand.u32 %s108, 1
        %s524 = smul.addr %s523, 128
        %s525 = scalar_lea.vmem [#allocation8], %s524
        %p526 = pneg %p121
        %p527 = pneg %p118
        %s528 = sand.u32 %s32, 1
        %s529 = scalar_lea.sflag [#allocation10], %s528
        %s530 = sand.u32 %s134, 1
        %s531 = smul.addr %s530, 128
        %s532 = scalar_lea.vmem [#allocation9], %s531
        %p533 = pneg %p147
        %p534 = pneg %p144
        %p535 = pneg %p168
        %p536 = pneg %p165
        %p537 = pneg %p189
        %p538 = pneg %p186
        %p539 = pneg %p210
        %p540 = pneg %p207
        %p541 = pneg %p231
        %p542 = pneg %p228
        %p543 = pneg %p252
        %p544 = pneg %p249
        %p545 = pneg %p273
        %p546 = pneg %p270
        %p547 = pneg %p294
        %p548 = pneg %p291
        %p549 = pneg %p315
        %p550 = pneg %p312
        %p551 = pneg %p336
        %p552 = pneg %p333
        %p554 = scmp.eq.s32.totalorder %s32, 0
        // Predicated region
        $region93: #{tpu_custom_call.1} parent=71 // pred_check
          %p555 = pneg %p554
        $region94: #{tpu_custom_call.1} parent=71 // pred_check_branch
          %557 = sbr.rel (%p555) target = $region96
        $region95: #{tpu_custom_call.1} parent=71 // pred_region
          %v558 = vld [vmem:[%s0] sm:$0xff]
          %v559 = vld [vmem:[%s0 + $0x8] sm:$0xff]
          %v560 = vld [vmem:[%s0 + $0x10] sm:$0xff]
          %v561 = vld [vmem:[%s0 + $0x18] sm:$0xff]
          %v562 = vld [vmem:[%s0 + $0x20] sm:$0xff]
          %v563 = vld [vmem:[%s0 + $0x28] sm:$0xff]
          %v564 = vld [vmem:[%s0 + $0x30] sm:$0xff]
          %v565 = vld [vmem:[%s0 + $0x38] sm:$0xff]
          %v566 = vld [vmem:[%s0 + $0x40] sm:$0xff]
          %v567 = vld [vmem:[%s0 + $0x48] sm:$0xff]
          %v568 = vld [vmem:[%s0 + $0x50] sm:$0xff]
          %v569 = vld [vmem:[%s0 + $0x58] sm:$0xff]
          %v570 = vld [vmem:[%s0 + $0x60] sm:$0xff]
          %v571 = vld [vmem:[%s0 + $0x68] sm:$0xff]
          %v572 = vld [vmem:[%s0 + $0x70] sm:$0xff]
          %v573 = vld [vmem:[%s0 + $0x78] sm:$0xff]
          %574 = vst [vmem:[#allocation2] sm:$0xff] %v558
          %575 = vst [vmem:[#allocation2 + $0x8] sm:$0xff] %v559
          %576 = vst [vmem:[#allocation2 + $0x10] sm:$0xff] %v560
          %577 = vst [vmem:[#allocation2 + $0x18] sm:$0xff] %v561
          %578 = vst [vmem:[#allocation2 + $0x20] sm:$0xff] %v562
          %579 = vst [vmem:[#allocation2 + $0x28] sm:$0xff] %v563
          %580 = vst [vmem:[#allocation2 + $0x30] sm:$0xff] %v564
          %581 = vst [vmem:[#allocation2 + $0x38] sm:$0xff] %v565
          %582 = vst [vmem:[#allocation2 + $0x40] sm:$0xff] %v566
          %583 = vst [vmem:[#allocation2 + $0x48] sm:$0xff] %v567
          %584 = vst [vmem:[#allocation2 + $0x50] sm:$0xff] %v568
          %585 = vst [vmem:[#allocation2 + $0x58] sm:$0xff] %v569
          %586 = vst [vmem:[#allocation2 + $0x60] sm:$0xff] %v570
          %587 = vst [vmem:[#allocation2 + $0x68] sm:$0xff] %v571
          %588 = vst [vmem:[#allocation2 + $0x70] sm:$0xff] %v572
          %589 = vst [vmem:[#allocation2 + $0x78] sm:$0xff] %v573
        $region96: #{tpu_custom_call.1} parent=71 // pred_fallthru
          _
        %v590 = vld [vmem:[#allocation2] sm:$0xff]
        %v591 = vld [vmem:[#allocation2 + $0x8] sm:$0xff]
        %v592 = vld [vmem:[#allocation2 + $0x10] sm:$0xff]
        %v593 = vld [vmem:[#allocation2 + $0x18] sm:$0xff]
        %v594 = vld [vmem:[#allocation2 + $0x20] sm:$0xff]
        %v595 = vld [vmem:[#allocation2 + $0x28] sm:$0xff]
        %v596 = vld [vmem:[#allocation2 + $0x30] sm:$0xff]
        %v597 = vld [vmem:[#allocation2 + $0x38] sm:$0xff]
        %v598 = vld [vmem:[#allocation2 + $0x40] sm:$0xff]
        %v599 = vld [vmem:[#allocation2 + $0x48] sm:$0xff]
        %v600 = vld [vmem:[#allocation2 + $0x50] sm:$0xff]
        %v601 = vld [vmem:[#allocation2 + $0x58] sm:$0xff]
        %v602 = vld [vmem:[#allocation2 + $0x60] sm:$0xff]
        %v603 = vld [vmem:[#allocation2 + $0x68] sm:$0xff]
        %v604 = vld [vmem:[#allocation2 + $0x70] sm:$0xff]
        %v605 = vld [vmem:[#allocation2 + $0x78] sm:$0xff]
        %v606 = vld [vmem:[#allocation3] sm:$0xf]
        %v607 = vld [vmem:[#allocation3 + $0x4] sm:$0xf]
        %v608 = vld [vmem:[#allocation3 + $0x8] sm:$0xf]
        %v609 = vld [vmem:[#allocation3 + $0xc] sm:$0xf]
        %v610 = vld [vmem:[#allocation3 + $0x10] sm:$0xf]
        %v611 = vld [vmem:[#allocation3 + $0x14] sm:$0xf]
        %v612 = vld [vmem:[#allocation3 + $0x18] sm:$0xf]
        %v613 = vld [vmem:[#allocation3 + $0x1c] sm:$0xf]
        %v614 = vld [vmem:[#allocation3 + $0x20] sm:$0xf]
        %v615 = vld [vmem:[#allocation3 + $0x24] sm:$0xf]
        %v616 = vld [vmem:[#allocation3 + $0x28] sm:$0xf]
        %v617 = vld [vmem:[#allocation3 + $0x2c] sm:$0xf]
        %v618 = vld [vmem:[#allocation3 + $0x30] sm:$0xf]
        %v619 = vld [vmem:[#allocation3 + $0x34] sm:$0xf]
        %v620 = vld [vmem:[#allocation3 + $0x38] sm:$0xf]
        %v621 = vld [vmem:[#allocation3 + $0x3c] sm:$0xf]
        %v622 = vpack.c.bf16 %v591, %v590
        %v623 = vpack.c.bf16 %v593, %v592
        %v624 = vpack.c.bf16 %v595, %v594
        %v625 = vpack.c.bf16 %v597, %v596
        %v626 = vpack.c.bf16 %v599, %v598
        %v627 = vpack.c.bf16 %v601, %v600
        %v628 = vpack.c.bf16 %v603, %v602
        %v629 = vpack.c.bf16 %v605, %v604
        %v630 = vld [vmem:[%s483] sm:$0xf]
        %v631 = vld [vmem:[%s483 + $0x4] sm:$0xf]
        %v632 = vld [vmem:[%s483 + $0x8] sm:$0xf]
        %v633 = vld [vmem:[%s483 + $0xc] sm:$0xf]
        %v634 = vld [vmem:[%s483 + $0x10] sm:$0xf]
        %v635 = vld [vmem:[%s483 + $0x14] sm:$0xf]
        %v636 = vld [vmem:[%s483 + $0x18] sm:$0xf]
        %v637 = vld [vmem:[%s483 + $0x1c] sm:$0xf]
        %v638 = vld [vmem:[%s483 + $0x20] sm:$0xf]
        %v639 = vld [vmem:[%s483 + $0x24] sm:$0xf]
        %v640 = vld [vmem:[%s483 + $0x28] sm:$0xf]
        %v641 = vld [vmem:[%s483 + $0x2c] sm:$0xf]
        %v642 = vld [vmem:[%s483 + $0x30] sm:$0xf]
        %v643 = vld [vmem:[%s483 + $0x34] sm:$0xf]
        %v644 = vld [vmem:[%s483 + $0x38] sm:$0xf]
        %v645 = vld [vmem:[%s483 + $0x3c] sm:$0xf]
        %v646 = vunpack.c.l.bf16 %v630
        %v647 = vunpack.c.l.bf16 %v631
        %v648 = vunpack.c.l.bf16 %v632
        %v649 = vunpack.c.l.bf16 %v633
        %v650 = vunpack.c.l.bf16 %v634
        %v651 = vunpack.c.l.bf16 %v635
        %v652 = vunpack.c.l.bf16 %v636
        %v653 = vunpack.c.l.bf16 %v637
        %v654 = vunpack.c.l.bf16 %v638
        %v655 = vunpack.c.l.bf16 %v639
        %v656 = vunpack.c.l.bf16 %v640
        %v657 = vunpack.c.l.bf16 %v641
        %v658 = vunpack.c.l.bf16 %v642
        %v659 = vunpack.c.l.bf16 %v643
        %v660 = vunpack.c.l.bf16 %v644
        %v661 = vunpack.c.l.bf16 %v645
        %v678 = vunpack.c.l.b16 %v606
        %v679 = vunpack.c.l.b16 %v607
        %v680 = vunpack.c.l.b16 %v608
        %v681 = vunpack.c.l.b16 %v609
        %v682 = vunpack.c.l.b16 %v610
        %v683 = vunpack.c.l.b16 %v611
        %v684 = vunpack.c.l.b16 %v612
        %v685 = vunpack.c.l.b16 %v613
        %v686 = vunpack.c.l.b16 %v614
        %v687 = vunpack.c.l.b16 %v615
        %v688 = vunpack.c.l.b16 %v616
        %v689 = vunpack.c.l.b16 %v617
        %v690 = vunpack.c.l.b16 %v618
        %v691 = vunpack.c.l.b16 %v619
        %v692 = vunpack.c.l.b16 %v620
        %v693 = vunpack.c.l.b16 %v621
        %v694 = vpack.c.b16 %v679, %v678
        %v695 = vpack.c.b16 %v681, %v680
        %v696 = vpack.c.b16 %v683, %v682
        %v697 = vpack.c.b16 %v685, %v684
        %v698 = vpack.c.b16 %v687, %v686
        %v699 = vpack.c.b16 %v689, %v688
        %v700 = vpack.c.b16 %v691, %v690
        %v701 = vpack.c.b16 %v693, %v692
        %710 = vmatprep.subr.bf16.mxu0 0
        %711 = vmatpush1.bf16.msra.mxu0 %v622
        %712 = vmatprep.subr.bf16.mxu0 0
        %713 = vmatpush1.bf16.msra.mxu0 %v623
        %714 = vmatprep.subr.bf16.mxu0 0
        %715 = vmatpush1.bf16.msra.mxu0 %v624
        %716 = vmatprep.subr.bf16.mxu0 0
        %717 = vmatpush1.bf16.msra.mxu0 %v625
        %718 = vmatprep.subr.bf16.mxu0 0
        %719 = vmatpush1.bf16.msra.mxu0 %v626
        %720 = vmatprep.subr.bf16.mxu0 0
        %721 = vmatpush1.bf16.msra.mxu0 %v627
        %722 = vmatprep.subr.bf16.mxu0 0
        %723 = vmatpush1.bf16.msra.mxu0 %v628
        %724 = vmatprep.subr.bf16.mxu0 0
        %725 = vmatpush1.bf16.msra.mxu0 %v629
        %726 = vmatprep.subr.bf16.mxu0 0
        %727 = vmatpush1.bf16.msra.mxu0 0
        %728 = vmatprep.subr.bf16.mxu0 0
        %729 = vmatpush1.bf16.msra.mxu0 0
        %730 = vmatprep.subr.bf16.mxu0 0
        %731 = vmatpush1.bf16.msra.mxu0 0
        %732 = vmatprep.subr.bf16.mxu0 0
        %733 = vmatpush1.bf16.msra.mxu0 0
        %734 = vmatprep.subr.bf16.mxu0 0
        %735 = vmatpush1.bf16.msra.mxu0 0
        %736 = vmatprep.subr.bf16.mxu0 0
        %737 = vmatpush1.bf16.msra.mxu0 0
        %738 = vmatprep.subr.bf16.mxu0 0
        %739 = vmatpush1.bf16.msra.mxu0 0
        %740 = vmatprep.subr.bf16.mxu0 0
        %741 = vmatpush1.bf16.msra.mxu0 0
        %742 = vmatprep.mubr.bf16.mxu0 0
        %743 = vmatmul.mubr.bf16.gmra.mrb[0].mxu0 %v694
        %v744 = vpop.f32.mrb[0].mxu0
        %v745 = vadd.f32 %v646, %v744
        %v746 = vpop.f32.mrb[0].mxu0
        %v747 = vpop.f32.mrb[0].mxu0
        %v748 = vadd.f32 %v647, %v747
        %v749 = vpop.f32.mrb[0].mxu0
        %750 = vmatprep.mubr.bf16.mxu0 0
        %751 = vmatmul.mubr.bf16.gmra.mrb[0].mxu0 %v695
        %v752 = vpop.f32.mrb[0].mxu0
        %v753 = vadd.f32 %v648, %v752
        %v754 = vpop.f32.mrb[0].mxu0
        %v755 = vpop.f32.mrb[0].mxu0
        %v756 = vadd.f32 %v649, %v755
        %v757 = vpop.f32.mrb[0].mxu0
        %758 = vmatprep.mubr.bf16.mxu0 0
        %759 = vmatmul.mubr.bf16.gmra.mrb[0].mxu0 %v696
        %v760 = vpop.f32.mrb[0].mxu0
        %v761 = vadd.f32 %v650, %v760
        %v762 = vpop.f32.mrb[0].mxu0
        %v763 = vpop.f32.mrb[0].mxu0
        %v764 = vadd.f32 %v651, %v763
        %v765 = vpop.f32.mrb[0].mxu0
        %766 = vmatprep.mubr.bf16.mxu0 0
        %767 = vmatmul.mubr.bf16.gmra.mrb[0].mxu0 %v697
        %v768 = vpop.f32.mrb[0].mxu0
        %v769 = vadd.f32 %v652, %v768
        %v770 = vpop.f32.mrb[0].mxu0
        %v771 = vpop.f32.mrb[0].mxu0
        %v772 = vadd.f32 %v653, %v771
        %v773 = vpop.f32.mrb[0].mxu0
        %774 = vmatprep.mubr.bf16.mxu0 0
        %775 = vmatmul.mubr.bf16.gmra.mrb[0].mxu0 %v698
        %v776 = vpop.f32.mrb[0].mxu0
        %v777 = vadd.f32 %v654, %v776
        %v778 = vpop.f32.mrb[0].mxu0
        %v779 = vpop.f32.mrb[0].mxu0
        %v780 = vadd.f32 %v655, %v779
        %v781 = vpop.f32.mrb[0].mxu0
        %782 = vmatprep.mubr.bf16.mxu0 0
        %783 = vmatmul.mubr.bf16.gmra.mrb[0].mxu0 %v699
        %v784 = vpop.f32.mrb[0].mxu0
        %v785 = vadd.f32 %v656, %v784
        %v786 = vpop.f32.mrb[0].mxu0
        %v787 = vpop.f32.mrb[0].mxu0
        %v788 = vadd.f32 %v657, %v787
        %v789 = vpop.f32.mrb[0].mxu0
        %790 = vmatprep.mubr.bf16.mxu0 0
        %791 = vmatmul.mubr.bf16.gmra.mrb[0].mxu0 %v700
        %v792 = vpop.f32.mrb[0].mxu0
        %v793 = vadd.f32 %v658, %v792
        %v794 = vpop.f32.mrb[0].mxu0
        %v795 = vpop.f32.mrb[0].mxu0
        %v796 = vadd.f32 %v659, %v795
        %v797 = vpop.f32.mrb[0].mxu0
        %798 = vmatprep.mubr.bf16.mxu0 0
        %799 = vmatmul.mubr.bf16.gmra.mrb[0].mxu0 %v701
        %v800 = vpop.f32.mrb[0].mxu0
        %v801 = vadd.f32 %v660, %v800
        %v802 = vpop.f32.mrb[0].mxu0
        %v803 = vpop.f32.mrb[0].mxu0
        %v804 = vadd.f32 %v661, %v803
        %v805 = vpop.f32.mrb[0].mxu0
        %806 = vdwg.mxu0
        %v807 = vpack.c.bf16 %v748, %v745
        %v808 = vpack.c.bf16 %v756, %v753
        %v809 = vpack.c.bf16 %v764, %v761
        %v810 = vpack.c.bf16 %v772, %v769
        %v811 = vpack.c.bf16 %v780, %v777
        %v812 = vpack.c.bf16 %v788, %v785
        %v813 = vpack.c.bf16 %v796, %v793
        %v814 = vpack.c.bf16 %v804, %v801
        %v815 = vld [vmem:[%s492] sm:$0xff]
        %v816 = vld [vmem:[%s492 + $0x8] sm:$0xff]
        %v817 = vld [vmem:[%s492 + $0x10] sm:$0xff]
        %v818 = vld [vmem:[%s492 + $0x18] sm:$0xff]
        %v819 = vld [vmem:[%s492 + $0x20] sm:$0xff]
        %v820 = vld [vmem:[%s492 + $0x28] sm:$0xff]
        %v821 = vld [vmem:[%s492 + $0x30] sm:$0xff]
        %v822 = vld [vmem:[%s492 + $0x38] sm:$0xff]
        %v823 = vld [vmem:[%s492 + $0x40] sm:$0xff]
        %v824 = vld [vmem:[%s492 + $0x48] sm:$0xff]
        %v825 = vld [vmem:[%s492 + $0x50] sm:$0xff]
        %v826 = vld [vmem:[%s492 + $0x58] sm:$0xff]
        %v827 = vld [vmem:[%s492 + $0x60] sm:$0xff]
        %v828 = vld [vmem:[%s492 + $0x68] sm:$0xff]
        %v829 = vld [vmem:[%s492 + $0x70] sm:$0xff]
        %v830 = vld [vmem:[%s492 + $0x78] sm:$0xff]
        %s831 = smul.u32 %s32, 2
        %s832 = scalar_lea.vmem %s5, %s831
        %v833 = vld [vmem:[%s832] sm:$0x3]
        %v835 = vlaneseq
        %v836 = vshrl.u32 %v835, 7
        %v837 = vsub.s32 0, %v836
        %v838 = vrot.slane %v833, %v837
        %v839 = vlaneseq
        %v840 = vshrl.u32 %v839, 7
        %v841 = vsub.s32 1, %v840
        %v842 = vrot.slane %v833, %v841
        %v861 = vunpack.c.l.b16 %v815
        %v862 = vunpack.c.h.b16 %v815
        %v863 = vunpack.c.l.b16 %v816
        %v864 = vunpack.c.h.b16 %v816
        %v865 = vunpack.c.l.b16 %v817
        %v866 = vunpack.c.h.b16 %v817
        %v867 = vunpack.c.l.b16 %v818
        %v868 = vunpack.c.h.b16 %v818
        %v869 = vunpack.c.l.b16 %v819
        %v870 = vunpack.c.h.b16 %v819
        %v871 = vunpack.c.l.b16 %v820
        %v872 = vunpack.c.h.b16 %v820
        %v873 = vunpack.c.l.b16 %v821
        %v874 = vunpack.c.h.b16 %v821
        %v875 = vunpack.c.l.b16 %v822
        %v876 = vunpack.c.h.b16 %v822
        %v877 = vunpack.c.l.b16 %v823
        %v878 = vunpack.c.h.b16 %v823
        %v879 = vunpack.c.l.b16 %v824
        %v880 = vunpack.c.h.b16 %v824
        %v881 = vunpack.c.l.b16 %v825
        %v882 = vunpack.c.h.b16 %v825
        %v883 = vunpack.c.l.b16 %v826
        %v884 = vunpack.c.h.b16 %v826
        %v885 = vunpack.c.l.b16 %v827
        %v886 = vunpack.c.h.b16 %v827
        %v887 = vunpack.c.l.b16 %v828
        %v888 = vunpack.c.h.b16 %v828
        %v889 = vunpack.c.l.b16 %v829
        %v890 = vunpack.c.h.b16 %v829
        %v891 = vunpack.c.l.b16 %v830
        %v892 = vunpack.c.h.b16 %v830
        %v893 = vpack.c.b16 %v863, %v861
        %v894 = vpack.c.b16 %v864, %v862
        %v895 = vpack.c.b16 %v867, %v865
        %v896 = vpack.c.b16 %v868, %v866
        %v897 = vpack.c.b16 %v871, %v869
        %v898 = vpack.c.b16 %v872, %v870
        %v899 = vpack.c.b16 %v875, %v873
        %v900 = vpack.c.b16 %v876, %v874
        %v901 = vpack.c.b16 %v879, %v877
        %v902 = vpack.c.b16 %v880, %v878
        %v903 = vpack.c.b16 %v883, %v881
        %v904 = vpack.c.b16 %v884, %v882
        %v905 = vpack.c.b16 %v887, %v885
        %v906 = vpack.c.b16 %v888, %v886
        %v907 = vpack.c.b16 %v891, %v889
        %v908 = vpack.c.b16 %v892, %v890
        %925 = vmatprep.subr.bf16.mxu0 %v894
        %926 = vmatpush1.bf16.msra.mxu0 %v893
        %927 = vmatprep.subr.bf16.mxu0 %v896
        %928 = vmatpush1.bf16.msra.mxu0 %v895
        %929 = vmatprep.subr.bf16.mxu0 %v898
        %930 = vmatpush1.bf16.msra.mxu0 %v897
        %931 = vmatprep.subr.bf16.mxu0 %v900
        %932 = vmatpush1.bf16.msra.mxu0 %v899
        %933 = vmatprep.subr.bf16.mxu0 %v902
        %934 = vmatpush1.bf16.msra.mxu0 %v901
        %935 = vmatprep.subr.bf16.mxu0 %v904
        %936 = vmatpush1.bf16.msra.mxu0 %v903
        %937 = vmatprep.subr.bf16.mxu0 %v906
        %938 = vmatpush1.bf16.msra.mxu0 %v905
        %939 = vmatprep.subr.bf16.mxu0 %v908
        %940 = vmatpush1.bf16.msra.mxu0 %v907
        %941 = vmatprep.subr.bf16.mxu0 0
        %942 = vmatpush1.bf16.msra.mxu0 0
        %943 = vmatprep.subr.bf16.mxu0 0
        %944 = vmatpush1.bf16.msra.mxu0 0
        %945 = vmatprep.subr.bf16.mxu0 0
        %946 = vmatpush1.bf16.msra.mxu0 0
        %947 = vmatprep.subr.bf16.mxu0 0
        %948 = vmatpush1.bf16.msra.mxu0 0
        %949 = vmatprep.subr.bf16.mxu0 0
        %950 = vmatpush1.bf16.msra.mxu0 0
        %951 = vmatprep.subr.bf16.mxu0 0
        %952 = vmatpush1.bf16.msra.mxu0 0
        %953 = vmatprep.subr.bf16.mxu0 0
        %954 = vmatpush1.bf16.msra.mxu0 0
        %955 = vmatprep.subr.bf16.mxu0 0
        %956 = vmatpush1.bf16.msra.mxu0 0
        %957 = vmatprep.mubr.bf16.mxu0 0
        %958 = vmatmul.mubr.bf16.gmra.mrb[0].mxu0 %v807
        %v959 = vpop.f32.mrb[0].mxu0
        %v960 = vadd.f32 %v838, %v959
        %v961 = vpop.f32.mrb[0].mxu0
        %v962 = vadd.f32 %v842, %v961
        %v963 = vpop.f32.mrb[0].mxu0
        %v964 = vadd.f32 %v838, %v963
        %v965 = vpop.f32.mrb[0].mxu0
        %v966 = vadd.f32 %v842, %v965
        %967 = vmatprep.mubr.bf16.mxu0 0
        %968 = vmatmul.mubr.bf16.gmra.mrb[0].mxu0 %v808
        %v969 = vpop.f32.mrb[0].mxu0
        %v970 = vadd.f32 %v838, %v969
        %v971 = vpop.f32.mrb[0].mxu0
        %v972 = vadd.f32 %v842, %v971
        %v973 = vpop.f32.mrb[0].mxu0
        %v974 = vadd.f32 %v838, %v973
        %v975 = vpop.f32.mrb[0].mxu0
        %v976 = vadd.f32 %v842, %v975
        %977 = vmatprep.mubr.bf16.mxu0 0
        %978 = vmatmul.mubr.bf16.gmra.mrb[0].mxu0 %v809
        %v979 = vpop.f32.mrb[0].mxu0
        %v980 = vadd.f32 %v838, %v979
        %v981 = vpop.f32.mrb[0].mxu0
        %v982 = vadd.f32 %v842, %v981
        %v983 = vpop.f32.mrb[0].mxu0
        %v984 = vadd.f32 %v838, %v983
        %v985 = vpop.f32.mrb[0].mxu0
        %v986 = vadd.f32 %v842, %v985
        %987 = vmatprep.mubr.bf16.mxu0 0
        %988 = vmatmul.mubr.bf16.gmra.mrb[0].mxu0 %v810
        %v989 = vpop.f32.mrb[0].mxu0
        %v990 = vadd.f32 %v838, %v989
        %v991 = vpop.f32.mrb[0].mxu0
        %v992 = vadd.f32 %v842, %v991
        %v993 = vpop.f32.mrb[0].mxu0
        %v994 = vadd.f32 %v838, %v993
        %v995 = vpop.f32.mrb[0].mxu0
        %v996 = vadd.f32 %v842, %v995
        %997 = vmatprep.mubr.bf16.mxu0 0
        %998 = vmatmul.mubr.bf16.gmra.mrb[0].mxu0 %v811
        %v999 = vpop.f32.mrb[0].mxu0
        %v1000 = vadd.f32 %v838, %v999
        %v1001 = vpop.f32.mrb[0].mxu0
        %v1002 = vadd.f32 %v842, %v1001
        %v1003 = vpop.f32.mrb[0].mxu0
        %v1004 = vadd.f32 %v838, %v1003
        %v1005 = vpop.f32.mrb[0].mxu0
        %v1006 = vadd.f32 %v842, %v1005
        %1007 = vmatprep.mubr.bf16.mxu0 0
        %1008 = vmatmul.mubr.bf16.gmra.mrb[0].mxu0 %v812
        %v1009 = vpop.f32.mrb[0].mxu0
        %v1010 = vadd.f32 %v838, %v1009
        %v1011 = vpop.f32.mrb[0].mxu0
        %v1012 = vadd.f32 %v842, %v1011
        %v1013 = vpop.f32.mrb[0].mxu0
        %v1014 = vadd.f32 %v838, %v1013
        %v1015 = vpop.f32.mrb[0].mxu0
        %v1016 = vadd.f32 %v842, %v1015
        %1017 = vmatprep.mubr.bf16.mxu0 0
        %1018 = vmatmul.mubr.bf16.gmra.mrb[0].mxu0 %v813
        %v1019 = vpop.f32.mrb[0].mxu0
        %v1020 = vadd.f32 %v838, %v1019
        %v1021 = vpop.f32.mrb[0].mxu0
        %v1022 = vadd.f32 %v842, %v1021
        %v1023 = vpop.f32.mrb[0].mxu0
        %v1024 = vadd.f32 %v838, %v1023
        %v1025 = vpop.f32.mrb[0].mxu0
        %v1026 = vadd.f32 %v842, %v1025
        %1027 = vmatprep.mubr.bf16.mxu0 0
        %1028 = vmatmul.mubr.bf16.gmra.mrb[0].mxu0 %v814
        %v1029 = vpop.f32.mrb[0].mxu0
        %v1030 = vadd.f32 %v838, %v1029
        %v1031 = vpop.f32.mrb[0].mxu0
        %v1032 = vadd.f32 %v842, %v1031
        %v1033 = vpop.f32.mrb[0].mxu0
        %v1034 = vadd.f32 %v838, %v1033
        %v1035 = vpop.f32.mrb[0].mxu0
        %v1036 = vadd.f32 %v842, %v1035
        %1037 = vdwg.mxu0
        %v1038 = vmax.f32 %v960, 0.0
        %v1039 = vmax.f32 %v962, 0.0
        %v1040 = vmax.f32 %v964, 0.0
        %v1041 = vmax.f32 %v966, 0.0
        %v1042 = vmax.f32 %v970, 0.0
        %v1043 = vmax.f32 %v972, 0.0
        %v1044 = vmax.f32 %v974, 0.0
        %v1045 = vmax.f32 %v976, 0.0
        %v1046 = vmax.f32 %v980, 0.0
        %v1047 = vmax.f32 %v982, 0.0
        %v1048 = vmax.f32 %v984, 0.0
        %v1049 = vmax.f32 %v986, 0.0
        %v1050 = vmax.f32 %v990, 0.0
        %v1051 = vmax.f32 %v992, 0.0
        %v1052 = vmax.f32 %v994, 0.0
        %v1053 = vmax.f32 %v996, 0.0
        %v1054 = vmax.f32 %v1000, 0.0
        %v1055 = vmax.f32 %v1002, 0.0
        %v1056 = vmax.f32 %v1004, 0.0
        %v1057 = vmax.f32 %v1006, 0.0
        %v1058 = vmax.f32 %v1010, 0.0
        %v1059 = vmax.f32 %v1012, 0.0
        %v1060 = vmax.f32 %v1014, 0.0
        %v1061 = vmax.f32 %v1016, 0.0
        %v1062 = vmax.f32 %v1020, 0.0
        %v1063 = vmax.f32 %v1022, 0.0
        %v1064 = vmax.f32 %v1024, 0.0
        %v1065 = vmax.f32 %v1026, 0.0
        %v1066 = vmax.f32 %v1030, 0.0
        %v1067 = vmax.f32 %v1032, 0.0
        %v1068 = vmax.f32 %v1034, 0.0
        %v1069 = vmax.f32 %v1036, 0.0
        %v1070 = vpack.c.bf16 %v1040, %v1038
        %v1071 = vpack.c.bf16 %v1041, %v1039
        %v1072 = vpack.c.bf16 %v1044, %v1042
        %v1073 = vpack.c.bf16 %v1045, %v1043
        %v1074 = vpack.c.bf16 %v1048, %v1046
        %v1075 = vpack.c.bf16 %v1049, %v1047
        %v1076 = vpack.c.bf16 %v1052, %v1050
        %v1077 = vpack.c.bf16 %v1053, %v1051
        %v1078 = vpack.c.bf16 %v1056, %v1054
        %v1079 = vpack.c.bf16 %v1057, %v1055
        %v1080 = vpack.c.bf16 %v1060, %v1058
        %v1081 = vpack.c.bf16 %v1061, %v1059
        %v1082 = vpack.c.bf16 %v1064, %v1062
        %v1083 = vpack.c.bf16 %v1065, %v1063
        %v1084 = vpack.c.bf16 %v1068, %v1066
        %v1085 = vpack.c.bf16 %v1069, %v1067
        %v1086 = vld [vmem:[%s501] sm:$0xf]
        %v1087 = vld [vmem:[%s501 + $0x4] sm:$0xf]
        %v1088 = vld [vmem:[%s501 + $0x8] sm:$0xf]
        %v1089 = vld [vmem:[%s501 + $0xc] sm:$0xf]
        %v1090 = vld [vmem:[%s501 + $0x10] sm:$0xf]
        %v1091 = vld [vmem:[%s501 + $0x14] sm:$0xf]
        %v1092 = vld [vmem:[%s501 + $0x18] sm:$0xf]
        %v1093 = vld [vmem:[%s501 + $0x1c] sm:$0xf]
        %v1094 = vld [vmem:[%s501 + $0x20] sm:$0xf]
        %v1095 = vld [vmem:[%s501 + $0x24] sm:$0xf]
        %v1096 = vld [vmem:[%s501 + $0x28] sm:$0xf]
        %v1097 = vld [vmem:[%s501 + $0x2c] sm:$0xf]
        %v1098 = vld [vmem:[%s501 + $0x30] sm:$0xf]
        %v1099 = vld [vmem:[%s501 + $0x34] sm:$0xf]
        %v1100 = vld [vmem:[%s501 + $0x38] sm:$0xf]
        %v1101 = vld [vmem:[%s501 + $0x3c] sm:$0xf]
        %v1102 = vld [vmem:[%s501 + $0x40] sm:$0xf]
        %v1103 = vld [vmem:[%s501 + $0x44] sm:$0xf]
        %v1104 = vld [vmem:[%s501 + $0x48] sm:$0xf]
        %v1105 = vld [vmem:[%s501 + $0x4c] sm:$0xf]
        %v1106 = vld [vmem:[%s501 + $0x50] sm:$0xf]
        %v1107 = vld [vmem:[%s501 + $0x54] sm:$0xf]
        %v1108 = vld [vmem:[%s501 + $0x58] sm:$0xf]
        %v1109 = vld [vmem:[%s501 + $0x5c] sm:$0xf]
        %v1110 = vld [vmem:[%s501 + $0x60] sm:$0xf]
        %v1111 = vld [vmem:[%s501 + $0x64] sm:$0xf]
        %v1112 = vld [vmem:[%s501 + $0x68] sm:$0xf]
        %v1113 = vld [vmem:[%s501 + $0x6c] sm:$0xf]
        %v1114 = vld [vmem:[%s501 + $0x70] sm:$0xf]
        %v1115 = vld [vmem:[%s501 + $0x74] sm:$0xf]
        %v1116 = vld [vmem:[%s501 + $0x78] sm:$0xf]
        %v1117 = vld [vmem:[%s501 + $0x7c] sm:$0xf]
        %s1118 = scalar_lea.vmem %s6, %s32
        %v1119 = vld [vmem:[%s1118] sm:$0x1]
        %v1121 = vlaneseq
        %v1122 = vshrl.u32 %v1121, 7
        %v1123 = vsub.s32 0, %v1122
        %v1124 = vrot.slane %v1119, %v1123
        %v1158 = vunpack.c.l.b16 %v1086
        %v1159 = vunpack.c.l.b16 %v1087
        %v1160 = vunpack.c.l.b16 %v1088
        %v1161 = vunpack.c.l.b16 %v1089
        %v1162 = vunpack.c.l.b16 %v1090
        %v1163 = vunpack.c.l.b16 %v1091
        %v1164 = vunpack.c.l.b16 %v1092
        %v1165 = vunpack.c.l.b16 %v1093
        %v1166 = vunpack.c.l.b16 %v1094
        %v1167 = vunpack.c.l.b16 %v1095
        %v1168 = vunpack.c.l.b16 %v1096
        %v1169 = vunpack.c.l.b16 %v1097
        %v1170 = vunpack.c.l.b16 %v1098
        %v1171 = vunpack.c.l.b16 %v1099
        %v1172 = vunpack.c.l.b16 %v1100
        %v1173 = vunpack.c.l.b16 %v1101
        %v1174 = vunpack.c.l.b16 %v1102
        %v1175 = vunpack.c.l.b16 %v1103
        %v1176 = vunpack.c.l.b16 %v1104
        %v1177 = vunpack.c.l.b16 %v1105
        %v1178 = vunpack.c.l.b16 %v1106
        %v1179 = vunpack.c.l.b16 %v1107
        %v1180 = vunpack.c.l.b16 %v1108
        %v1181 = vunpack.c.l.b16 %v1109
        %v1182 = vunpack.c.l.b16 %v1110
        %v1183 = vunpack.c.l.b16 %v1111
        %v1184 = vunpack.c.l.b16 %v1112
        %v1185 = vunpack.c.l.b16 %v1113
        %v1186 = vunpack.c.l.b16 %v1114
        %v1187 = vunpack.c.l.b16 %v1115
        %v1188 = vunpack.c.l.b16 %v1116
        %v1189 = vunpack.c.l.b16 %v1117
        %v1190 = vpack.c.b16 %v1159, %v1158
        %v1191 = vpack.c.b16 %v1161, %v1160
        %v1192 = vpack.c.b16 %v1163, %v1162
        %v1193 = vpack.c.b16 %v1165, %v1164
        %v1194 = vpack.c.b16 %v1167, %v1166
        %v1195 = vpack.c.b16 %v1169, %v1168
        %v1196 = vpack.c.b16 %v1171, %v1170
        %v1197 = vpack.c.b16 %v1173, %v1172
        %v1198 = vpack.c.b16 %v1175, %v1174
        %v1199 = vpack.c.b16 %v1177, %v1176
        %v1200 = vpack.c.b16 %v1179, %v1178
        %v1201 = vpack.c.b16 %v1181, %v1180
        %v1202 = vpack.c.b16 %v1183, %v1182
        %v1203 = vpack.c.b16 %v1185, %v1184
        %v1204 = vpack.c.b16 %v1187, %v1186
        %v1205 = vpack.c.b16 %v1189, %v1188
        %1222 = vmatprep.subr.bf16.mxu0 0
        %1223 = vmatpush1.bf16.msra.mxu0 %v1190
        %1224 = vmatprep.subr.bf16.mxu0 0
        %1225 = vmatpush1.bf16.msra.mxu0 %v1191
        %1226 = vmatprep.subr.bf16.mxu0 0
        %1227 = vmatpush1.bf16.msra.mxu0 %v1192
        %1228 = vmatprep.subr.bf16.mxu0 0
        %1229 = vmatpush1.bf16.msra.mxu0 %v1193
        %1230 = vmatprep.subr.bf16.mxu0 0
        %1231 = vmatpush1.bf16.msra.mxu0 %v1194
        %1232 = vmatprep.subr.bf16.mxu0 0
        %1233 = vmatpush1.bf16.msra.mxu0 %v1195
        %1234 = vmatprep.subr.bf16.mxu0 0
        %1235 = vmatpush1.bf16.msra.mxu0 %v1196
        %1236 = vmatprep.subr.bf16.mxu0 0
        %1237 = vmatpush1.bf16.msra.mxu0 %v1197
        %1238 = vmatprep.subr.bf16.mxu0 0
        %1239 = vmatpush1.bf16.msra.mxu0 %v1198
        %1240 = vmatprep.subr.bf16.mxu0 0
        %1241 = vmatpush1.bf16.msra.mxu0 %v1199
        %1242 = vmatprep.subr.bf16.mxu0 0
        %1243 = vmatpush1.bf16.msra.mxu0 %v1200
        %1244 = vmatprep.subr.bf16.mxu0 0
        %1245 = vmatpush1.bf16.msra.mxu0 %v1201
        %1246 = vmatprep.subr.bf16.mxu0 0
        %1247 = vmatpush1.bf16.msra.mxu0 %v1202
        %1248 = vmatprep.subr.bf16.mxu0 0
        %1249 = vmatpush1.bf16.msra.mxu0 %v1203
        %1250 = vmatprep.subr.bf16.mxu0 0
        %1251 = vmatpush1.bf16.msra.mxu0 %v1204
        %1252 = vmatprep.subr.bf16.mxu0 0
        %1253 = vmatpush1.bf16.msra.mxu0 %v1205
        %1254 = vmatprep.mubr.bf16.mxu0 %v1071
        %1255 = vmatmul.mubr.bf16.gmra.mrb[0].mxu0 %v1070
        %v1256 = vpop.f32.mrb[0].mxu0
        %v1257 = vadd.f32 %v1124, %v1256
        %v1258 = vpop.f32.mrb[0].mxu0
        %v1259 = vpop.f32.mrb[0].mxu0
        %v1260 = vadd.f32 %v1124, %v1259
        %v1261 = vpop.f32.mrb[0].mxu0
        %1262 = vmatprep.mubr.bf16.mxu0 %v1073
        %1263 = vmatmul.mubr.bf16.gmra.mrb[0].mxu0 %v1072
        %v1264 = vpop.f32.mrb[0].mxu0
        %v1265 = vadd.f32 %v1124, %v1264
        %v1266 = vpop.f32.mrb[0].mxu0
        %v1267 = vpop.f32.mrb[0].mxu0
        %v1268 = vadd.f32 %v1124, %v1267
        %v1269 = vpop.f32.mrb[0].mxu0
        %1270 = vmatprep.mubr.bf16.mxu0 %v1075
        %1271 = vmatmul.mubr.bf16.gmra.mrb[0].mxu0 %v1074
        %v1272 = vpop.f32.mrb[0].mxu0
        %v1273 = vadd.f32 %v1124, %v1272
        %v1274 = vpop.f32.mrb[0].mxu0
        %v1275 = vpop.f32.mrb[0].mxu0
        %v1276 = vadd.f32 %v1124, %v1275
        %v1277 = vpop.f32.mrb[0].mxu0
        %1278 = vmatprep.mubr.bf16.mxu0 %v1077
        %1279 = vmatmul.mubr.bf16.gmra.mrb[0].mxu0 %v1076
        %v1280 = vpop.f32.mrb[0].mxu0
        %v1281 = vadd.f32 %v1124, %v1280
        %v1282 = vpop.f32.mrb[0].mxu0
        %v1283 = vpop.f32.mrb[0].mxu0
        %v1284 = vadd.f32 %v1124, %v1283
        %v1285 = vpop.f32.mrb[0].mxu0
        %1286 = vmatprep.mubr.bf16.mxu0 %v1079
        %1287 = vmatmul.mubr.bf16.gmra.mrb[0].mxu0 %v1078
        %v1288 = vpop.f32.mrb[0].mxu0
        %v1289 = vadd.f32 %v1124, %v1288
        %v1290 = vpop.f32.mrb[0].mxu0
        %v1291 = vpop.f32.mrb[0].mxu0
        %v1292 = vadd.f32 %v1124, %v1291
        %v1293 = vpop.f32.mrb[0].mxu0
        %1294 = vmatprep.mubr.bf16.mxu0 %v1081
        %1295 = vmatmul.mubr.bf16.gmra.mrb[0].mxu0 %v1080
        %v1296 = vpop.f32.mrb[0].mxu0
        %v1297 = vadd.f32 %v1124, %v1296
        %v1298 = vpop.f32.mrb[0].mxu0
        %v1299 = vpop.f32.mrb[0].mxu0
        %v1300 = vadd.f32 %v1124, %v1299
        %v1301 = vpop.f32.mrb[0].mxu0
        %1302 = vmatprep.mubr.bf16.mxu0 %v1083
        %1303 = vmatmul.mubr.bf16.gmra.mrb[0].mxu0 %v1082
        %v1304 = vpop.f32.mrb[0].mxu0
        %v1305 = vadd.f32 %v1124, %v1304
        %v1306 = vpop.f32.mrb[0].mxu0
        %v1307 = vpop.f32.mrb[0].mxu0
        %v1308 = vadd.f32 %v1124, %v1307
        %v1309 = vpop.f32.mrb[0].mxu0
        %1310 = vmatprep.mubr.bf16.mxu0 %v1085
        %1311 = vmatmul.mubr.bf16.gmra.mrb[0].mxu0 %v1084
        %v1312 = vpop.f32.mrb[0].mxu0
        %v1313 = vadd.f32 %v1124, %v1312
        %v1314 = vpop.f32.mrb[0].mxu0
        %v1315 = vpop.f32.mrb[0].mxu0
        %v1316 = vadd.f32 %v1124, %v1315
        %v1317 = vpop.f32.mrb[0].mxu0
        %1318 = vdwg.mxu0
        %v1319 = vld [vmem:[%s9] sm:$0xff]
        %v1320 = vld [vmem:[%s9 + $0x8] sm:$0xff]
        %v1321 = vld [vmem:[%s9 + $0x10] sm:$0xff]
        %v1322 = vld [vmem:[%s9 + $0x18] sm:$0xff]
        %v1323 = vld [vmem:[%s9 + $0x20] sm:$0xff]
        %v1324 = vld [vmem:[%s9 + $0x28] sm:$0xff]
        %v1325 = vld [vmem:[%s9 + $0x30] sm:$0xff]
        %v1326 = vld [vmem:[%s9 + $0x38] sm:$0xff]
        %v1327 = vld [vmem:[%s9 + $0x40] sm:$0xff]
        %v1328 = vld [vmem:[%s9 + $0x48] sm:$0xff]
        %v1329 = vld [vmem:[%s9 + $0x50] sm:$0xff]
        %v1330 = vld [vmem:[%s9 + $0x58] sm:$0xff]
        %v1331 = vld [vmem:[%s9 + $0x60] sm:$0xff]
        %v1332 = vld [vmem:[%s9 + $0x68] sm:$0xff]
        %v1333 = vld [vmem:[%s9 + $0x70] sm:$0xff]
        %v1334 = vld [vmem:[%s9 + $0x78] sm:$0xff]
        %1336 = vset.pattern.permute.xlu0 0
        %1337 = vperm.xlu0 %1336, %v1319
        %v1338 = vpop.permute.xlu0 %1337
        %1341 = vset.pattern.permute.xlu0 0
        %1342 = vperm.xlu0 %1341, %v1320
        %v1343 = vpop.permute.xlu0 %1342
        %1346 = vset.pattern.permute.xlu0 0
        %1347 = vperm.xlu0 %1346, %v1321
        %v1348 = vpop.permute.xlu0 %1347
        %1351 = vset.pattern.permute.xlu0 0
        %1352 = vperm.xlu0 %1351, %v1322
        %v1353 = vpop.permute.xlu0 %1352
        %1356 = vset.pattern.permute.xlu0 0
        %1357 = vperm.xlu0 %1356, %v1323
        %v1358 = vpop.permute.xlu0 %1357
        %1361 = vset.pattern.permute.xlu0 0
        %1362 = vperm.xlu0 %1361, %v1324
        %v1363 = vpop.permute.xlu0 %1362
        %1366 = vset.pattern.permute.xlu0 0
        %1367 = vperm.xlu0 %1366, %v1325
        %v1368 = vpop.permute.xlu0 %1367
        %1371 = vset.pattern.permute.xlu0 0
        %1372 = vperm.xlu0 %1371, %v1326
        %v1373 = vpop.permute.xlu0 %1372
        %1376 = vset.pattern.permute.xlu0 0
        %1377 = vperm.xlu0 %1376, %v1327
        %v1378 = vpop.permute.xlu0 %1377
        %1381 = vset.pattern.permute.xlu0 0
        %1382 = vperm.xlu0 %1381, %v1328
        %v1383 = vpop.permute.xlu0 %1382
        %1386 = vset.pattern.permute.xlu0 0
        %1387 = vperm.xlu0 %1386, %v1329
        %v1388 = vpop.permute.xlu0 %1387
        %1391 = vset.pattern.permute.xlu0 0
        %1392 = vperm.xlu0 %1391, %v1330
        %v1393 = vpop.permute.xlu0 %1392
        %1396 = vset.pattern.permute.xlu0 0
        %1397 = vperm.xlu0 %1396, %v1331
        %v1398 = vpop.permute.xlu0 %1397
        %1401 = vset.pattern.permute.xlu0 0
        %1402 = vperm.xlu0 %1401, %v1332
        %v1403 = vpop.permute.xlu0 %1402
        %1406 = vset.pattern.permute.xlu0 0
        %1407 = vperm.xlu0 %1406, %v1333
        %v1408 = vpop.permute.xlu0 %1407
        %1411 = vset.pattern.permute.xlu0 0
        %1412 = vperm.xlu0 %1411, %v1334
        %v1413 = vpop.permute.xlu0 %1412
        %v1415 = vmul.f32 %v1257, %v1338
        %v1416 = vmul.f32 %v1260, %v1343
        %v1417 = vmul.f32 %v1265, %v1348
        %v1418 = vmul.f32 %v1268, %v1353
        %v1419 = vmul.f32 %v1273, %v1358
        %v1420 = vmul.f32 %v1276, %v1363
        %v1421 = vmul.f32 %v1281, %v1368
        %v1422 = vmul.f32 %v1284, %v1373
        %v1423 = vmul.f32 %v1289, %v1378
        %v1424 = vmul.f32 %v1292, %v1383
        %v1425 = vmul.f32 %v1297, %v1388
        %v1426 = vmul.f32 %v1300, %v1393
        %v1427 = vmul.f32 %v1305, %v1398
        %v1428 = vmul.f32 %v1308, %v1403
        %v1429 = vmul.f32 %v1313, %v1408
        %v1430 = vmul.f32 %v1316, %v1413
        %v1431 = vadd.f32 %v1415, %v1416
        %v1432 = vadd.f32 %v1431, %v1417
        %v1433 = vadd.f32 %v1432, %v1418
        %v1434 = vadd.f32 %v1433, %v1419
        %v1435 = vadd.f32 %v1434, %v1420
        %v1436 = vadd.f32 %v1435, %v1421
        %v1437 = vadd.f32 %v1436, %v1422
        %v1438 = vadd.f32 %v1437, %v1423
        %v1439 = vadd.f32 %v1438, %v1424
        %v1440 = vadd.f32 %v1439, %v1425
        %v1441 = vadd.f32 %v1440, %v1426
        %v1442 = vadd.f32 %v1441, %v1427
        %v1443 = vadd.f32 %v1442, %v1428
        %v1444 = vadd.f32 %v1443, %v1429
        %v1445 = vadd.f32 %v1444, %v1430
        %v1446 = vrot.slane %v1445, 4
        %v1447 = vadd.f32 %v1445, %v1446
        %v1448 = vrot.slane %v1447, 2
        %v1449 = vadd.f32 %v1447, %v1448
        %v1450 = vrot.slane %v1449, 1
        %v1451 = vadd.f32 %v1449, %v1450
        %v1452 = vsub.f32 %v1257, %v1451
        %v1453 = vsub.f32 %v1260, %v1451
        %v1454 = vsub.f32 %v1265, %v1451
        %v1455 = vsub.f32 %v1268, %v1451
        %v1456 = vsub.f32 %v1273, %v1451
        %v1457 = vsub.f32 %v1276, %v1451
        %v1458 = vsub.f32 %v1281, %v1451
        %v1459 = vsub.f32 %v1284, %v1451
        %v1460 = vsub.f32 %v1289, %v1451
        %v1461 = vsub.f32 %v1292, %v1451
        %v1462 = vsub.f32 %v1297, %v1451
        %v1463 = vsub.f32 %v1300, %v1451
        %v1464 = vsub.f32 %v1305, %v1451
        %v1465 = vsub.f32 %v1308, %v1451
        %v1466 = vsub.f32 %v1313, %v1451
        %v1467 = vsub.f32 %v1316, %v1451
        %v1468 = vmul.f32 %v1452, %v1452
        %v1469 = vmul.f32 %v1453, %v1453
        %v1470 = vmul.f32 %v1454, %v1454
        %v1471 = vmul.f32 %v1455, %v1455
        %v1472 = vmul.f32 %v1456, %v1456
        %v1473 = vmul.f32 %v1457, %v1457
        %v1474 = vmul.f32 %v1458, %v1458
        %v1475 = vmul.f32 %v1459, %v1459
        %v1476 = vmul.f32 %v1460, %v1460
        %v1477 = vmul.f32 %v1461, %v1461
        %v1478 = vmul.f32 %v1462, %v1462
        %v1479 = vmul.f32 %v1463, %v1463
        %v1480 = vmul.f32 %v1464, %v1464
        %v1481 = vmul.f32 %v1465, %v1465
        %v1482 = vmul.f32 %v1466, %v1466
        %v1483 = vmul.f32 %v1467, %v1467
        %v1484 = vmul.f32 %v1468, %v1338
        %v1485 = vmul.f32 %v1469, %v1343
        %v1486 = vmul.f32 %v1470, %v1348
        %v1487 = vmul.f32 %v1471, %v1353
        %v1488 = vmul.f32 %v1472, %v1358
        %v1489 = vmul.f32 %v1473, %v1363
        %v1490 = vmul.f32 %v1474, %v1368
        %v1491 = vmul.f32 %v1475, %v1373
        %v1492 = vmul.f32 %v1476, %v1378
        %v1493 = vmul.f32 %v1477, %v1383
        %v1494 = vmul.f32 %v1478, %v1388
        %v1495 = vmul.f32 %v1479, %v1393
        %v1496 = vmul.f32 %v1480, %v1398
        %v1497 = vmul.f32 %v1481, %v1403
        %v1498 = vmul.f32 %v1482, %v1408
        %v1499 = vmul.f32 %v1483, %v1413
        %v1500 = vadd.f32 %v1484, %v1485
        %v1501 = vadd.f32 %v1500, %v1486
        %v1502 = vadd.f32 %v1501, %v1487
        %v1503 = vadd.f32 %v1502, %v1488
        %v1504 = vadd.f32 %v1503, %v1489
        %v1505 = vadd.f32 %v1504, %v1490
        %v1506 = vadd.f32 %v1505, %v1491
        %v1507 = vadd.f32 %v1506, %v1492
        %v1508 = vadd.f32 %v1507, %v1493
        %v1509 = vadd.f32 %v1508, %v1494
        %v1510 = vadd.f32 %v1509, %v1495
        %v1511 = vadd.f32 %v1510, %v1496
        %v1512 = vadd.f32 %v1511, %v1497
        %v1513 = vadd.f32 %v1512, %v1498
        %v1514 = vadd.f32 %v1513, %v1499
        %v1515 = vrot.slane %v1514, 4
        %v1516 = vadd.f32 %v1514, %v1515
        %v1517 = vrot.slane %v1516, 2
        %v1518 = vadd.f32 %v1516, %v1517
        %v1519 = vrot.slane %v1518, 1
        %v1520 = vadd.f32 %v1518, %v1519
        %s1521 = scalar_lea.vmem %s7, %s32
        %v1522 = vld [vmem:[%s1521] sm:$0x1]
        %v1524 = vlaneseq
        %v1525 = vshrl.u32 %v1524, 7
        %v1526 = vsub.s32 0, %v1525
        %v1527 = vrot.slane %v1522, %v1526
        %v1529 = vmul.f32 %v1527, %v1452
        %v1530 = vmul.f32 %v1527, %v1453
        %v1531 = vmul.f32 %v1527, %v1454
        %v1532 = vmul.f32 %v1527, %v1455
        %v1533 = vmul.f32 %v1527, %v1456
        %v1534 = vmul.f32 %v1527, %v1457
        %v1535 = vmul.f32 %v1527, %v1458
        %v1536 = vmul.f32 %v1527, %v1459
        %v1537 = vmul.f32 %v1527, %v1460
        %v1538 = vmul.f32 %v1527, %v1461
        %v1539 = vmul.f32 %v1527, %v1462
        %v1540 = vmul.f32 %v1527, %v1463
        %v1541 = vmul.f32 %v1527, %v1464
        %v1542 = vmul.f32 %v1527, %v1465
        %v1543 = vmul.f32 %v1527, %v1466
        %v1544 = vmul.f32 %v1527, %v1467
        %v1545 = vadd.f32 %v1520, 1e-05
        %v1546 = vrsqrt.pop %v1545
        %v1547 = vmul.f32 %v1529, %v1546
        %v1548 = vmul.f32 %v1530, %v1546
        %v1549 = vmul.f32 %v1531, %v1546
        %v1550 = vmul.f32 %v1532, %v1546
        %v1551 = vmul.f32 %v1533, %v1546
        %v1552 = vmul.f32 %v1534, %v1546
        %v1553 = vmul.f32 %v1535, %v1546
        %v1554 = vmul.f32 %v1536, %v1546
        %v1555 = vmul.f32 %v1537, %v1546
        %v1556 = vmul.f32 %v1538, %v1546
        %v1557 = vmul.f32 %v1539, %v1546
        %v1558 = vmul.f32 %v1540, %v1546
        %v1559 = vmul.f32 %v1541, %v1546
        %v1560 = vmul.f32 %v1542, %v1546
        %v1561 = vmul.f32 %v1543, %v1546
        %v1562 = vmul.f32 %v1544, %v1546
        %s1563 = scalar_lea.vmem %s8, %s32
        %v1564 = vld [vmem:[%s1563] sm:$0x1]
        %v1566 = vlaneseq
        %v1567 = vshrl.u32 %v1566, 7
        %v1568 = vsub.s32 0, %v1567
        %v1569 = vrot.slane %v1564, %v1568
        %v1571 = vadd.f32 %v1547, %v1569
        %v1572 = vadd.f32 %v1548, %v1569
        %v1573 = vadd.f32 %v1549, %v1569
        %v1574 = vadd.f32 %v1550, %v1569
        %v1575 = vadd.f32 %v1551, %v1569
        %v1576 = vadd.f32 %v1552, %v1569
        %v1577 = vadd.f32 %v1553, %v1569
        %v1578 = vadd.f32 %v1554, %v1569
        %v1579 = vadd.f32 %v1555, %v1569
        %v1580 = vadd.f32 %v1556, %v1569
        %v1581 = vadd.f32 %v1557, %v1569
        %v1582 = vadd.f32 %v1558, %v1569
        %v1583 = vadd.f32 %v1559, %v1569
        %v1584 = vadd.f32 %v1560, %v1569
        %v1585 = vadd.f32 %v1561, %v1569
        %v1586 = vadd.f32 %v1562, %v1569
        %p1587 = scmp.ne.s32.totalorder %s32, 1
        // Predicated region
        $region97: #{tpu_custom_call.1} parent=71 // pred_check
          %p1588 = pneg %p1587
        $region98: #{tpu_custom_call.1} parent=71 // pred_check_branch
          %1590 = sbr.rel (%p1588) target = $region100
        $region99: #{tpu_custom_call.1} parent=71 // pred_region
          %v1591 = vmax.f32 %v1571, 0.0
          %v1592 = vmax.f32 %v1572, 0.0
          %v1593 = vmax.f32 %v1573, 0.0
          %v1594 = vmax.f32 %v1574, 0.0
          %v1595 = vmax.f32 %v1575, 0.0
          %v1596 = vmax.f32 %v1576, 0.0
          %v1597 = vmax.f32 %v1577, 0.0
          %v1598 = vmax.f32 %v1578, 0.0
          %v1599 = vmax.f32 %v1579, 0.0
          %v1600 = vmax.f32 %v1580, 0.0
          %v1601 = vmax.f32 %v1581, 0.0
          %v1602 = vmax.f32 %v1582, 0.0
          %v1603 = vmax.f32 %v1583, 0.0
          %v1604 = vmax.f32 %v1584, 0.0
          %v1605 = vmax.f32 %v1585, 0.0
          %v1606 = vmax.f32 %v1586, 0.0
          %1607 = vst [vmem:[#allocation2] sm:$0xff] %v1591
          %1608 = vst [vmem:[#allocation2 + $0x8] sm:$0xff] %v1592
          %1609 = vst [vmem:[#allocation2 + $0x10] sm:$0xff] %v1593
          %1610 = vst [vmem:[#allocation2 + $0x18] sm:$0xff] %v1594
          %1611 = vst [vmem:[#allocation2 + $0x20] sm:$0xff] %v1595
          %1612 = vst [vmem:[#allocation2 + $0x28] sm:$0xff] %v1596
          %1613 = vst [vmem:[#allocation2 + $0x30] sm:$0xff] %v1597
          %1614 = vst [vmem:[#allocation2 + $0x38] sm:$0xff] %v1598
          %1615 = vst [vmem:[#allocation2 + $0x40] sm:$0xff] %v1599
          %1616 = vst [vmem:[#allocation2 + $0x48] sm:$0xff] %v1600
          %1617 = vst [vmem:[#allocation2 + $0x50] sm:$0xff] %v1601
          %1618 = vst [vmem:[#allocation2 + $0x58] sm:$0xff] %v1602
          %1619 = vst [vmem:[#allocation2 + $0x60] sm:$0xff] %v1603
          %1620 = vst [vmem:[#allocation2 + $0x68] sm:$0xff] %v1604
          %1621 = vst [vmem:[#allocation2 + $0x70] sm:$0xff] %v1605
          %1622 = vst [vmem:[#allocation2 + $0x78] sm:$0xff] %v1606
        $region100: #{tpu_custom_call.1} parent=71 // pred_fallthru
          _
        %p1623 = scmp.eq.s32.totalorder %s32, 1
        // Predicated region
        $region101: #{tpu_custom_call.1} parent=71 // pred_check
          %p1624 = pneg %p1623
        $region102: #{tpu_custom_call.1} parent=71 // pred_check_branch
          %1626 = sbr.rel (%p1624) target = $region104
        $region103: #{tpu_custom_call.1} parent=71 // pred_region
          %v1627 = vld [vmem:[%s10] sm:$0x1]
          %v1628 = vpack.c.bf16 %v1572, %v1571
          %v1629 = vpack.c.bf16 %v1574, %v1573
          %v1630 = vpack.c.bf16 %v1576, %v1575
          %v1631 = vpack.c.bf16 %v1578, %v1577
          %v1632 = vpack.c.bf16 %v1580, %v1579
          %v1633 = vpack.c.bf16 %v1582, %v1581
          %v1634 = vpack.c.bf16 %v1584, %v1583
          %v1635 = vpack.c.bf16 %v1586, %v1585
          %1636 = vmatprep.subr.bf16.mxu0 0
          %1637 = vmatpush1.bf16.msra.mxu0 %v1628
          %1638 = vmatprep.subr.bf16.mxu0 0
          %1639 = vmatpush1.bf16.msra.mxu0 %v1629
          %1640 = vmatprep.subr.bf16.mxu0 0
          %1641 = vmatpush1.bf16.msra.mxu0 %v1630
          %1642 = vmatprep.subr.bf16.mxu0 0
          %1643 = vmatpush1.bf16.msra.mxu0 %v1631
          %1644 = vmatprep.subr.bf16.mxu0 0
          %1645 = vmatpush1.bf16.msra.mxu0 %v1632
          %1646 = vmatprep.subr.bf16.mxu0 0
          %1647 = vmatpush1.bf16.msra.mxu0 %v1633
          %1648 = vmatprep.subr.bf16.mxu0 0
          %1649 = vmatpush1.bf16.msra.mxu0 %v1634
          %1650 = vmatprep.subr.bf16.mxu0 0
          %1651 = vmatpush1.bf16.msra.mxu0 %v1635
          %1652 = vmatprep.subr.bf16.mxu0 0
          %1653 = vmatpush1.bf16.msra.mxu0 0
          %1654 = vmatprep.subr.bf16.mxu0 0
          %1655 = vmatpush1.bf16.msra.mxu0 0
          %1656 = vmatprep.subr.bf16.mxu0 0
          %1657 = vmatpush1.bf16.msra.mxu0 0
          %1658 = vmatprep.subr.bf16.mxu0 0
          %1659 = vmatpush1.bf16.msra.mxu0 0
          %1660 = vmatprep.subr.bf16.mxu0 0
          %1661 = vmatpush1.bf16.msra.mxu0 0
          %1662 = vmatprep.subr.bf16.mxu0 0
          %1663 = vmatpush1.bf16.msra.mxu0 0
          %1664 = vmatprep.subr.bf16.mxu0 0
          %1665 = vmatpush1.bf16.msra.mxu0 0
          %1666 = vmatprep.subr.bf16.mxu0 0
          %1667 = vmatpush1.bf16.msra.mxu0 0
          %1668 = vmatprep.mubr.bf16.mxu0 0
          %1669 = vmatmul.mubr.bf16.gmra.mrb[0].mxu0 %v1627
          %v1670 = vpop.f32.mrb[0].mxu0
          %v1671 = vadd.f32 0.0, %v1670
          %v1672 = vpop.f32.mrb[0].mxu0
          %v1673 = vpop.f32.mrb[0].mxu0
          %v1674 = vpop.f32.mrb[0].mxu0
          %1675 = vdwg.mxu0
          %v1676 = vpack.c.bf16 %v1671, %v1671
          %v1677 = vld [vmem:[#allocation11] sm:$0xf]
          %v1678 = vld [vmem:[#allocation11 + $0x4] sm:$0xf]
          %v1679 = vld [vmem:[#allocation11 + $0x8] sm:$0xf]
          %v1680 = vld [vmem:[#allocation11 + $0xc] sm:$0xf]
          %v1681 = vld [vmem:[#allocation11 + $0x10] sm:$0xf]
          %v1682 = vld [vmem:[#allocation11 + $0x14] sm:$0xf]
          %v1683 = vld [vmem:[#allocation11 + $0x18] sm:$0xf]
          %v1684 = vld [vmem:[#allocation11 + $0x1c] sm:$0xf]
          %v1685 = vld [vmem:[#allocation11 + $0x20] sm:$0xf]
          %v1686 = vld [vmem:[#allocation11 + $0x24] sm:$0xf]
          %v1687 = vld [vmem:[#allocation11 + $0x28] sm:$0xf]
          %v1688 = vld [vmem:[#allocation11 + $0x2c] sm:$0xf]
          %v1689 = vld [vmem:[#allocation11 + $0x30] sm:$0xf]
          %v1690 = vld [vmem:[#allocation11 + $0x34] sm:$0xf]
          %v1691 = vld [vmem:[#allocation11 + $0x38] sm:$0xf]
          %v1692 = vld [vmem:[#allocation11 + $0x3c] sm:$0xf]
          %v1693 = vld [vmem:[%s12] sm:$0x1]
          %v1695 = vlaneseq
          %v1696 = vshrl.u32 %v1695, 7
          %v1697 = vsub.s32 0, %v1696
          %v1698 = vrot.slane %v1693, %v1697
          %v1716 = vunpack.c.l.b16 %v1677
          %v1717 = vunpack.c.l.b16 %v1678
          %v1718 = vunpack.c.l.b16 %v1679
          %v1719 = vunpack.c.l.b16 %v1680
          %v1720 = vunpack.c.l.b16 %v1681
          %v1721 = vunpack.c.l.b16 %v1682
          %v1722 = vunpack.c.l.b16 %v1683
          %v1723 = vunpack.c.l.b16 %v1684
          %v1724 = vunpack.c.l.b16 %v1685
          %v1725 = vunpack.c.l.b16 %v1686
          %v1726 = vunpack.c.l.b16 %v1687
          %v1727 = vunpack.c.l.b16 %v1688
          %v1728 = vunpack.c.l.b16 %v1689
          %v1729 = vunpack.c.l.b16 %v1690
          %v1730 = vunpack.c.l.b16 %v1691
          %v1731 = vunpack.c.l.b16 %v1692
          %v1732 = vpack.c.b16 %v1717, %v1716
          %v1733 = vpack.c.b16 %v1719, %v1718
          %v1734 = vpack.c.b16 %v1721, %v1720
          %v1735 = vpack.c.b16 %v1723, %v1722
          %v1736 = vpack.c.b16 %v1725, %v1724
          %v1737 = vpack.c.b16 %v1727, %v1726
          %v1738 = vpack.c.b16 %v1729, %v1728
          %v1739 = vpack.c.b16 %v1731, %v1730
          %1748 = vmatprep.subr.bf16.mxu0 0
          %1749 = vmatpush1.bf16.msra.mxu0 %v1732
          %1750 = vmatprep.subr.bf16.mxu0 0
          %1751 = vmatpush1.bf16.msra.mxu0 %v1733
          %1752 = vmatprep.subr.bf16.mxu0 0
          %1753 = vmatpush1.bf16.msra.mxu0 %v1734
          %1754 = vmatprep.subr.bf16.mxu0 0
          %1755 = vmatpush1.bf16.msra.mxu0 %v1735
          %1756 = vmatprep.subr.bf16.mxu0 0
          %1757 = vmatpush1.bf16.msra.mxu0 %v1736
          %1758 = vmatprep.subr.bf16.mxu0 0
          %1759 = vmatpush1.bf16.msra.mxu0 %v1737
          %1760 = vmatprep.subr.bf16.mxu0 0
          %1761 = vmatpush1.bf16.msra.mxu0 %v1738
          %1762 = vmatprep.subr.bf16.mxu0 0
          %1763 = vmatpush1.bf16.msra.mxu0 %v1739
          %1764 = vmatprep.subr.bf16.mxu0 0
          %1765 = vmatpush1.bf16.msra.mxu0 0
          %1766 = vmatprep.subr.bf16.mxu0 0
          %1767 = vmatpush1.bf16.msra.mxu0 0
          %1768 = vmatprep.subr.bf16.mxu0 0
          %1769 = vmatpush1.bf16.msra.mxu0 0
          %1770 = vmatprep.subr.bf16.mxu0 0
          %1771 = vmatpush1.bf16.msra.mxu0 0
          %1772 = vmatprep.subr.bf16.mxu0 0
          %1773 = vmatpush1.bf16.msra.mxu0 0
          %1774 = vmatprep.subr.bf16.mxu0 0
          %1775 = vmatpush1.bf16.msra.mxu0 0
          %1776 = vmatprep.subr.bf16.mxu0 0
          %1777 = vmatpush1.bf16.msra.mxu0 0
          %1778 = vmatprep.subr.bf16.mxu0 0
          %1779 = vmatpush1.bf16.msra.mxu0 0
          %1780 = vmatprep.mubr.bf16.mxu0 0
          %1781 = vmatmul.mubr.bf16.gmra.mrb[0].mxu0 %v1676
          %v1782 = vpop.f32.mrb[0].mxu0
          %v1783 = vadd.f32 %v1698, %v1782
          %v1784 = vpop.f32.mrb[0].mxu0
          %v1785 = vpop.f32.mrb[0].mxu0
          %v1786 = vpop.f32.mrb[0].mxu0
          %1787 = vdwg.mxu0
          %1788 = vst [vmem:[#allocation12] sm:$0x3] %v1783
        $region104: #{tpu_custom_call.1} parent=71 // pred_fallthru
          _
        // Predicated region
        $region105: #{tpu_custom_call.1} parent=71 // pred_check
          %p1789 = pneg %p333
        $region106: #{tpu_custom_call.1} parent=71 // pred_check_branch
          %1791 = sbr.rel (%p1789) target = $region108
        $region107: #{tpu_custom_call.1} parent=71 // pred_region
          %s1793 = ssub.s32 32, 32
          %1794 = vsyncadd [#allocation5], %s1793
          %s1796 = sshll.u32 [#allocation12], 4
          %s1797 = int_to_ptr.vmem [resolvable:$true] %s1796
          %1799 = dma.vmem_to_hbm [thread:$0]  %s1797, 32, %s13, [#allocation5]
        $region108: #{tpu_custom_call.1} parent=71 // pred_fallthru
          _
        // Predicated region
        $region109: #{tpu_custom_call.1} parent=71 // pred_check
          %p1800 = pneg %p333
        $region110: #{tpu_custom_call.1} parent=71 // pred_check_branch
          %1802 = sbr.rel (%p1800) target = $region112
        $region111: #{tpu_custom_call.1} parent=71 // pred_region
          %1803 = dma.done [#allocation5], 32
        $region112: #{tpu_custom_call.1} parent=71 // pred_fallthru
          _
      $region72: #{tpu_custom_call.1} parent=5 // pred_fallthru
        _
      %p1804 = scmp.le.s32.totalorder 2, %s27
      // Predicated region
      $region113: #{tpu_custom_call.1} parent=5 // pred_check
        %p1805 = pneg %p1804
      $region114: #{tpu_custom_call.1} parent=5 // pred_check_branch
        %1807 = sbr.rel (%p1805) target = $region116
      $region115: #{tpu_custom_call.1} parent=5 // pred_region
        %s1808 = ssub.s32 %s27, 2
      $region116: #{tpu_custom_call.1} parent=5 // pred_fallthru
        _
    $region6: #{tpu_custom_call.1} parent=1 // loop_footer
      %s31 = sadd.s32 1, %s27
    $region7: #{tpu_custom_call.1} parent=1 // loop_footer_branch
      %26 = sbr.rel target = $region3
    $region8: #{tpu_custom_call.1} parent=1 // loop_exit
      _
    %1809 = vsyncpa [#allocation4], 1
    %s1810 = scalar_lea.sflag [#allocation4], 1
    %1811 = vsyncpa %s1810, 1
    %1812 = vsyncpa [#allocation7], 1
    %s1813 = scalar_lea.sflag [#allocation7], 1
    %1814 = vsyncpa %s1813, 1
    %1815 = vsyncpa [#allocation10], 1
    %s1816 = scalar_lea.sflag [#allocation10], 1
    %1817 = vsyncpa %s1816, 1
    %1818 = vsyncpa [#allocation5], 1
    %s1819 = scalar_lea.sflag [#allocation5], 1
    %1820 = vsyncpa %s1819, 1

// kernel: tpu_custom_call.1
$region0: #{tpu_custom_call.1}
  #allocation0 [shape = 'u32[]', space=smem, size = 0x4, offset = 0x4, fixed_abs, tag = 'smem constant byte address 0x4 - core index']
  #allocation1 [shape = 'u32[144,128]{1,0:T(1,128)}', space=vmem, size = 0x12000, scoped, tag = 'internal scratch']
  #allocation2 [shape = 'f32[128,128]{1,0:T(8,128)}', space=vmem, size = 0x10000, scoped, tag = 'scratch operand']
  %s0 = inlined_call_operand.vmem [shape: f32[128,128], index: 0, kind: input, shape index: {}]
  %s1 = inlined_call_operand.hbm [shape: bf16[128,128], index: 1, kind: input, shape index: {}]
  %s2 = inlined_call_operand.hbm [shape: bf16[2,128,128], index: 2, kind: input, shape index: {}]
  %s3 = inlined_call_operand.hbm [shape: bf16[2,128,256], index: 3, kind: input, shape index: {}]
  %s4 = inlined_call_operand.hbm [shape: bf16[2,256,128], index: 4, kind: input, shape index: {}]
  %s5 = inlined_call_operand.vmem [shape: f32[2,1,256], index: 5, kind: input, shape index: {}]
  %s6 = inlined_call_operand.vmem [shape: f32[2,1,128], index: 6, kind: input, shape index: {}]
  %s7 = inlined_call_operand.vmem [shape: f32[2,1,128], index: 7, kind: input, shape index: {}]
  %s8 = inlined_call_operand.vmem [shape: f32[2,1,128], index: 8, kind: input, shape index: {}]
  %s9 = inlined_call_operand.vmem [shape: f32[128,1], index: 9, kind: input, shape index: {}]
  %s10 = inlined_call_operand.vmem [shape: bf16[2,128], index: 10, kind: input, shape index: {}]
  %s11 = inlined_call_operand.hbm [shape: bf16[128,128], index: 11, kind: input, shape index: {}]
  %s12 = inlined_call_operand.vmem [shape: f32[1,128], index: 12, kind: input, shape index: {}]
  %s13 = inlined_call_operand.hbm [shape: f32[2,128], index: 13, kind: output, shape index: {}]
  %s14 = sld [smem:[#allocation0]]
  $region117: #{tpu_custom_call.1} parent=0
    _
  %s16 = ssub.s32 1, %s14
  %s17 = scalar_select 0, %s16, %s14
  $region1: #{tpu_custom_call.1} parent=0
    #allocation3 [shape = 'u8[32768]{0}', space=vmem, size = 0x8000, scoped, tag = 'input window, operand 1, single buffered']
    #allocation4 [shape = 's32[2]{0}', space=sflag, size = 0x8, scoped, tag = 'scoped memory for tpu_custom_call.1']
    #allocation5 [shape = 's32[2]{0}', space=sflag, size = 0x8, scoped, tag = 'scoped memory for tpu_custom_call.1']
    #allocation6 [shape = 'u8[65536]{0}', space=vmem, size = 0x10000, scoped, tag = 'input window, operand 2']
    #allocation7 [shape = 's32[2]{0}', space=sflag, size = 0x8, scoped, tag = 'scoped memory for tpu_custom_call.1']
    #allocation8 [shape = 'u8[131072]{0}', space=vmem, size = 0x20000, scoped, tag = 'input window, operand 3']
    #allocation9 [shape = 'u8[131072]{0}', space=vmem, size = 0x20000, scoped, tag = 'input window, operand 4']
    #allocation10 [shape = 's32[2]{0}', space=sflag, size = 0x8, scoped, tag = 'scoped memory for tpu_custom_call.1']
    #allocation11 [shape = 'u8[32768]{0}', space=vmem, size = 0x8000, scoped, tag = 'input window, operand 11, single buffered']
    #allocation12 [shape = 'u8[1024]{0}', space=vmem, size = 0x400, scoped, tag = 'output window, operand 0, single buffered']
    %18 = vsyncpa [#allocation4], 0
    %19 = vsyncpa [#allocation7], 0
    %s20 = scalar_lea.sflag [#allocation7], 1
    %21 = vsyncpa %s20, 0
    %22 = vsyncpa [#allocation10], 0
    %s23 = scalar_lea.sflag [#allocation10], 1
    %24 = vsyncpa %s23, 0
    %25 = vsyncpa [#allocation5], 0
    loop: start=0, step=1, limit=4
    $region2: #{tpu_custom_call.1} parent=1 // loop_pre_header
      _
    $region3: #{tpu_custom_call.1} parent=1 // loop_header
      %s27 = sphi 0, %s31
      %p28 = scmp.ge.s32.totalorder %s27, 4
      %s35 = sphi 0, %s35
      %s37 = sphi 0, %s35
      %s38 = sphi 0, %s37
      %s52 = sphi 0, %s38
      %s56 = sphi 0, %s56
      %s58 = sphi 0, %s56
      %s59 = sphi 0, %s58
      %s73 = sphi 0, %s59
      %s79 = sphi 0, %s81
      %s82 = sphi 0, %s79
      %s83 = sphi 0, %s82
      %s99 = sphi 0, %s83
      %s105 = sphi 0, %s107
      %s108 = sphi 0, %s105
      %s109 = sphi 0, %s108
      %s125 = sphi 0, %s109
      %s131 = sphi 0, %s133
      %s134 = sphi 0, %s131
      %s135 = sphi 0, %s134
      %s151 = sphi 0, %s135
      %s155 = sphi 0, %s155
      %s157 = sphi 0, %s155
      %s158 = sphi 0, %s157
      %s172 = sphi 0, %s158
      %s176 = sphi 0, %s176
      %s178 = sphi 0, %s176
      %s179 = sphi 0, %s178
      %s193 = sphi 0, %s179
      %s197 = sphi 0, %s197
      %s199 = sphi 0, %s197
      %s200 = sphi 0, %s199
      %s214 = sphi 0, %s200
      %s218 = sphi 0, %s218
      %s220 = sphi 0, %s218
      %s221 = sphi 0, %s220
      %s235 = sphi 0, %s221
      %s239 = sphi 0, %s239
      %s241 = sphi 0, %s239
      %s242 = sphi 0, %s241
      %s256 = sphi 0, %s242
      %s260 = sphi 0, %s260
      %s262 = sphi 0, %s260
      %s263 = sphi 0, %s262
      %s277 = sphi 0, %s263
      %s281 = sphi 0, %s281
      %s283 = sphi 0, %s281
      %s284 = sphi 0, %s283
      %s298 = sphi 0, %s284
      %s302 = sphi 0, %s302
      %s304 = sphi 0, %s302
      %s305 = sphi 0, %s304
      %s319 = sphi 0, %s305
      %s323 = sphi 0, %s323
      %s325 = sphi 0, %s323
      %s326 = sphi 0, %s325
      %s340 = sphi 0, %s326
    $region4: #{tpu_custom_call.1} parent=1 // loop_header_branch
      %30 = sbr.rel (%p28) target = $region8
    $region5: #{tpu_custom_call.1} parent=1 // loop_body
      %s32 = ssub.s32 %s27, 1
      %s33 = ssub.s32 %s27, 2
      %s34 = sadd.s32 %s27, 1
      %s36 = sadd.s32 %s35, 1
      %p39 = scmp.eq.s32.totalorder %s27, 1
      %p40 = scmp.ne.s32.totalorder %s35, %s37
      %p41 = scmp.eq.s32.totalorder %s27, 0
      %p42 = por %p40, %p41
      %p43 = scmp.ne.s32.totalorder %s35, %s37
      %p44 = scmp.eq.s32.totalorder %s32, 1
      %p45 = por %p43, %p44
      %p46 = scmp.ne.s32.totalorder %s37, %s38
      %p47 = scmp.eq.s32.totalorder %s32, 0
      %p48 = por %p46, %p47
      %p49 = scmp.ne.s32.totalorder %s37, %s38
      %p50 = scmp.eq.s32.totalorder %s33, 1
      %p51 = por %p49, %p50
      %p53 = scmp.ne.s32.totalorder %s38, %s52
      %p54 = scmp.eq.s32.totalorder %s33, 0
      %p55 = por %p53, %p54
      %s57 = sadd.s32 %s56, 1
      %p60 = scmp.eq.s32.totalorder %s27, 1
      %p61 = scmp.ne.s32.totalorder %s56, %s58
      %p62 = scmp.eq.s32.totalorder %s27, 0
      %p63 = por %p61, %p62
      %p64 = scmp.ne.s32.totalorder %s56, %s58
      %p65 = scmp.eq.s32.totalorder %s32, 1
      %p66 = por %p64, %p65
      %p67 = scmp.ne.s32.totalorder %s58, %s59
      %p68 = scmp.eq.s32.totalorder %s32, 0
      %p69 = por %p67, %p68
      %p70 = scmp.ne.s32.totalorder %s58, %s59
      %p71 = scmp.eq.s32.totalorder %s33, 1
      %p72 = por %p70, %p71
      %p74 = scmp.ne.s32.totalorder %s59, %s73
      %p75 = scmp.eq.s32.totalorder %s33, 0
      %p76 = por %p74, %p75
      %s77 = ssub.s32 %s27, %s34
      %p78 = scmp.eq.s32.totalorder %s77, 0
      %s80 = sadd.s32 %s79, 1
      %s81 = scalar_select %p78, %s79, %s80
      %p84 = pneg %p78
      %p85 = scmp.eq.s32.totalorder %s27, 1
      %p86 = por %p84, %p85
      %p87 = scmp.ne.s32.totalorder %s79, %s82
      %p88 = scmp.eq.s32.totalorder %s27, 0
      %p89 = por %p87, %p88
      %p90 = scmp.ne.s32.totalorder %s79, %s82
      %p91 = scmp.eq.s32.totalorder %s32, 1
      %p92 = por %p90, %p91
      %p93 = scmp.ne.s32.totalorder %s82, %s83
      %p94 = scmp.eq.s32.totalorder %s32, 0
      %p95 = por %p93, %p94
      %p96 = scmp.ne.s32.totalorder %s82, %s83
      %p97 = scmp.eq.s32.totalorder %s33, 1
      %p98 = por %p96, %p97
      %p100 = scmp.ne.s32.totalorder %s83, %s99
      %p101 = scmp.eq.s32.totalorder %s33, 0
      %p102 = por %p100, %p101
      %s103 = ssub.s32 %s27, %s34
      %p104 = scmp.eq.s32.totalorder %s103, 0
      %s106 = sadd.s32 %s105, 1
      %s107 = scalar_select %p104, %s105, %s106
      %p110 = pneg %p104
      %p111 = scmp.eq.s32.totalorder %s27, 1
      %p112 = por %p110, %p111
      %p113 = scmp.ne.s32.totalorder %s105, %s108
      %p114 = scmp.eq.s32.totalorder %s27, 0
      %p115 = por %p113, %p114
      %p116 = scmp.ne.s32.totalorder %s105, %s108
      %p117 = scmp.eq.s32.totalorder %s32, 1
      %p118 = por %p116, %p117
      %p119 = scmp.ne.s32.totalorder %s108, %s109
      %p120 = scmp.eq.s32.totalorder %s32, 0
      %p121 = por %p119, %p120
      %p122 = scmp.ne.s32.totalorder %s108, %s109
      %p123 = scmp.eq.s32.totalorder %s33, 1
      %p124 = por %p122, %p123
      %p126 = scmp.ne.s32.totalorder %s109, %s125
      %p127 = scmp.eq.s32.totalorder %s33, 0
      %p128 = por %p126, %p127
      %s129 = ssub.s32 %s27, %s34
      %p130 = scmp.eq.s32.totalorder %s129, 0
      %s132 = sadd.s32 %s131, 1
      %s133 = scalar_select %p130, %s131, %s132
      %p136 = pneg %p130
      %p137 = scmp.eq.s32.totalorder %s27, 1
      %p138 = por %p136, %p137
      %p139 = scmp.ne.s32.totalorder %s131, %s134
      %p140 = scmp.eq.s32.totalorder %s27, 0
      %p141 = por %p139, %p140
      %p142 = scmp.ne.s32.totalorder %s131, %s134
      %p143 = scmp.eq.s32.totalorder %s32, 1
      %p144 = por %p142, %p143
      %p145 = scmp.ne.s32.totalorder %s134, %s135
      %p146 = scmp.eq.s32.totalorder %s32, 0
      %p147 = por %p145, %p146
      %p148 = scmp.ne.s32.totalorder %s134, %s135
      %p149 = scmp.eq.s32.totalorder %s33, 1
      %p150 = por %p148, %p149
      %p152 = scmp.ne.s32.totalorder %s135, %s151
      %p153 = scmp.eq.s32.totalorder %s33, 0
      %p154 = por %p152, %p153
      %s156 = sadd.s32 %s155, 1
      %p159 = scmp.eq.s32.totalorder %s27, 1
      %p160 = scmp.ne.s32.totalorder %s155, %s157
      %p161 = scmp.eq.s32.totalorder %s27, 0
      %p162 = por %p160, %p161
      %p163 = scmp.ne.s32.totalorder %s155, %s157
      %p164 = scmp.eq.s32.totalorder %s32, 1
      %p165 = por %p163, %p164
      %p166 = scmp.ne.s32.totalorder %s157, %s158
      %p167 = scmp.eq.s32.totalorder %s32, 0
      %p168 = por %p166, %p167
      %p169 = scmp.ne.s32.totalorder %s157, %s158
      %p170 = scmp.eq.s32.totalorder %s33, 1
      %p171 = por %p169, %p170
      %p173 = scmp.ne.s32.totalorder %s158, %s172
      %p174 = scmp.eq.s32.totalorder %s33, 0
      %p175 = por %p173, %p174
      %s177 = sadd.s32 %s176, 1
      %p180 = scmp.eq.s32.totalorder %s27, 1
      %p181 = scmp.ne.s32.totalorder %s176, %s178
      %p182 = scmp.eq.s32.totalorder %s27, 0
      %p183 = por %p181, %p182
      %p184 = scmp.ne.s32.totalorder %s176, %s178
      %p185 = scmp.eq.s32.totalorder %s32, 1
      %p186 = por %p184, %p185
      %p187 = scmp.ne.s32.totalorder %s178, %s179
      %p188 = scmp.eq.s32.totalorder %s32, 0
      %p189 = por %p187, %p188
      %p190 = scmp.ne.s32.totalorder %s178, %s179
      %p191 = scmp.eq.s32.totalorder %s33, 1
      %p192 = por %p190, %p191
      %p194 = scmp.ne.s32.totalorder %s179, %s193
      %p195 = scmp.eq.s32.totalorder %s33, 0
      %p196 = por %p194, %p195
      %s198 = sadd.s32 %s197, 1
      %p201 = scmp.eq.s32.totalorder %s27, 1
      %p202 = scmp.ne.s32.totalorder %s197, %s199
      %p203 = scmp.eq.s32.totalorder %s27, 0
      %p204 = por %p202, %p203
      %p205 = scmp.ne.s32.totalorder %s197, %s199
      %p206 = scmp.eq.s32.totalorder %s32, 1
      %p207 = por %p205, %p206
      %p208 = scmp.ne.s32.totalorder %s199, %s200
      %p209 = scmp.eq.s32.totalorder %s32, 0
      %p210 = por %p208, %p209
      %p211 = scmp.ne.s32.totalorder %s199, %s200
      %p212 = scmp.eq.s32.totalorder %s33, 1
      %p213 = por %p211, %p212
      %p215 = scmp.ne.s32.totalorder %s200, %s214
      %p216 = scmp.eq.s32.totalorder %s33, 0
      %p217 = por %p215, %p216
      %s219 = sadd.s32 %s218, 1
      %p222 = scmp.eq.s32.totalorder %s27, 1
      %p223 = scmp.ne.s32.totalorder %s218, %s220
      %p224 = scmp.eq.s32.totalorder %s27, 0
      %p225 = por %p223, %p224
      %p226 = scmp.ne.s32.totalorder %s218, %s220
      %p227 = scmp.eq.s32.totalorder %s32, 1
      %p228 = por %p226, %p227
      %p229 = scmp.ne.s32.totalorder %s220, %s221
      %p230 = scmp.eq.s32.totalorder %s32, 0
      %p231 = por %p229, %p230
      %p232 = scmp.ne.s32.totalorder %s220, %s221
      %p233 = scmp.eq.s32.totalorder %s33, 1
      %p234 = por %p232, %p233
      %p236 = scmp.ne.s32.totalorder %s221, %s235
      %p237 = scmp.eq.s32.totalorder %s33, 0
      %p238 = por %p236, %p237
      %s240 = sadd.s32 %s239, 1
      %p243 = scmp.eq.s32.totalorder %s27, 1
      %p244 = scmp.ne.s32.totalorder %s239, %s241
      %p245 = scmp.eq.s32.totalorder %s27, 0
      %p246 = por %p244, %p245
      %p247 = scmp.ne.s32.totalorder %s239, %s241
      %p248 = scmp.eq.s32.totalorder %s32, 1
      %p249 = por %p247, %p248
      %p250 = scmp.ne.s32.totalorder %s241, %s242
      %p251 = scmp.eq.s32.totalorder %s32, 0
      %p252 = por %p250, %p251
      %p253 = scmp.ne.s32.totalorder %s241, %s242
      %p254 = scmp.eq.s32.totalorder %s33, 1
      %p255 = por %p253, %p254
      %p257 = scmp.ne.s32.totalorder %s242, %s256
      %p258 = scmp.eq.s32.totalorder %s33, 0
      %p259 = por %p257, %p258
      %s261 = sadd.s32 %s260, 1
      %p264 = scmp.eq.s32.totalorder %s27, 1
      %p265 = scmp.ne.s32.totalorder %s260, %s262
      %p266 = scmp.eq.s32.totalorder %s27, 0
      %p267 = por %p265, %p266
      %p268 = scmp.ne.s32.totalorder %s260, %s262
      %p269 = scmp.eq.s32.totalorder %s32, 1
      %p270 = por %p268, %p269
      %p271 = scmp.ne.s32.totalorder %s262, %s263
      %p272 = scmp.eq.s32.totalorder %s32, 0
      %p273 = por %p271, %p272
      %p274 = scmp.ne.s32.totalorder %s262, %s263
      %p275 = scmp.eq.s32.totalorder %s33, 1
      %p276 = por %p274, %p275
      %p278 = scmp.ne.s32.totalorder %s263, %s277
      %p279 = scmp.eq.s32.totalorder %s33, 0
      %p280 = por %p278, %p279
      %s282 = sadd.s32 %s281, 1
      %p285 = scmp.eq.s32.totalorder %s27, 1
      %p286 = scmp.ne.s32.totalorder %s281, %s283
      %p287 = scmp.eq.s32.totalorder %s27, 0
      %p288 = por %p286, %p287
      %p289 = scmp.ne.s32.totalorder %s281, %s283
      %p290 = scmp.eq.s32.totalorder %s32, 1
      %p291 = por %p289, %p290
      %p292 = scmp.ne.s32.totalorder %s283, %s284
      %p293 = scmp.eq.s32.totalorder %s32, 0
      %p294 = por %p292, %p293
      %p295 = scmp.ne.s32.totalorder %s283, %s284
      %p296 = scmp.eq.s32.totalorder %s33, 1
      %p297 = por %p295, %p296
      %p299 = scmp.ne.s32.totalorder %s284, %s298
      %p300 = scmp.eq.s32.totalorder %s33, 0
      %p301 = por %p299, %p300
      %s303 = sadd.s32 %s302, 1
      %p306 = scmp.eq.s32.totalorder %s27, 1
      %p307 = scmp.ne.s32.totalorder %s302, %s304
      %p308 = scmp.eq.s32.totalorder %s27, 0
      %p309 = por %p307, %p308
      %p310 = scmp.ne.s32.totalorder %s302, %s304
      %p311 = scmp.eq.s32.totalorder %s32, 1
      %p312 = por %p310, %p311
      %p313 = scmp.ne.s32.totalorder %s304, %s305
      %p314 = scmp.eq.s32.totalorder %s32, 0
      %p315 = por %p313, %p314
      %p316 = scmp.ne.s32.totalorder %s304, %s305
      %p317 = scmp.eq.s32.totalorder %s33, 1
      %p318 = por %p316, %p317
      %p320 = scmp.ne.s32.totalorder %s305, %s319
      %p321 = scmp.eq.s32.totalorder %s33, 0
      %p322 = por %p320, %p321
      %s324 = sadd.s32 %s323, 1
      %p327 = scmp.eq.s32.totalorder %s27, 1
      %p328 = scmp.ne.s32.totalorder %s323, %s325
      %p329 = scmp.eq.s32.totalorder %s27, 0
      %p330 = por %p328, %p329
      %p331 = scmp.ne.s32.totalorder %s323, %s325
      %p332 = scmp.eq.s32.totalorder %s32, 1
      %p333 = por %p331, %p332
      %p334 = scmp.ne.s32.totalorder %s325, %s326
      %p335 = scmp.eq.s32.totalorder %s32, 0
      %p336 = por %p334, %p335
      %p337 = scmp.ne.s32.totalorder %s325, %s326
      %p338 = scmp.eq.s32.totalorder %s33, 1
      %p339 = por %p337, %p338
      %p341 = scmp.ne.s32.totalorder %s326, %s340
      %p342 = scmp.eq.s32.totalorder %s33, 0
      %p343 = por %p341, %p342
      %p344 = scmp.le.s32.totalorder 1, %s27
      %p345 = scmp.lt.s32.totalorder %s27, 3
      %p346 = pnand %p344, %p345
      %p347 = pneg %p346
      // Predicated region
      $region9: #{tpu_custom_call.1} parent=5 // pred_check
        _
      $region10: #{tpu_custom_call.1} parent=5 // pred_check_branch
        %349 = sbr.rel (%p346) target = $region12
      $region11: #{tpu_custom_call.1} parent=5 // pred_region
        %s350 = ssub.s32 %s27, 1
        // Predicated region
        $region13: #{tpu_custom_call.1} parent=11 // pred_check
          %p351 = pneg %p48
        $region14: #{tpu_custom_call.1} parent=11 // pred_check_branch
          %353 = sbr.rel (%p351) target = $region16
        $region15: #{tpu_custom_call.1} parent=11 // pred_region
          _
        $region16: #{tpu_custom_call.1} parent=11 // pred_fallthru
          _
        // Predicated region
        $region17: #{tpu_custom_call.1} parent=11 // pred_check
          %p354 = pneg %p69
        $region18: #{tpu_custom_call.1} parent=11 // pred_check_branch
          %356 = sbr.rel (%p354) target = $region20
        $region19: #{tpu_custom_call.1} parent=11 // pred_region
          %s358 = ssub.s32 1024, 1024
          %359 = vsyncadd [#allocation4], %s358
          %s360 = sshll.u32 [#allocation3], 4
          %s361 = int_to_ptr.vmem [resolvable:$true] %s360
          %366 = dma.hbm_to_vmem [thread:$0]  %s1, 1024, %s361, [#allocation4], 64, 64, 4
        $region20: #{tpu_custom_call.1} parent=11 // pred_fallthru
          _
        // Predicated region
        $region21: #{tpu_custom_call.1} parent=11 // pred_check
          %p367 = pneg %p168
        $region22: #{tpu_custom_call.1} parent=11 // pred_check_branch
          %369 = sbr.rel (%p367) target = $region24
        $region23: #{tpu_custom_call.1} parent=11 // pred_region
          _
        $region24: #{tpu_custom_call.1} parent=11 // pred_fallthru
          _
        // Predicated region
        $region25: #{tpu_custom_call.1} parent=11 // pred_check
          %p370 = pneg %p189
        $region26: #{tpu_custom_call.1} parent=11 // pred_check_branch
          %372 = sbr.rel (%p370) target = $region28
        $region27: #{tpu_custom_call.1} parent=11 // pred_region
          _
        $region28: #{tpu_custom_call.1} parent=11 // pred_fallthru
          _
        // Predicated region
        $region29: #{tpu_custom_call.1} parent=11 // pred_check
          %p373 = pneg %p210
        $region30: #{tpu_custom_call.1} parent=11 // pred_check_branch
          %375 = sbr.rel (%p373) target = $region32
        $region31: #{tpu_custom_call.1} parent=11 // pred_region
          _
        $region32: #{tpu_custom_call.1} parent=11 // pred_fallthru
          _
        // Predicated region
        $region33: #{tpu_custom_call.1} parent=11 // pred_check
          %p376 = pneg %p231
        $region34: #{tpu_custom_call.1} parent=11 // pred_check_branch
          %378 = sbr.rel (%p376) target = $region36
        $region35: #{tpu_custom_call.1} parent=11 // pred_region
          _
        $region36: #{tpu_custom_call.1} parent=11 // pred_fallthru
          _
        // Predicated region
        $region37: #{tpu_custom_call.1} parent=11 // pred_check
          %p379 = pneg %p252
        $region38: #{tpu_custom_call.1} parent=11 // pred_check_branch
          %381 = sbr.rel (%p379) target = $region40
        $region39: #{tpu_custom_call.1} parent=11 // pred_region
          _
        $region40: #{tpu_custom_call.1} parent=11 // pred_fallthru
          _
        // Predicated region
        $region41: #{tpu_custom_call.1} parent=11 // pred_check
          %p382 = pneg %p273
        $region42: #{tpu_custom_call.1} parent=11 // pred_check_branch
          %384 = sbr.rel (%p382) target = $region44
        $region43: #{tpu_custom_call.1} parent=11 // pred_region
          _
        $region44: #{tpu_custom_call.1} parent=11 // pred_fallthru
          _
        // Predicated region
        $region45: #{tpu_custom_call.1} parent=11 // pred_check
          %p385 = pneg %p294
        $region46: #{tpu_custom_call.1} parent=11 // pred_check_branch
          %387 = sbr.rel (%p385) target = $region48
        $region47: #{tpu_custom_call.1} parent=11 // pred_region
          %s389 = ssub.s32 1024, 1024
          %390 = vsyncadd [#allocation10], %s389
          %s391 = sshll.u32 [#allocation11], 4
          %s392 = int_to_ptr.vmem [resolvable:$true] %s391
          %397 = dma.hbm_to_vmem [thread:$0]  %s11, 1024, %s392, [#allocation10], 64, 64, 4
        $region48: #{tpu_custom_call.1} parent=11 // pred_fallthru
          _
        // Predicated region
        $region49: #{tpu_custom_call.1} parent=11 // pred_check
          %p398 = pneg %p315
        $region50: #{tpu_custom_call.1} parent=11 // pred_check_branch
          %400 = sbr.rel (%p398) target = $region52
        $region51: #{tpu_custom_call.1} parent=11 // pred_region
          _
        $region52: #{tpu_custom_call.1} parent=11 // pred_fallthru
          _
      $region12: #{tpu_custom_call.1} parent=5 // pred_fallthru
        _
      %p401 = scmp.lt.s32.totalorder %s27, 2
      // Predicated region
      $region53: #{tpu_custom_call.1} parent=5 // pred_check
        %p402 = pneg %p401
      $region54: #{tpu_custom_call.1} parent=5 // pred_check_branch
        %404 = sbr.rel (%p402) target = $region56
      $region55: #{tpu_custom_call.1} parent=5 // pred_region
        // Predicated region
        $region57: #{tpu_custom_call.1} parent=55 // pred_check
          %p405 = pneg %p89
        $region58: #{tpu_custom_call.1} parent=55 // pred_check_branch
          %407 = sbr.rel (%p405) target = $region60
        $region59: #{tpu_custom_call.1} parent=55 // pred_region
          %s408 = sand.u32 %s27, 1
          %s409 = scalar_lea.sflag [#allocation7], %s408
          %s410 = sand.u32 %s79, 1
          %s411 = smul.addr %s410, 64
          %s412 = scalar_lea.vmem [#allocation6], %s411
          %s414 = ssub.s32 1024, 1024
          %415 = vsyncadd %s409, %s414
          %s416 = smul.addr %s27, 16
          %s417 = smul.addr %s416, 64
          %s418 = scalar_lea.hbm %s2, %s417
          %s419 = sshll.u32 %s412, 4
          %s420 = int_to_ptr.vmem [resolvable:$true] %s419
          %425 = dma.hbm_to_vmem [thread:$0]  %s418, 1024, %s420, %s409, 64, 64, 4
        $region60: #{tpu_custom_call.1} parent=55 // pred_fallthru
          _
        // Predicated region
        $region61: #{tpu_custom_call.1} parent=55 // pred_check
          %p426 = pneg %p115
        $region62: #{tpu_custom_call.1} parent=55 // pred_check_branch
          %428 = sbr.rel (%p426) target = $region64
        $region63: #{tpu_custom_call.1} parent=55 // pred_region
          %s429 = sand.u32 %s27, 1
          %s430 = scalar_lea.sflag [#allocation7], %s429
          %s431 = sand.u32 %s105, 1
          %s432 = smul.addr %s431, 128
          %s433 = scalar_lea.vmem [#allocation8], %s432
          %s435 = ssub.s32 2048, 2048
          %436 = vsyncadd %s430, %s435
          %s437 = smul.addr %s27, 32
          %s438 = smul.addr %s437, 64
          %s439 = scalar_lea.hbm %s3, %s438
          %s440 = sshll.u32 %s433, 4
          %s441 = int_to_ptr.vmem [resolvable:$true] %s440
          %446 = dma.hbm_to_vmem [thread:$0]  %s439, 2048, %s441, %s430, 128, 128, 8
        $region64: #{tpu_custom_call.1} parent=55 // pred_fallthru
          _
        // Predicated region
        $region65: #{tpu_custom_call.1} parent=55 // pred_check
          %p447 = pneg %p141
        $region66: #{tpu_custom_call.1} parent=55 // pred_check_branch
          %449 = sbr.rel (%p447) target = $region68
        $region67: #{tpu_custom_call.1} parent=55 // pred_region
          %s450 = sand.u32 %s27, 1
          %s451 = scalar_lea.sflag [#allocation10], %s450
          %s452 = sand.u32 %s131, 1
          %s453 = smul.addr %s452, 128
          %s454 = scalar_lea.vmem [#allocation9], %s453
          %s456 = ssub.s32 2048, 2048
          %457 = vsyncadd %s451, %s456
          %s458 = smul.addr %s27, 32
          %s459 = smul.addr %s458, 64
          %s460 = scalar_lea.hbm %s4, %s459
          %s461 = sshll.u32 %s454, 4
          %s462 = int_to_ptr.vmem [resolvable:$true] %s461
          %467 = dma.hbm_to_vmem [thread:$0]  %s460, 2048, %s462, %s451, 64, 64, 4
        $region68: #{tpu_custom_call.1} parent=55 // pred_fallthru
          _
      $region56: #{tpu_custom_call.1} parent=5 // pred_fallthru
        _
      %p468 = scmp.le.s32.totalorder 1, %s27
      %p469 = scmp.lt.s32.totalorder %s27, 3
      %p470 = pnand %p468, %p469
      %p471 = pneg %p470
      // Predicated region
      $region69: #{tpu_custom_call.1} parent=5 // pred_check
        _
      $region70: #{tpu_custom_call.1} parent=5 // pred_check_branch
        %473 = sbr.rel (%p470) target = $region72
      $region71: #{tpu_custom_call.1} parent=5 // pred_region
        %s474 = ssub.s32 %s27, 1
        // Predicated region
        $region73: #{tpu_custom_call.1} parent=71 // pred_check
          %p475 = pneg %p69
        $region74: #{tpu_custom_call.1} parent=71 // pred_check_branch
          %477 = sbr.rel (%p475) target = $region76
        $region75: #{tpu_custom_call.1} parent=71 // pred_region
          %478 = dma.done [#allocation4], 1024
        $region76: #{tpu_custom_call.1} parent=71 // pred_fallthru
          _
        %s479 = sand.u32 %s32, 1
        %s480 = scalar_lea.sflag [#allocation7], %s479
        %s481 = sand.u32 %s82, 1
        %s482 = smul.addr %s481, 64
        %s483 = scalar_lea.vmem [#allocation6], %s482
        // Predicated region
        $region77: #{tpu_custom_call.1} parent=71 // pred_check
          %p484 = pneg %p95
        $region78: #{tpu_custom_call.1} parent=71 // pred_check_branch
          %486 = sbr.rel (%p484) target = $region80
        $region79: #{tpu_custom_call.1} parent=71 // pred_region
          %487 = dma.done %s480, 1024
        $region80: #{tpu_custom_call.1} parent=71 // pred_fallthru
          _
        %s488 = sand.u32 %s32, 1
        %s489 = scalar_lea.sflag [#allocation7], %s488
        %s490 = sand.u32 %s108, 1
        %s491 = smul.addr %s490, 128
        %s492 = scalar_lea.vmem [#allocation8], %s491
        // Predicated region
        $region81: #{tpu_custom_call.1} parent=71 // pred_check
          %p493 = pneg %p121
        $region82: #{tpu_custom_call.1} parent=71 // pred_check_branch
          %495 = sbr.rel (%p493) target = $region84
        $region83: #{tpu_custom_call.1} parent=71 // pred_region
          %496 = dma.done %s489, 2048
        $region84: #{tpu_custom_call.1} parent=71 // pred_fallthru
          _
        %s497 = sand.u32 %s32, 1
        %s498 = scalar_lea.sflag [#allocation10], %s497
        %s499 = sand.u32 %s134, 1
        %s500 = smul.addr %s499, 128
        %s501 = scalar_lea.vmem [#allocation9], %s500
        // Predicated region
        $region85: #{tpu_custom_call.1} parent=71 // pred_check
          %p502 = pneg %p147
        $region86: #{tpu_custom_call.1} parent=71 // pred_check_branch
          %504 = sbr.rel (%p502) target = $region88
        $region87: #{tpu_custom_call.1} parent=71 // pred_region
          %505 = dma.done %s498, 2048
        $region88: #{tpu_custom_call.1} parent=71 // pred_fallthru
          _
        // Predicated region
        $region89: #{tpu_custom_call.1} parent=71 // pred_check
          %p506 = pneg %p294
        $region90: #{tpu_custom_call.1} parent=71 // pred_check_branch
          %508 = sbr.rel (%p506) target = $region92
        $region91: #{tpu_custom_call.1} parent=71 // pred_region
          %509 = dma.done [#allocation10], 1024
        $region92: #{tpu_custom_call.1} parent=71 // pred_fallthru
          _
        %p510 = pneg %p48
        %p511 = pneg %p45
        %p512 = pneg %p69
        %p513 = pneg %p66
        %s514 = sand.u32 %s32, 1
        %s515 = scalar_lea.sflag [#allocation7], %s514
        %s516 = sand.u32 %s82, 1
        %s517 = smul.addr %s516, 64
        %s518 = scalar_lea.vmem [#allocation6], %s517
        %p519 = pneg %p95
        %p520 = pneg %p92
        %s521 = sand.u32 %s32, 1
        %s522 = scalar_lea.sflag [#allocation7], %s521
        %s523 = sand.u32 %s108, 1
        %s524 = smul.addr %s523, 128
        %s525 = scalar_lea.vmem [#allocation8], %s524
        %p526 = pneg %p121
        %p527 = pneg %p118
        %s528 = sand.u32 %s32, 1
        %s529 = scalar_lea.sflag [#allocation10], %s528
        %s530 = sand.u32 %s134, 1
        %s531 = smul.addr %s530, 128
        %s532 = scalar_lea.vmem [#allocation9], %s531
        %p533 = pneg %p147
        %p534 = pneg %p144
        %p535 = pneg %p168
        %p536 = pneg %p165
        %p537 = pneg %p189
        %p538 = pneg %p186
        %p539 = pneg %p210
        %p540 = pneg %p207
        %p541 = pneg %p231
        %p542 = pneg %p228
        %p543 = pneg %p252
        %p544 = pneg %p249
        %p545 = pneg %p273
        %p546 = pneg %p270
        %p547 = pneg %p294
        %p548 = pneg %p291
        %p549 = pneg %p315
        %p550 = pneg %p312
        %p551 = pneg %p336
        %p552 = pneg %p333
        %p554 = scmp.eq.s32.totalorder %s32, 0
        // Predicated region
        $region93: #{tpu_custom_call.1} parent=71 // pred_check
          %p555 = pneg %p554
        $region94: #{tpu_custom_call.1} parent=71 // pred_check_branch
          %557 = sbr.rel (%p555) target = $region96
        $region95: #{tpu_custom_call.1} parent=71 // pred_region
          %v558 = vld [vmem:[%s0] sm:$0xff]
          %v559 = vld [vmem:[%s0 + $0x8] sm:$0xff]
          %v560 = vld [vmem:[%s0 + $0x10] sm:$0xff]
          %v561 = vld [vmem:[%s0 + $0x18] sm:$0xff]
          %v562 = vld [vmem:[%s0 + $0x20] sm:$0xff]
          %v563 = vld [vmem:[%s0 + $0x28] sm:$0xff]
          %v564 = vld [vmem:[%s0 + $0x30] sm:$0xff]
          %v565 = vld [vmem:[%s0 + $0x38] sm:$0xff]
          %v566 = vld [vmem:[%s0 + $0x40] sm:$0xff]
          %v567 = vld [vmem:[%s0 + $0x48] sm:$0xff]
          %v568 = vld [vmem:[%s0 + $0x50] sm:$0xff]
          %v569 = vld [vmem:[%s0 + $0x58] sm:$0xff]
          %v570 = vld [vmem:[%s0 + $0x60] sm:$0xff]
          %v571 = vld [vmem:[%s0 + $0x68] sm:$0xff]
          %v572 = vld [vmem:[%s0 + $0x70] sm:$0xff]
          %v573 = vld [vmem:[%s0 + $0x78] sm:$0xff]
          %574 = vst [vmem:[#allocation2] sm:$0xff] %v558
          %575 = vst [vmem:[#allocation2 + $0x8] sm:$0xff] %v559
          %576 = vst [vmem:[#allocation2 + $0x10] sm:$0xff] %v560
          %577 = vst [vmem:[#allocation2 + $0x18] sm:$0xff] %v561
          %578 = vst [vmem:[#allocation2 + $0x20] sm:$0xff] %v562
          %579 = vst [vmem:[#allocation2 + $0x28] sm:$0xff] %v563
          %580 = vst [vmem:[#allocation2 + $0x30] sm:$0xff] %v564
          %581 = vst [vmem:[#allocation2 + $0x38] sm:$0xff] %v565
          %582 = vst [vmem:[#allocation2 + $0x40] sm:$0xff] %v566
          %583 = vst [vmem:[#allocation2 + $0x48] sm:$0xff] %v567
          %584 = vst [vmem:[#allocation2 + $0x50] sm:$0xff] %v568
          %585 = vst [vmem:[#allocation2 + $0x58] sm:$0xff] %v569
          %586 = vst [vmem:[#allocation2 + $0x60] sm:$0xff] %v570
          %587 = vst [vmem:[#allocation2 + $0x68] sm:$0xff] %v571
          %588 = vst [vmem:[#allocation2 + $0x70] sm:$0xff] %v572
          %589 = vst [vmem:[#allocation2 + $0x78] sm:$0xff] %v573
        $region96: #{tpu_custom_call.1} parent=71 // pred_fallthru
          _
        %v590 = vld [vmem:[#allocation2] sm:$0xff]
        %v591 = vld [vmem:[#allocation2 + $0x8] sm:$0xff]
        %v592 = vld [vmem:[#allocation2 + $0x10] sm:$0xff]
        %v593 = vld [vmem:[#allocation2 + $0x18] sm:$0xff]
        %v594 = vld [vmem:[#allocation2 + $0x20] sm:$0xff]
        %v595 = vld [vmem:[#allocation2 + $0x28] sm:$0xff]
        %v596 = vld [vmem:[#allocation2 + $0x30] sm:$0xff]
        %v597 = vld [vmem:[#allocation2 + $0x38] sm:$0xff]
        %v598 = vld [vmem:[#allocation2 + $0x40] sm:$0xff]
        %v599 = vld [vmem:[#allocation2 + $0x48] sm:$0xff]
        %v600 = vld [vmem:[#allocation2 + $0x50] sm:$0xff]
        %v601 = vld [vmem:[#allocation2 + $0x58] sm:$0xff]
        %v602 = vld [vmem:[#allocation2 + $0x60] sm:$0xff]
        %v603 = vld [vmem:[#allocation2 + $0x68] sm:$0xff]
        %v604 = vld [vmem:[#allocation2 + $0x70] sm:$0xff]
        %v605 = vld [vmem:[#allocation2 + $0x78] sm:$0xff]
        %v606 = vld [vmem:[#allocation3] sm:$0xf]
        %v607 = vld [vmem:[#allocation3 + $0x4] sm:$0xf]
        %v608 = vld [vmem:[#allocation3 + $0x8] sm:$0xf]
        %v609 = vld [vmem:[#allocation3 + $0xc] sm:$0xf]
        %v610 = vld [vmem:[#allocation3 + $0x10] sm:$0xf]
        %v611 = vld [vmem:[#allocation3 + $0x14] sm:$0xf]
        %v612 = vld [vmem:[#allocation3 + $0x18] sm:$0xf]
        %v613 = vld [vmem:[#allocation3 + $0x1c] sm:$0xf]
        %v614 = vld [vmem:[#allocation3 + $0x20] sm:$0xf]
        %v615 = vld [vmem:[#allocation3 + $0x24] sm:$0xf]
        %v616 = vld [vmem:[#allocation3 + $0x28] sm:$0xf]
        %v617 = vld [vmem:[#allocation3 + $0x2c] sm:$0xf]
        %v618 = vld [vmem:[#allocation3 + $0x30] sm:$0xf]
        %v619 = vld [vmem:[#allocation3 + $0x34] sm:$0xf]
        %v620 = vld [vmem:[#allocation3 + $0x38] sm:$0xf]
        %v621 = vld [vmem:[#allocation3 + $0x3c] sm:$0xf]
        %v622 = vpack.c.bf16 %v591, %v590
        %v623 = vpack.c.bf16 %v593, %v592
        %v624 = vpack.c.bf16 %v595, %v594
        %v625 = vpack.c.bf16 %v597, %v596
        %v626 = vpack.c.bf16 %v599, %v598
        %v627 = vpack.c.bf16 %v601, %v600
        %v628 = vpack.c.bf16 %v603, %v602
        %v629 = vpack.c.bf16 %v605, %v604
        %v630 = vld [vmem:[%s483] sm:$0xf]
        %v631 = vld [vmem:[%s483 + $0x4] sm:$0xf]
        %v632 = vld [vmem:[%s483 + $0x8] sm:$0xf]
        %v633 = vld [vmem:[%s483 + $0xc] sm:$0xf]
        %v634 = vld [vmem:[%s483 + $0x10] sm:$0xf]
        %v635 = vld [vmem:[%s483 + $0x14] sm:$0xf]
        %v636 = vld [vmem:[%s483 + $0x18] sm:$0xf]
        %v637 = vld [vmem:[%s483 + $0x1c] sm:$0xf]
        %v638 = vld [vmem:[%s483 + $0x20] sm:$0xf]
        %v639 = vld [vmem:[%s483 + $0x24] sm:$0xf]
        %v640 = vld [vmem:[%s483 + $0x28] sm:$0xf]
        %v641 = vld [vmem:[%s483 + $0x2c] sm:$0xf]
        %v642 = vld [vmem:[%s483 + $0x30] sm:$0xf]
        %v643 = vld [vmem:[%s483 + $0x34] sm:$0xf]
        %v644 = vld [vmem:[%s483 + $0x38] sm:$0xf]
        %v645 = vld [vmem:[%s483 + $0x3c] sm:$0xf]
        %v646 = vunpack.c.l.bf16 %v630
        %v647 = vunpack.c.l.bf16 %v631
        %v648 = vunpack.c.l.bf16 %v632
        %v649 = vunpack.c.l.bf16 %v633
        %v650 = vunpack.c.l.bf16 %v634
        %v651 = vunpack.c.l.bf16 %v635
        %v652 = vunpack.c.l.bf16 %v636
        %v653 = vunpack.c.l.bf16 %v637
        %v654 = vunpack.c.l.bf16 %v638
        %v655 = vunpack.c.l.bf16 %v639
        %v656 = vunpack.c.l.bf16 %v640
        %v657 = vunpack.c.l.bf16 %v641
        %v658 = vunpack.c.l.bf16 %v642
        %v659 = vunpack.c.l.bf16 %v643
        %v660 = vunpack.c.l.bf16 %v644
        %v661 = vunpack.c.l.bf16 %v645
        %v678 = vunpack.c.l.b16 %v606
        %v679 = vunpack.c.l.b16 %v607
        %v680 = vunpack.c.l.b16 %v608
        %v681 = vunpack.c.l.b16 %v609
        %v682 = vunpack.c.l.b16 %v610
        %v683 = vunpack.c.l.b16 %v611
        %v684 = vunpack.c.l.b16 %v612
        %v685 = vunpack.c.l.b16 %v613
        %v686 = vunpack.c.l.b16 %v614
        %v687 = vunpack.c.l.b16 %v615
        %v688 = vunpack.c.l.b16 %v616
        %v689 = vunpack.c.l.b16 %v617
        %v690 = vunpack.c.l.b16 %v618
        %v691 = vunpack.c.l.b16 %v619
        %v692 = vunpack.c.l.b16 %v620
        %v693 = vunpack.c.l.b16 %v621
        %v694 = vpack.c.b16 %v679, %v678
        %v695 = vpack.c.b16 %v681, %v680
        %v696 = vpack.c.b16 %v683, %v682
        %v697 = vpack.c.b16 %v685, %v684
        %v698 = vpack.c.b16 %v687, %v686
        %v699 = vpack.c.b16 %v689, %v688
        %v700 = vpack.c.b16 %v691, %v690
        %v701 = vpack.c.b16 %v693, %v692
        %710 = vmatprep.subr.bf16.mxu0 0
        %711 = vmatpush1.bf16.msra.mxu0 %v622
        %712 = vmatprep.subr.bf16.mxu0 0
        %713 = vmatpush1.bf16.msra.mxu0 %v623
        %714 = vmatprep.subr.bf16.mxu0 0
        %715 = vmatpush1.bf16.msra.mxu0 %v624
        %716 = vmatprep.subr.bf16.mxu0 0
        %717 = vmatpush1.bf16.msra.mxu0 %v625
        %718 = vmatprep.subr.bf16.mxu0 0
        %719 = vmatpush1.bf16.msra.mxu0 %v626
        %720 = vmatprep.subr.bf16.mxu0 0
        %721 = vmatpush1.bf16.msra.mxu0 %v627
        %722 = vmatprep.subr.bf16.mxu0 0
        %723 = vmatpush1.bf16.msra.mxu0 %v628
        %724 = vmatprep.subr.bf16.mxu0 0
        %725 = vmatpush1.bf16.msra.mxu0 %v629
        %726 = vmatprep.subr.bf16.mxu0 0
        %727 = vmatpush1.bf16.msra.mxu0 0
        %728 = vmatprep.subr.bf16.mxu0 0
        %729 = vmatpush1.bf16.msra.mxu0 0
        %730 = vmatprep.subr.bf16.mxu0 0
        %731 = vmatpush1.bf16.msra.mxu0 0
        %732 = vmatprep.subr.bf16.mxu0 0
        %733 = vmatpush1.bf16.msra.mxu0 0
        %734 = vmatprep.subr.bf16.mxu0 0
        %735 = vmatpush1.bf16.msra.mxu0 0
        %736 = vmatprep.subr.bf16.mxu0 0
        %737 = vmatpush1.bf16.msra.mxu0 0
        %738 = vmatprep.subr.bf16.mxu0 0
        %739 = vmatpush1.bf16.msra.mxu0 0
        %740 = vmatprep.subr.bf16.mxu0 0
        %741 = vmatpush1.bf16.msra.mxu0 0
        %742 = vmatprep.mubr.bf16.mxu0 0
        %743 = vmatmul.mubr.bf16.gmra.mrb[0].mxu0 %v694
        %v744 = vpop.f32.mrb[0].mxu0
        %v745 = vadd.f32 %v646, %v744
        %v746 = vpop.f32.mrb[0].mxu0
        %v747 = vpop.f32.mrb[0].mxu0
        %v748 = vadd.f32 %v647, %v747
        %v749 = vpop.f32.mrb[0].mxu0
        %750 = vmatprep.mubr.bf16.mxu0 0
        %751 = vmatmul.mubr.bf16.gmra.mrb[0].mxu0 %v695
        %v752 = vpop.f32.mrb[0].mxu0
        %v753 = vadd.f32 %v648, %v752
        %v754 = vpop.f32.mrb[0].mxu0
        %v755 = vpop.f32.mrb[0].mxu0
        %v756 = vadd.f32 %v649, %v755
        %v757 = vpop.f32.mrb[0].mxu0
        %758 = vmatprep.mubr.bf16.mxu0 0
        %759 = vmatmul.mubr.bf16.gmra.mrb[0].mxu0 %v696
        %v760 = vpop.f32.mrb[0].mxu0
        %v761 = vadd.f32 %v650, %v760
        %v762 = vpop.f32.mrb[0].mxu0
        %v763 = vpop.f32.mrb[0].mxu0
        %v764 = vadd.f32 %v651, %v763
        %v765 = vpop.f32.mrb[0].mxu0
        %766 = vmatprep.mubr.bf16.mxu0 0
        %767 = vmatmul.mubr.bf16.gmra.mrb[0].mxu0 %v697
        %v768 = vpop.f32.mrb[0].mxu0
        %v769 = vadd.f32 %v652, %v768
        %v770 = vpop.f32.mrb[0].mxu0
        %v771 = vpop.f32.mrb[0].mxu0
        %v772 = vadd.f32 %v653, %v771
        %v773 = vpop.f32.mrb[0].mxu0
        %774 = vmatprep.mubr.bf16.mxu0 0
        %775 = vmatmul.mubr.bf16.gmra.mrb[0].mxu0 %v698
        %v776 = vpop.f32.mrb[0].mxu0
        %v777 = vadd.f32 %v654, %v776
        %v778 = vpop.f32.mrb[0].mxu0
        %v779 = vpop.f32.mrb[0].mxu0
        %v780 = vadd.f32 %v655, %v779
        %v781 = vpop.f32.mrb[0].mxu0
        %782 = vmatprep.mubr.bf16.mxu0 0
        %783 = vmatmul.mubr.bf16.gmra.mrb[0].mxu0 %v699
        %v784 = vpop.f32.mrb[0].mxu0
        %v785 = vadd.f32 %v656, %v784
        %v786 = vpop.f32.mrb[0].mxu0
        %v787 = vpop.f32.mrb[0].mxu0
        %v788 = vadd.f32 %v657, %v787
        %v789 = vpop.f32.mrb[0].mxu0
        %790 = vmatprep.mubr.bf16.mxu0 0
        %791 = vmatmul.mubr.bf16.gmra.mrb[0].mxu0 %v700
        %v792 = vpop.f32.mrb[0].mxu0
        %v793 = vadd.f32 %v658, %v792
        %v794 = vpop.f32.mrb[0].mxu0
        %v795 = vpop.f32.mrb[0].mxu0
        %v796 = vadd.f32 %v659, %v795
        %v797 = vpop.f32.mrb[0].mxu0
        %798 = vmatprep.mubr.bf16.mxu0 0
        %799 = vmatmul.mubr.bf16.gmra.mrb[0].mxu0 %v701
        %v800 = vpop.f32.mrb[0].mxu0
        %v801 = vadd.f32 %v660, %v800
        %v802 = vpop.f32.mrb[0].mxu0
        %v803 = vpop.f32.mrb[0].mxu0
        %v804 = vadd.f32 %v661, %v803
        %v805 = vpop.f32.mrb[0].mxu0
        %806 = vdwg.mxu0
        %v807 = vpack.c.bf16 %v748, %v745
        %v808 = vpack.c.bf16 %v756, %v753
        %v809 = vpack.c.bf16 %v764, %v761
        %v810 = vpack.c.bf16 %v772, %v769
        %v811 = vpack.c.bf16 %v780, %v777
        %v812 = vpack.c.bf16 %v788, %v785
        %v813 = vpack.c.bf16 %v796, %v793
        %v814 = vpack.c.bf16 %v804, %v801
        %v815 = vld [vmem:[%s492] sm:$0xff]
        %v816 = vld [vmem:[%s492 + $0x8] sm:$0xff]
        %v817 = vld [vmem:[%s492 + $0x10] sm:$0xff]
        %v818 = vld [vmem:[%s492 + $0x18] sm:$0xff]
        %v819 = vld [vmem:[%s492 + $0x20] sm:$0xff]
        %v820 = vld [vmem:[%s492 + $0x28] sm:$0xff]
        %v821 = vld [vmem:[%s492 + $0x30] sm:$0xff]
        %v822 = vld [vmem:[%s492 + $0x38] sm:$0xff]
        %v823 = vld [vmem:[%s492 + $0x40] sm:$0xff]
        %v824 = vld [vmem:[%s492 + $0x48] sm:$0xff]
        %v825 = vld [vmem:[%s492 + $0x50] sm:$0xff]
        %v826 = vld [vmem:[%s492 + $0x58] sm:$0xff]
        %v827 = vld [vmem:[%s492 + $0x60] sm:$0xff]
        %v828 = vld [vmem:[%s492 + $0x68] sm:$0xff]
        %v829 = vld [vmem:[%s492 + $0x70] sm:$0xff]
        %v830 = vld [vmem:[%s492 + $0x78] sm:$0xff]
        %s831 = smul.u32 %s32, 2
        %s832 = scalar_lea.vmem %s5, %s831
        %v833 = vld [vmem:[%s832] sm:$0x3]
        %v835 = vlaneseq
        %v836 = vshrl.u32 %v835, 7
        %v837 = vsub.s32 0, %v836
        %v838 = vrot.slane %v833, %v837
        %v839 = vlaneseq
        %v840 = vshrl.u32 %v839, 7
        %v841 = vsub.s32 1, %v840
        %v842 = vrot.slane %v833, %v841
        %v861 = vunpack.c.l.b16 %v815
        %v862 = vunpack.c.h.b16 %v815
        %v863 = vunpack.c.l.b16 %v816
        %v864 = vunpack.c.h.b16 %v816
        %v865 = vunpack.c.l.b16 %v817
        %v866 = vunpack.c.h.b16 %v817
        %v867 = vunpack.c.l.b16 %v818
        %v868 = vunpack.c.h.b16 %v818
        %v869 = vunpack.c.l.b16 %v819
        %v870 = vunpack.c.h.b16 %v819
        %v871 = vunpack.c.l.b16 %v820
        %v872 = vunpack.c.h.b16 %v820
        %v873 = vunpack.c.l.b16 %v821
        %v874 = vunpack.c.h.b16 %v821
        %v875 = vunpack.c.l.b16 %v822
        %v876 = vunpack.c.h.b16 %v822
        %v877 = vunpack.c.l.b16 %v823
        %v878 = vunpack.c.h.b16 %v823
        %v879 = vunpack.c.l.b16 %v824
        %v880 = vunpack.c.h.b16 %v824
        %v881 = vunpack.c.l.b16 %v825
        %v882 = vunpack.c.h.b16 %v825
        %v883 = vunpack.c.l.b16 %v826
        %v884 = vunpack.c.h.b16 %v826
        %v885 = vunpack.c.l.b16 %v827
        %v886 = vunpack.c.h.b16 %v827
        %v887 = vunpack.c.l.b16 %v828
        %v888 = vunpack.c.h.b16 %v828
        %v889 = vunpack.c.l.b16 %v829
        %v890 = vunpack.c.h.b16 %v829
        %v891 = vunpack.c.l.b16 %v830
        %v892 = vunpack.c.h.b16 %v830
        %v893 = vpack.c.b16 %v863, %v861
        %v894 = vpack.c.b16 %v864, %v862
        %v895 = vpack.c.b16 %v867, %v865
        %v896 = vpack.c.b16 %v868, %v866
        %v897 = vpack.c.b16 %v871, %v869
        %v898 = vpack.c.b16 %v872, %v870
        %v899 = vpack.c.b16 %v875, %v873
        %v900 = vpack.c.b16 %v876, %v874
        %v901 = vpack.c.b16 %v879, %v877
        %v902 = vpack.c.b16 %v880, %v878
        %v903 = vpack.c.b16 %v883, %v881
        %v904 = vpack.c.b16 %v884, %v882
        %v905 = vpack.c.b16 %v887, %v885
        %v906 = vpack.c.b16 %v888, %v886
        %v907 = vpack.c.b16 %v891, %v889
        %v908 = vpack.c.b16 %v892, %v890
        %925 = vmatprep.subr.bf16.mxu0 %v894
        %926 = vmatpush1.bf16.msra.mxu0 %v893
        %927 = vmatprep.subr.bf16.mxu0 %v896
        %928 = vmatpush1.bf16.msra.mxu0 %v895
        %929 = vmatprep.subr.bf16.mxu0 %v898
        %930 = vmatpush1.bf16.msra.mxu0 %v897
        %931 = vmatprep.subr.bf16.mxu0 %v900
        %932 = vmatpush1.bf16.msra.mxu0 %v899
        %933 = vmatprep.subr.bf16.mxu0 %v902
        %934 = vmatpush1.bf16.msra.mxu0 %v901
        %935 = vmatprep.subr.bf16.mxu0 %v904
        %936 = vmatpush1.bf16.msra.mxu0 %v903
        %937 = vmatprep.subr.bf16.mxu0 %v906
        %938 = vmatpush1.bf16.msra.mxu0 %v905
        %939 = vmatprep.subr.bf16.mxu0 %v908
        %940 = vmatpush1.bf16.msra.mxu0 %v907
        %941 = vmatprep.subr.bf16.mxu0 0
        %942 = vmatpush1.bf16.msra.mxu0 0
        %943 = vmatprep.subr.bf16.mxu0 0
        %944 = vmatpush1.bf16.msra.mxu0 0
        %945 = vmatprep.subr.bf16.mxu0 0
        %946 = vmatpush1.bf16.msra.mxu0 0
        %947 = vmatprep.subr.bf16.mxu0 0
        %948 = vmatpush1.bf16.msra.mxu0 0
        %949 = vmatprep.subr.bf16.mxu0 0
        %950 = vmatpush1.bf16.msra.mxu0 0
        %951 = vmatprep.subr.bf16.mxu0 0
        %952 = vmatpush1.bf16.msra.mxu0 0
        %953 = vmatprep.subr.bf16.mxu0 0
        %954 = vmatpush1.bf16.msra.mxu0 0
        %955 = vmatprep.subr.bf16.mxu0 0
        %956 = vmatpush1.bf16.msra.mxu0 0
        %957 = vmatprep.mubr.bf16.mxu0 0
        %958 = vmatmul.mubr.bf16.gmra.mrb[0].mxu0 %v807
        %v959 = vpop.f32.mrb[0].mxu0
        %v960 = vadd.f32 %v838, %v959
        %v961 = vpop.f32.mrb[0].mxu0
        %v962 = vadd.f32 %v842, %v961
        %v963 = vpop.f32.mrb[0].mxu0
        %v964 = vadd.f32 %v838, %v963
        %v965 = vpop.f32.mrb[0].mxu0
        %v966 = vadd.f32 %v842, %v965
        %967 = vmatprep.mubr.bf16.mxu0 0
        %968 = vmatmul.mubr.bf16.gmra.mrb[0].mxu0 %v808
        %v969 = vpop.f32.mrb[0].mxu0
        %v970 = vadd.f32 %v838, %v969
        %v971 = vpop.f32.mrb[0].mxu0
        %v972 = vadd.f32 %v842, %v971
        %v973 = vpop.f32.mrb[0].mxu0
        %v974 = vadd.f32 %v838, %v973
        %v975 = vpop.f32.mrb[0].mxu0
        %v976 = vadd.f32 %v842, %v975
        %977 = vmatprep.mubr.bf16.mxu0 0
        %978 = vmatmul.mubr.bf16.gmra.mrb[0].mxu0 %v809
        %v979 = vpop.f32.mrb[0].mxu0
        %v980 = vadd.f32 %v838, %v979
        %v981 = vpop.f32.mrb[0].mxu0
        %v982 = vadd.f32 %v842, %v981
        %v983 = vpop.f32.mrb[0].mxu0
        %v984 = vadd.f32 %v838, %v983
        %v985 = vpop.f32.mrb[0].mxu0
        %v986 = vadd.f32 %v842, %v985
        %987 = vmatprep.mubr.bf16.mxu0 0
        %988 = vmatmul.mubr.bf16.gmra.mrb[0].mxu0 %v810
        %v989 = vpop.f32.mrb[0].mxu0
        %v990 = vadd.f32 %v838, %v989
        %v991 = vpop.f32.mrb[0].mxu0
        %v992 = vadd.f32 %v842, %v991
        %v993 = vpop.f32.mrb[0].mxu0
        %v994 = vadd.f32 %v838, %v993
        %v995 = vpop.f32.mrb[0].mxu0
        %v996 = vadd.f32 %v842, %v995
        %997 = vmatprep.mubr.bf16.mxu0 0
        %998 = vmatmul.mubr.bf16.gmra.mrb[0].mxu0 %v811
        %v999 = vpop.f32.mrb[0].mxu0
        %v1000 = vadd.f32 %v838, %v999
        %v1001 = vpop.f32.mrb[0].mxu0
        %v1002 = vadd.f32 %v842, %v1001
        %v1003 = vpop.f32.mrb[0].mxu0
        %v1004 = vadd.f32 %v838, %v1003
        %v1005 = vpop.f32.mrb[0].mxu0
        %v1006 = vadd.f32 %v842, %v1005
        %1007 = vmatprep.mubr.bf16.mxu0 0
        %1008 = vmatmul.mubr.bf16.gmra.mrb[0].mxu0 %v812
        %v1009 = vpop.f32.mrb[0].mxu0
        %v1010 = vadd.f32 %v838, %v1009
        %v1011 = vpop.f32.mrb[0].mxu0
        %v1012 = vadd.f32 %v842, %v1011
        %v1013 = vpop.f32.mrb[0].mxu0
        %v1014 = vadd.f32 %v838, %v1013
        %v1015 = vpop.f32.mrb[0].mxu0
        %v1016 = vadd.f32 %v842, %v1015
        %1017 = vmatprep.mubr.bf16.mxu0 0
        %1018 = vmatmul.mubr.bf16.gmra.mrb[0].mxu0 %v813
        %v1019 = vpop.f32.mrb[0].mxu0
        %v1020 = vadd.f32 %v838, %v1019
        %v1021 = vpop.f32.mrb[0].mxu0
        %v1022 = vadd.f32 %v842, %v1021
        %v1023 = vpop.f32.mrb[0].mxu0
        %v1024 = vadd.f32 %v838, %v1023
        %v1025 = vpop.f32.mrb[0].mxu0
        %v1026 = vadd.f32 %v842, %v1025
        %1027 = vmatprep.mubr.bf16.mxu0 0
        %1028 = vmatmul.mubr.bf16.gmra.mrb[0].mxu0 %v814
        %v1029 = vpop.f32.mrb[0].mxu0
        %v1030 = vadd.f32 %v838, %v1029
        %v1031 = vpop.f32.mrb[0].mxu0
        %v1032 = vadd.f32 %v842, %v1031
        %v1033 = vpop.f32.mrb[0].mxu0
        %v1034 = vadd.f32 %v838, %v1033
        %v1035 = vpop.f32.mrb[0].mxu0
        %v1036 = vadd.f32 %v842, %v1035
        %1037 = vdwg.mxu0
        %v1038 = vmax.f32 %v960, 0.0
        %v1039 = vmax.f32 %v962, 0.0
        %v1040 = vmax.f32 %v964, 0.0
        %v1041 = vmax.f32 %v966, 0.0
        %v1042 = vmax.f32 %v970, 0.0
        %v1043 = vmax.f32 %v972, 0.0
        %v1044 = vmax.f32 %v974, 0.0
        %v1045 = vmax.f32 %v976, 0.0
        %v1046 = vmax.f32 %v980, 0.0
        %v1047 = vmax.f32 %v982, 0.0
        %v1048 = vmax.f32 %v984, 0.0
        %v1049 = vmax.f32 %v986, 0.0
        %v1050 = vmax.f32 %v990, 0.0
        %v1051 = vmax.f32 %v992, 0.0
        %v1052 = vmax.f32 %v994, 0.0
        %v1053 = vmax.f32 %v996, 0.0
        %v1054 = vmax.f32 %v1000, 0.0
        %v1055 = vmax.f32 %v1002, 0.0
        %v1056 = vmax.f32 %v1004, 0.0
        %v1057 = vmax.f32 %v1006, 0.0
        %v1058 = vmax.f32 %v1010, 0.0
        %v1059 = vmax.f32 %v1012, 0.0
        %v1060 = vmax.f32 %v1014, 0.0
        %v1061 = vmax.f32 %v1016, 0.0
        %v1062 = vmax.f32 %v1020, 0.0
        %v1063 = vmax.f32 %v1022, 0.0
        %v1064 = vmax.f32 %v1024, 0.0
        %v1065 = vmax.f32 %v1026, 0.0
        %v1066 = vmax.f32 %v1030, 0.0
        %v1067 = vmax.f32 %v1032, 0.0
        %v1068 = vmax.f32 %v1034, 0.0
        %v1069 = vmax.f32 %v1036, 0.0
        %v1070 = vpack.c.bf16 %v1040, %v1038
        %v1071 = vpack.c.bf16 %v1041, %v1039
        %v1072 = vpack.c.bf16 %v1044, %v1042
        %v1073 = vpack.c.bf16 %v1045, %v1043
        %v1074 = vpack.c.bf16 %v1048, %v1046
        %v1075 = vpack.c.bf16 %v1049, %v1047
        %v1076 = vpack.c.bf16 %v1052, %v1050
        %v1077 = vpack.c.bf16 %v1053, %v1051
        %v1078 = vpack.c.bf16 %v1056, %v1054
        %v1079 = vpack.c.bf16 %v1057, %v1055
        %v1080 = vpack.c.bf16 %v1060, %v1058
        %v1081 = vpack.c.bf16 %v1061, %v1059
        %v1082 = vpack.c.bf16 %v1064, %v1062
        %v1083 = vpack.c.bf16 %v1065, %v1063
        %v1084 = vpack.c.bf16 %v1068, %v1066
        %v1085 = vpack.c.bf16 %v1069, %v1067
        %v1086 = vld [vmem:[%s501] sm:$0xf]
        %v1087 = vld [vmem:[%s501 + $0x4] sm:$0xf]
        %v1088 = vld [vmem:[%s501 + $0x8] sm:$0xf]
        %v1089 = vld [vmem:[%s501 + $0xc] sm:$0xf]
        %v1090 = vld [vmem:[%s501 + $0x10] sm:$0xf]
        %v1091 = vld [vmem:[%s501 + $0x14] sm:$0xf]
        %v1092 = vld [vmem:[%s501 + $0x18] sm:$0xf]
        %v1093 = vld [vmem:[%s501 + $0x1c] sm:$0xf]
        %v1094 = vld [vmem:[%s501 + $0x20] sm:$0xf]
        %v1095 = vld [vmem:[%s501 + $0x24] sm:$0xf]
        %v1096 = vld [vmem:[%s501 + $0x28] sm:$0xf]
        %v1097 = vld [vmem:[%s501 + $0x2c] sm:$0xf]
        %v1098 = vld [vmem:[%s501 + $0x30] sm:$0xf]
        %v1099 = vld [vmem:[%s501 + $0x34] sm:$0xf]
        %v1100 = vld [vmem:[%s501 + $0x38] sm:$0xf]
        %v1101 = vld [vmem:[%s501 + $0x3c] sm:$0xf]
        %v1102 = vld [vmem:[%s501 + $0x40] sm:$0xf]
        %v1103 = vld [vmem:[%s501 + $0x44] sm:$0xf]
        %v1104 = vld [vmem:[%s501 + $0x48] sm:$0xf]
        %v1105 = vld [vmem:[%s501 + $0x4c] sm:$0xf]
        %v1106 = vld [vmem:[%s501 + $0x50] sm:$0xf]
        %v1107 = vld [vmem:[%s501 + $0x54] sm:$0xf]
        %v1108 = vld [vmem:[%s501 + $0x58] sm:$0xf]
        %v1109 = vld [vmem:[%s501 + $0x5c] sm:$0xf]
        %v1110 = vld [vmem:[%s501 + $0x60] sm:$0xf]
        %v1111 = vld [vmem:[%s501 + $0x64] sm:$0xf]
        %v1112 = vld [vmem:[%s501 + $0x68] sm:$0xf]
        %v1113 = vld [vmem:[%s501 + $0x6c] sm:$0xf]
        %v1114 = vld [vmem:[%s501 + $0x70] sm:$0xf]
        %v1115 = vld [vmem:[%s501 + $0x74] sm:$0xf]
        %v1116 = vld [vmem:[%s501 + $0x78] sm:$0xf]
        %v1117 = vld [vmem:[%s501 + $0x7c] sm:$0xf]
        %s1118 = scalar_lea.vmem %s6, %s32
        %v1119 = vld [vmem:[%s1118] sm:$0x1]
        %v1121 = vlaneseq
        %v1122 = vshrl.u32 %v1121, 7
        %v1123 = vsub.s32 0, %v1122
        %v1124 = vrot.slane %v1119, %v1123
        %v1158 = vunpack.c.l.b16 %v1086
        %v1159 = vunpack.c.l.b16 %v1087
        %v1160 = vunpack.c.l.b16 %v1088
        %v1161 = vunpack.c.l.b16 %v1089
        %v1162 = vunpack.c.l.b16 %v1090
        %v1163 = vunpack.c.l.b16 %v1091
        %v1164 = vunpack.c.l.b16 %v1092
        %v1165 = vunpack.c.l.b16 %v1093
        %v1166 = vunpack.c.l.b16 %v1094
        %v1167 = vunpack.c.l.b16 %v1095
        %v1168 = vunpack.c.l.b16 %v1096
        %v1169 = vunpack.c.l.b16 %v1097
        %v1170 = vunpack.c.l.b16 %v1098
        %v1171 = vunpack.c.l.b16 %v1099
        %v1172 = vunpack.c.l.b16 %v1100
        %v1173 = vunpack.c.l.b16 %v1101
        %v1174 = vunpack.c.l.b16 %v1102
        %v1175 = vunpack.c.l.b16 %v1103
        %v1176 = vunpack.c.l.b16 %v1104
        %v1177 = vunpack.c.l.b16 %v1105
        %v1178 = vunpack.c.l.b16 %v1106
        %v1179 = vunpack.c.l.b16 %v1107
        %v1180 = vunpack.c.l.b16 %v1108
        %v1181 = vunpack.c.l.b16 %v1109
        %v1182 = vunpack.c.l.b16 %v1110
        %v1183 = vunpack.c.l.b16 %v1111
        %v1184 = vunpack.c.l.b16 %v1112
        %v1185 = vunpack.c.l.b16 %v1113
        %v1186 = vunpack.c.l.b16 %v1114
        %v1187 = vunpack.c.l.b16 %v1115
        %v1188 = vunpack.c.l.b16 %v1116
        %v1189 = vunpack.c.l.b16 %v1117
        %v1190 = vpack.c.b16 %v1159, %v1158
        %v1191 = vpack.c.b16 %v1161, %v1160
        %v1192 = vpack.c.b16 %v1163, %v1162
        %v1193 = vpack.c.b16 %v1165, %v1164
        %v1194 = vpack.c.b16 %v1167, %v1166
        %v1195 = vpack.c.b16 %v1169, %v1168
        %v1196 = vpack.c.b16 %v1171, %v1170
        %v1197 = vpack.c.b16 %v1173, %v1172
        %v1198 = vpack.c.b16 %v1175, %v1174
        %v1199 = vpack.c.b16 %v1177, %v1176
        %v1200 = vpack.c.b16 %v1179, %v1178
        %v1201 = vpack.c.b16 %v1181, %v1180
        %v1202 = vpack.c.b16 %v1183, %v1182
        %v1203 = vpack.c.b16 %v1185, %v1184
        %v1204 = vpack.c.b16 %v1187, %v1186
        %v1205 = vpack.c.b16 %v1189, %v1188
        %1222 = vmatprep.subr.bf16.mxu0 0
        %1223 = vmatpush1.bf16.msra.mxu0 %v1190
        %1224 = vmatprep.subr.bf16.mxu0 0
        %1225 = vmatpush1.bf16.msra.mxu0 %v1191
        %1226 = vmatprep.subr.bf16.mxu0 0
        %1227 = vmatpush1.bf16.msra.mxu0 %v1192
        %1228 = vmatprep.subr.bf16.mxu0 0
        %1229 = vmatpush1.bf16.msra.mxu0 %v1193
        %1230 = vmatprep.subr.bf16.mxu0 0
        %1231 = vmatpush1.bf16.msra.mxu0 %v1194
        %1232 = vmatprep.subr.bf16.mxu0 0
        %1233 = vmatpush1.bf16.msra.mxu0 %v1195
        %1234 = vmatprep.subr.bf16.mxu0 0
        %1235 = vmatpush1.bf16.msra.mxu0 %v1196
        %1236 = vmatprep.subr.bf16.mxu0 0
        %1237 = vmatpush1.bf16.msra.mxu0 %v1197
        %1238 = vmatprep.subr.bf16.mxu0 0
        %1239 = vmatpush1.bf16.msra.mxu0 %v1198
        %1240 = vmatprep.subr.bf16.mxu0 0
        %1241 = vmatpush1.bf16.msra.mxu0 %v1199
        %1242 = vmatprep.subr.bf16.mxu0 0
        %1243 = vmatpush1.bf16.msra.mxu0 %v1200
        %1244 = vmatprep.subr.bf16.mxu0 0
        %1245 = vmatpush1.bf16.msra.mxu0 %v1201
        %1246 = vmatprep.subr.bf16.mxu0 0
        %1247 = vmatpush1.bf16.msra.mxu0 %v1202
        %1248 = vmatprep.subr.bf16.mxu0 0
        %1249 = vmatpush1.bf16.msra.mxu0 %v1203
        %1250 = vmatprep.subr.bf16.mxu0 0
        %1251 = vmatpush1.bf16.msra.mxu0 %v1204
        %1252 = vmatprep.subr.bf16.mxu0 0
        %1253 = vmatpush1.bf16.msra.mxu0 %v1205
        %1254 = vmatprep.mubr.bf16.mxu0 %v1071
        %1255 = vmatmul.mubr.bf16.gmra.mrb[0].mxu0 %v1070
        %v1256 = vpop.f32.mrb[0].mxu0
        %v1257 = vadd.f32 %v1124, %v1256
        %v1258 = vpop.f32.mrb[0].mxu0
        %v1259 = vpop.f32.mrb[0].mxu0
        %v1260 = vadd.f32 %v1124, %v1259
        %v1261 = vpop.f32.mrb[0].mxu0
        %1262 = vmatprep.mubr.bf16.mxu0 %v1073
        %1263 = vmatmul.mubr.bf16.gmra.mrb[0].mxu0 %v1072
        %v1264 = vpop.f32.mrb[0].mxu0
        %v1265 = vadd.f32 %v1124, %v1264
        %v1266 = vpop.f32.mrb[0].mxu0
        %v1267 = vpop.f32.mrb[0].mxu0
        %v1268 = vadd.f32 %v1124, %v1267
        %v1269 = vpop.f32.mrb[0].mxu0
        %1270 = vmatprep.mubr.bf16.mxu0 %v1075
        %1271 = vmatmul.mubr.bf16.gmra.mrb[0].mxu0 %v1074
        %v1272 = vpop.f32.mrb[0].mxu0
        %v1273 = vadd.f32 %v1124, %v1272
        %v1274 = vpop.f32.mrb[0].mxu0
        %v1275 = vpop.f32.mrb[0].mxu0
        %v1276 = vadd.f32 %v1124, %v1275
        %v1277 = vpop.f32.mrb[0].mxu0
        %1278 = vmatprep.mubr.bf16.mxu0 %v1077
        %1279 = vmatmul.mubr.bf16.gmra.mrb[0].mxu0 %v1076
        %v1280 = vpop.f32.mrb[0].mxu0
        %v1281 = vadd.f32 %v1124, %v1280
        %v1282 = vpop.f32.mrb[0].mxu0
        %v1283 = vpop.f32.mrb[0].mxu0
        %v1284 = vadd.f32 %v1124, %v1283
        %v1285 = vpop.f32.mrb[0].mxu0
        %1286 = vmatprep.mubr.bf16.mxu0 %v1079
        %1287 = vmatmul.mubr.bf16.gmra.mrb[0].mxu0 %v1078
        %v1288 = vpop.f32.mrb[0].mxu0
        %v1289 = vadd.f32 %v1124, %v1288
        %v1290 = vpop.f32.mrb[0].mxu0
        %v1291 = vpop.f32.mrb[0].mxu0
        %v1292 = vadd.f32 %v1124, %v1291
        %v1293 = vpop.f32.mrb[0].mxu0
        %1294 = vmatprep.mubr.bf16.mxu0 %v1081
        %1295 = vmatmul.mubr.bf16.gmra.mrb[0].mxu0 %v1080
        %v1296 = vpop.f32.mrb[0].mxu0
        %v1297 = vadd.f32 %v1124, %v1296
        %v1298 = vpop.f32.mrb[0].mxu0
        %v1299 = vpop.f32.mrb[0].mxu0
        %v1300 = vadd.f32 %v1124, %v1299
        %v1301 = vpop.f32.mrb[0].mxu0
        %1302 = vmatprep.mubr.bf16.mxu0 %v1083
        %1303 = vmatmul.mubr.bf16.gmra.mrb[0].mxu0 %v1082
        %v1304 = vpop.f32.mrb[0].mxu0
        %v1305 = vadd.f32 %v1124, %v1304
        %v1306 = vpop.f32.mrb[0].mxu0
        %v1307 = vpop.f32.mrb[0].mxu0
        %v1308 = vadd.f32 %v1124, %v1307
        %v1309 = vpop.f32.mrb[0].mxu0
        %1310 = vmatprep.mubr.bf16.mxu0 %v1085
        %1311 = vmatmul.mubr.bf16.gmra.mrb[0].mxu0 %v1084
        %v1312 = vpop.f32.mrb[0].mxu0
        %v1313 = vadd.f32 %v1124, %v1312
        %v1314 = vpop.f32.mrb[0].mxu0
        %v1315 = vpop.f32.mrb[0].mxu0
        %v1316 = vadd.f32 %v1124, %v1315
        %v1317 = vpop.f32.mrb[0].mxu0
        %1318 = vdwg.mxu0
        %v1319 = vld [vmem:[%s9] sm:$0xff]
        %v1320 = vld [vmem:[%s9 + $0x8] sm:$0xff]
        %v1321 = vld [vmem:[%s9 + $0x10] sm:$0xff]
        %v1322 = vld [vmem:[%s9 + $0x18] sm:$0xff]
        %v1323 = vld [vmem:[%s9 + $0x20] sm:$0xff]
        %v1324 = vld [vmem:[%s9 + $0x28] sm:$0xff]
        %v1325 = vld [vmem:[%s9 + $0x30] sm:$0xff]
        %v1326 = vld [vmem:[%s9 + $0x38] sm:$0xff]
        %v1327 = vld [vmem:[%s9 + $0x40] sm:$0xff]
        %v1328 = vld [vmem:[%s9 + $0x48] sm:$0xff]
        %v1329 = vld [vmem:[%s9 + $0x50] sm:$0xff]
        %v1330 = vld [vmem:[%s9 + $0x58] sm:$0xff]
        %v1331 = vld [vmem:[%s9 + $0x60] sm:$0xff]
        %v1332 = vld [vmem:[%s9 + $0x68] sm:$0xff]
        %v1333 = vld [vmem:[%s9 + $0x70] sm:$0xff]
        %v1334 = vld [vmem:[%s9 + $0x78] sm:$0xff]
        %1336 = vset.pattern.permute.xlu0 0
        %1337 = vperm.xlu0 %1336, %v1319
        %v1338 = vpop.permute.xlu0 %1337
        %1341 = vset.pattern.permute.xlu0 0
        %1342 = vperm.xlu0 %1341, %v1320
        %v1343 = vpop.permute.xlu0 %1342
        %1346 = vset.pattern.permute.xlu0 0
        %1347 = vperm.xlu0 %1346, %v1321
        %v1348 = vpop.permute.xlu0 %1347
        %1351 = vset.pattern.permute.xlu0 0
        %1352 = vperm.xlu0 %1351, %v1322
        %v1353 = vpop.permute.xlu0 %1352
        %1356 = vset.pattern.permute.xlu0 0
        %1357 = vperm.xlu0 %1356, %v1323
        %v1358 = vpop.permute.xlu0 %1357
        %1361 = vset.pattern.permute.xlu0 0
        %1362 = vperm.xlu0 %1361, %v1324
        %v1363 = vpop.permute.xlu0 %1362
        %1366 = vset.pattern.permute.xlu0 0
        %1367 = vperm.xlu0 %1366, %v1325
        %v1368 = vpop.permute.xlu0 %1367
        %1371 = vset.pattern.permute.xlu0 0
        %1372 = vperm.xlu0 %1371, %v1326
        %v1373 = vpop.permute.xlu0 %1372
        %1376 = vset.pattern.permute.xlu0 0
        %1377 = vperm.xlu0 %1376, %v1327
        %v1378 = vpop.permute.xlu0 %1377
        %1381 = vset.pattern.permute.xlu0 0
        %1382 = vperm.xlu0 %1381, %v1328
        %v1383 = vpop.permute.xlu0 %1382
        %1386 = vset.pattern.permute.xlu0 0
        %1387 = vperm.xlu0 %1386, %v1329
        %v1388 = vpop.permute.xlu0 %1387
        %1391 = vset.pattern.permute.xlu0 0
        %1392 = vperm.xlu0 %1391, %v1330
        %v1393 = vpop.permute.xlu0 %1392
        %1396 = vset.pattern.permute.xlu0 0
        %1397 = vperm.xlu0 %1396, %v1331
        %v1398 = vpop.permute.xlu0 %1397
        %1401 = vset.pattern.permute.xlu0 0
        %1402 = vperm.xlu0 %1401, %v1332
        %v1403 = vpop.permute.xlu0 %1402
        %1406 = vset.pattern.permute.xlu0 0
        %1407 = vperm.xlu0 %1406, %v1333
        %v1408 = vpop.permute.xlu0 %1407
        %1411 = vset.pattern.permute.xlu0 0
        %1412 = vperm.xlu0 %1411, %v1334
        %v1413 = vpop.permute.xlu0 %1412
        %v1415 = vmul.f32 %v1257, %v1338
        %v1416 = vmul.f32 %v1260, %v1343
        %v1417 = vmul.f32 %v1265, %v1348
        %v1418 = vmul.f32 %v1268, %v1353
        %v1419 = vmul.f32 %v1273, %v1358
        %v1420 = vmul.f32 %v1276, %v1363
        %v1421 = vmul.f32 %v1281, %v1368
        %v1422 = vmul.f32 %v1284, %v1373
        %v1423 = vmul.f32 %v1289, %v1378
        %v1424 = vmul.f32 %v1292, %v1383
        %v1425 = vmul.f32 %v1297, %v1388
        %v1426 = vmul.f32 %v1300, %v1393
        %v1427 = vmul.f32 %v1305, %v1398
        %v1428 = vmul.f32 %v1308, %v1403
        %v1429 = vmul.f32 %v1313, %v1408
        %v1430 = vmul.f32 %v1316, %v1413
        %v1431 = vadd.f32 %v1415, %v1416
        %v1432 = vadd.f32 %v1431, %v1417
        %v1433 = vadd.f32 %v1432, %v1418
        %v1434 = vadd.f32 %v1433, %v1419
        %v1435 = vadd.f32 %v1434, %v1420
        %v1436 = vadd.f32 %v1435, %v1421
        %v1437 = vadd.f32 %v1436, %v1422
        %v1438 = vadd.f32 %v1437, %v1423
        %v1439 = vadd.f32 %v1438, %v1424
        %v1440 = vadd.f32 %v1439, %v1425
        %v1441 = vadd.f32 %v1440, %v1426
        %v1442 = vadd.f32 %v1441, %v1427
        %v1443 = vadd.f32 %v1442, %v1428
        %v1444 = vadd.f32 %v1443, %v1429
        %v1445 = vadd.f32 %v1444, %v1430
        %v1446 = vrot.slane %v1445, 4
        %v1447 = vadd.f32 %v1445, %v1446
        %v1448 = vrot.slane %v1447, 2
        %v1449 = vadd.f32 %v1447, %v1448
        %v1450 = vrot.slane %v1449, 1
        %v1451 = vadd.f32 %v1449, %v1450
        %v1452 = vsub.f32 %v1257, %v1451
        %v1453 = vsub.f32 %v1260, %v1451
        %v1454 = vsub.f32 %v1265, %v1451
        %v1455 = vsub.f32 %v1268, %v1451
        %v1456 = vsub.f32 %v1273, %v1451
        %v1457 = vsub.f32 %v1276, %v1451
        %v1458 = vsub.f32 %v1281, %v1451
        %v1459 = vsub.f32 %v1284, %v1451
        %v1460 = vsub.f32 %v1289, %v1451
        %v1461 = vsub.f32 %v1292, %v1451
        %v1462 = vsub.f32 %v1297, %v1451
        %v1463 = vsub.f32 %v1300, %v1451
        %v1464 = vsub.f32 %v1305, %v1451
        %v1465 = vsub.f32 %v1308, %v1451
        %v1466 = vsub.f32 %v1313, %v1451
        %v1467 = vsub.f32 %v1316, %v1451
        %v1468 = vmul.f32 %v1452, %v1452
        %v1469 = vmul.f32 %v1453, %v1453
        %v1470 = vmul.f32 %v1454, %v1454
        %v1471 = vmul.f32 %v1455, %v1455
        %v1472 = vmul.f32 %v1456, %v1456
        %v1473 = vmul.f32 %v1457, %v1457
        %v1474 = vmul.f32 %v1458, %v1458
        %v1475 = vmul.f32 %v1459, %v1459
        %v1476 = vmul.f32 %v1460, %v1460
        %v1477 = vmul.f32 %v1461, %v1461
        %v1478 = vmul.f32 %v1462, %v1462
        %v1479 = vmul.f32 %v1463, %v1463
        %v1480 = vmul.f32 %v1464, %v1464
        %v1481 = vmul.f32 %v1465, %v1465
        %v1482 = vmul.f32 %v1466, %v1466
        %v1483 = vmul.f32 %v1467, %v1467
        %v1484 = vmul.f32 %v1468, %v1338
        %v1485 = vmul.f32 %v1469, %v1343
        %v1486 = vmul.f32 %v1470, %v1348
        %v1487 = vmul.f32 %v1471, %v1353
        %v1488 = vmul.f32 %v1472, %v1358
        %v1489 = vmul.f32 %v1473, %v1363
        %v1490 = vmul.f32 %v1474, %v1368
        %v1491 = vmul.f32 %v1475, %v1373
        %v1492 = vmul.f32 %v1476, %v1378
        %v1493 = vmul.f32 %v1477, %v1383
        %v1494 = vmul.f32 %v1478, %v1388
        %v1495 = vmul.f32 %v1479, %v1393
        %v1496 = vmul.f32 %v1480, %v1398
        %v1497 = vmul.f32 %v1481, %v1403
        %v1498 = vmul.f32 %v1482, %v1408
        %v1499 = vmul.f32 %v1483, %v1413
        %v1500 = vadd.f32 %v1484, %v1485
        %v1501 = vadd.f32 %v1500, %v1486
        %v1502 = vadd.f32 %v1501, %v1487
        %v1503 = vadd.f32 %v1502, %v1488
        %v1504 = vadd.f32 %v1503, %v1489
        %v1505 = vadd.f32 %v1504, %v1490
        %v1506 = vadd.f32 %v1505, %v1491
        %v1507 = vadd.f32 %v1506, %v1492
        %v1508 = vadd.f32 %v1507, %v1493
        %v1509 = vadd.f32 %v1508, %v1494
        %v1510 = vadd.f32 %v1509, %v1495
        %v1511 = vadd.f32 %v1510, %v1496
        %v1512 = vadd.f32 %v1511, %v1497
        %v1513 = vadd.f32 %v1512, %v1498
        %v1514 = vadd.f32 %v1513, %v1499
        %v1515 = vrot.slane %v1514, 4
        %v1516 = vadd.f32 %v1514, %v1515
        %v1517 = vrot.slane %v1516, 2
        %v1518 = vadd.f32 %v1516, %v1517
        %v1519 = vrot.slane %v1518, 1
        %v1520 = vadd.f32 %v1518, %v1519
        %s1521 = scalar_lea.vmem %s7, %s32
        %v1522 = vld [vmem:[%s1521] sm:$0x1]
        %v1524 = vlaneseq
        %v1525 = vshrl.u32 %v1524, 7
        %v1526 = vsub.s32 0, %v1525
        %v1527 = vrot.slane %v1522, %v1526
        %v1529 = vmul.f32 %v1527, %v1452
        %v1530 = vmul.f32 %v1527, %v1453
        %v1531 = vmul.f32 %v1527, %v1454
        %v1532 = vmul.f32 %v1527, %v1455
        %v1533 = vmul.f32 %v1527, %v1456
        %v1534 = vmul.f32 %v1527, %v1457
        %v1535 = vmul.f32 %v1527, %v1458
        %v1536 = vmul.f32 %v1527, %v1459
        %v1537 = vmul.f32 %v1527, %v1460
        %v1538 = vmul.f32 %v1527, %v1461
        %v1539 = vmul.f32 %v1527, %v1462
        %v1540 = vmul.f32 %v1527, %v1463
        %v1541 = vmul.f32 %v1527, %v1464
        %v1542 = vmul.f32 %v1527, %v1465
        %v1543 = vmul.f32 %v1527, %v1466
        %v1544 = vmul.f32 %v1527, %v1467
        %v1545 = vadd.f32 %v1520, 1e-05
        %v1546 = vrsqrt.pop %v1545
        %v1547 = vmul.f32 %v1529, %v1546
        %v1548 = vmul.f32 %v1530, %v1546
        %v1549 = vmul.f32 %v1531, %v1546
        %v1550 = vmul.f32 %v1532, %v1546
        %v1551 = vmul.f32 %v1533, %v1546
        %v1552 = vmul.f32 %v1534, %v1546
        %v1553 = vmul.f32 %v1535, %v1546
        %v1554 = vmul.f32 %v1536, %v1546
        %v1555 = vmul.f32 %v1537, %v1546
        %v1556 = vmul.f32 %v1538, %v1546
        %v1557 = vmul.f32 %v1539, %v1546
        %v1558 = vmul.f32 %v1540, %v1546
        %v1559 = vmul.f32 %v1541, %v1546
        %v1560 = vmul.f32 %v1542, %v1546
        %v1561 = vmul.f32 %v1543, %v1546
        %v1562 = vmul.f32 %v1544, %v1546
        %s1563 = scalar_lea.vmem %s8, %s32
        %v1564 = vld [vmem:[%s1563] sm:$0x1]
        %v1566 = vlaneseq
        %v1567 = vshrl.u32 %v1566, 7
        %v1568 = vsub.s32 0, %v1567
        %v1569 = vrot.slane %v1564, %v1568
        %v1571 = vadd.f32 %v1547, %v1569
        %v1572 = vadd.f32 %v1548, %v1569
        %v1573 = vadd.f32 %v1549, %v1569
        %v1574 = vadd.f32 %v1550, %v1569
        %v1575 = vadd.f32 %v1551, %v1569
        %v1576 = vadd.f32 %v1552, %v1569
        %v1577 = vadd.f32 %v1553, %v1569
        %v1578 = vadd.f32 %v1554, %v1569
        %v1579 = vadd.f32 %v1555, %v1569
        %v1580 = vadd.f32 %v1556, %v1569
        %v1581 = vadd.f32 %v1557, %v1569
        %v1582 = vadd.f32 %v1558, %v1569
        %v1583 = vadd.f32 %v1559, %v1569
        %v1584 = vadd.f32 %v1560, %v1569
        %v1585 = vadd.f32 %v1561, %v1569
        %v1586 = vadd.f32 %v1562, %v1569
        %p1587 = scmp.ne.s32.totalorder %s32, 1
        // Predicated region
        $region97: #{tpu_custom_call.1} parent=71 // pred_check
          %p1588 = pneg %p1587
        $region98: #{tpu_custom_call.1} parent=71 // pred_check_branch
          %1590 = sbr.rel (%p1588) target = $region100
        $region99: #{tpu_custom_call.1} parent=71 // pred_region
          %v1591 = vmax.f32 %v1571, 0.0
          %v1592 = vmax.f32 %v1572, 0.0
          %v1593 = vmax.f32 %v1573, 0.0
          %v1594 = vmax.f32 %v1574, 0.0
          %v1595 = vmax.f32 %v1575, 0.0
          %v1596 = vmax.f32 %v1576, 0.0
          %v1597 = vmax.f32 %v1577, 0.0
          %v1598 = vmax.f32 %v1578, 0.0
          %v1599 = vmax.f32 %v1579, 0.0
          %v1600 = vmax.f32 %v1580, 0.0
          %v1601 = vmax.f32 %v1581, 0.0
          %v1602 = vmax.f32 %v1582, 0.0
          %v1603 = vmax.f32 %v1583, 0.0
          %v1604 = vmax.f32 %v1584, 0.0
          %v1605 = vmax.f32 %v1585, 0.0
          %v1606 = vmax.f32 %v1586, 0.0
          %1607 = vst [vmem:[#allocation2] sm:$0xff] %v1591
          %1608 = vst [vmem:[#allocation2 + $0x8] sm:$0xff] %v1592
          %1609 = vst [vmem:[#allocation2 + $0x10] sm:$0xff] %v1593
          %1610 = vst [vmem:[#allocation2 + $0x18] sm:$0xff] %v1594
          %1611 = vst [vmem:[#allocation2 + $0x20] sm:$0xff] %v1595
          %1612 = vst [vmem:[#allocation2 + $0x28] sm:$0xff] %v1596
          %1613 = vst [vmem:[#allocation2 + $0x30] sm:$0xff] %v1597
          %1614 = vst [vmem:[#allocation2 + $0x38] sm:$0xff] %v1598
          %1615 = vst [vmem:[#allocation2 + $0x40] sm:$0xff] %v1599
          %1616 = vst [vmem:[#allocation2 + $0x48] sm:$0xff] %v1600
          %1617 = vst [vmem:[#allocation2 + $0x50] sm:$0xff] %v1601
          %1618 = vst [vmem:[#allocation2 + $0x58] sm:$0xff] %v1602
          %1619 = vst [vmem:[#allocation2 + $0x60] sm:$0xff] %v1603
          %1620 = vst [vmem:[#allocation2 + $0x68] sm:$0xff] %v1604
          %1621 = vst [vmem:[#allocation2 + $0x70] sm:$0xff] %v1605
          %1622 = vst [vmem:[#allocation2 + $0x78] sm:$0xff] %v1606
        $region100: #{tpu_custom_call.1} parent=71 // pred_fallthru
          _
        %p1623 = scmp.eq.s32.totalorder %s32, 1
        // Predicated region
        $region101: #{tpu_custom_call.1} parent=71 // pred_check
          %p1624 = pneg %p1623
        $region102: #{tpu_custom_call.1} parent=71 // pred_check_branch
          %1626 = sbr.rel (%p1624) target = $region104
        $region103: #{tpu_custom_call.1} parent=71 // pred_region
          %v1627 = vld [vmem:[%s10] sm:$0x1]
          %v1628 = vpack.c.bf16 %v1572, %v1571
          %v1629 = vpack.c.bf16 %v1574, %v1573
          %v1630 = vpack.c.bf16 %v1576, %v1575
          %v1631 = vpack.c.bf16 %v1578, %v1577
          %v1632 = vpack.c.bf16 %v1580, %v1579
          %v1633 = vpack.c.bf16 %v1582, %v1581
          %v1634 = vpack.c.bf16 %v1584, %v1583
          %v1635 = vpack.c.bf16 %v1586, %v1585
          %1636 = vmatprep.subr.bf16.mxu0 0
          %1637 = vmatpush1.bf16.msra.mxu0 %v1628
          %1638 = vmatprep.subr.bf16.mxu0 0
          %1639 = vmatpush1.bf16.msra.mxu0 %v1629
          %1640 = vmatprep.subr.bf16.mxu0 0
          %1641 = vmatpush1.bf16.msra.mxu0 %v1630
          %1642 = vmatprep.subr.bf16.mxu0 0
          %1643 = vmatpush1.bf16.msra.mxu0 %v1631
          %1644 = vmatprep.subr.bf16.mxu0 0
          %1645 = vmatpush1.bf16.msra.mxu0 %v1632
          %1646 = vmatprep.subr.bf16.mxu0 0
          %1647 = vmatpush1.bf16.msra.mxu0 %v1633
          %1648 = vmatprep.subr.bf16.mxu0 0
          %1649 = vmatpush1.bf16.msra.mxu0 %v1634
          %1650 = vmatprep.subr.bf16.mxu0 0
          %1651 = vmatpush1.bf16.msra.mxu0 %v1635
          %1652 = vmatprep.subr.bf16.mxu0 0
          %1653 = vmatpush1.bf16.msra.mxu0 0
          %1654 = vmatprep.subr.bf16.mxu0 0
          %1655 = vmatpush1.bf16.msra.mxu0 0
          %1656 = vmatprep.subr.bf16.mxu0 0
          %1657 = vmatpush1.bf16.msra.mxu0 0
          %1658 = vmatprep.subr.bf16.mxu0 0
          %1659 = vmatpush1.bf16.msra.mxu0 0
          %1660 = vmatprep.subr.bf16.mxu0 0
          %1661 = vmatpush1.bf16.msra.mxu0 0
          %1662 = vmatprep.subr.bf16.mxu0 0
          %1663 = vmatpush1.bf16.msra.mxu0 0
          %1664 = vmatprep.subr.bf16.mxu0 0
          %1665 = vmatpush1.bf16.msra.mxu0 0
          %1666 = vmatprep.subr.bf16.mxu0 0
          %1667 = vmatpush1.bf16.msra.mxu0 0
          %1668 = vmatprep.mubr.bf16.mxu0 0
          %1669 = vmatmul.mubr.bf16.gmra.mrb[0].mxu0 %v1627
          %v1670 = vpop.f32.mrb[0].mxu0
          %v1671 = vadd.f32 0.0, %v1670
          %v1672 = vpop.f32.mrb[0].mxu0
          %v1673 = vpop.f32.mrb[0].mxu0
          %v1674 = vpop.f32.mrb[0].mxu0
          %1675 = vdwg.mxu0
          %v1676 = vpack.c.bf16 %v1671, %v1671
          %v1677 = vld [vmem:[#allocation11] sm:$0xf]
          %v1678 = vld [vmem:[#allocation11 + $0x4] sm:$0xf]
          %v1679 = vld [vmem:[#allocation11 + $0x8] sm:$0xf]
          %v1680 = vld [vmem:[#allocation11 + $0xc] sm:$0xf]
          %v1681 = vld [vmem:[#allocation11 + $0x10] sm:$0xf]
          %v1682 = vld [vmem:[#allocation11 + $0x14] sm:$0xf]
          %v1683 = vld [vmem:[#allocation11 + $0x18] sm:$0xf]
          %v1684 = vld [vmem:[#allocation11 + $0x1c] sm:$0xf]
          %v1685 = vld [vmem:[#allocation11 + $0x20] sm:$0xf]
          %v1686 = vld [vmem:[#allocation11 + $0x24] sm:$0xf]
          %v1687 = vld [vmem:[#allocation11 + $0x28] sm:$0xf]
          %v1688 = vld [vmem:[#allocation11 + $0x2c] sm:$0xf]
          %v1689 = vld [vmem:[#allocation11 + $0x30] sm:$0xf]
          %v1690 = vld [vmem:[#allocation11 + $0x34] sm:$0xf]
          %v1691 = vld [vmem:[#allocation11 + $0x38] sm:$0xf]
          %v1692 = vld [vmem:[#allocation11 + $0x3c] sm:$0xf]
          %v1693 = vld [vmem:[%s12] sm:$0x1]
          %v1695 = vlaneseq
          %v1696 = vshrl.u32 %v1695, 7
          %v1697 = vsub.s32 0, %v1696
          %v1698 = vrot.slane %v1693, %v1697
          %v1716 = vunpack.c.l.b16 %v1677
          %v1717 = vunpack.c.l.b16 %v1678
          %v1718 = vunpack.c.l.b16 %v1679
          %v1719 = vunpack.c.l.b16 %v1680
          %v1720 = vunpack.c.l.b16 %v1681
          %v1721 = vunpack.c.l.b16 %v1682
          %v1722 = vunpack.c.l.b16 %v1683
          %v1723 = vunpack.c.l.b16 %v1684
          %v1724 = vunpack.c.l.b16 %v1685
          %v1725 = vunpack.c.l.b16 %v1686
          %v1726 = vunpack.c.l.b16 %v1687
          %v1727 = vunpack.c.l.b16 %v1688
          %v1728 = vunpack.c.l.b16 %v1689
          %v1729 = vunpack.c.l.b16 %v1690
          %v1730 = vunpack.c.l.b16 %v1691
          %v1731 = vunpack.c.l.b16 %v1692
          %v1732 = vpack.c.b16 %v1717, %v1716
          %v1733 = vpack.c.b16 %v1719, %v1718
          %v1734 = vpack.c.b16 %v1721, %v1720
          %v1735 = vpack.c.b16 %v1723, %v1722
          %v1736 = vpack.c.b16 %v1725, %v1724
          %v1737 = vpack.c.b16 %v1727, %v1726
          %v1738 = vpack.c.b16 %v1729, %v1728
          %v1739 = vpack.c.b16 %v1731, %v1730
          %1748 = vmatprep.subr.bf16.mxu0 0
          %1749 = vmatpush1.bf16.msra.mxu0 %v1732
          %1750 = vmatprep.subr.bf16.mxu0 0
          %1751 = vmatpush1.bf16.msra.mxu0 %v1733
          %1752 = vmatprep.subr.bf16.mxu0 0
          %1753 = vmatpush1.bf16.msra.mxu0 %v1734
          %1754 = vmatprep.subr.bf16.mxu0 0
          %1755 = vmatpush1.bf16.msra.mxu0 %v1735
          %1756 = vmatprep.subr.bf16.mxu0 0
          %1757 = vmatpush1.bf16.msra.mxu0 %v1736
          %1758 = vmatprep.subr.bf16.mxu0 0
          %1759 = vmatpush1.bf16.msra.mxu0 %v1737
          %1760 = vmatprep.subr.bf16.mxu0 0
          %1761 = vmatpush1.bf16.msra.mxu0 %v1738
          %1762 = vmatprep.subr.bf16.mxu0 0
          %1763 = vmatpush1.bf16.msra.mxu0 %v1739
          %1764 = vmatprep.subr.bf16.mxu0 0
          %1765 = vmatpush1.bf16.msra.mxu0 0
          %1766 = vmatprep.subr.bf16.mxu0 0
          %1767 = vmatpush1.bf16.msra.mxu0 0
          %1768 = vmatprep.subr.bf16.mxu0 0
          %1769 = vmatpush1.bf16.msra.mxu0 0
          %1770 = vmatprep.subr.bf16.mxu0 0
          %1771 = vmatpush1.bf16.msra.mxu0 0
          %1772 = vmatprep.subr.bf16.mxu0 0
          %1773 = vmatpush1.bf16.msra.mxu0 0
          %1774 = vmatprep.subr.bf16.mxu0 0
          %1775 = vmatpush1.bf16.msra.mxu0 0
          %1776 = vmatprep.subr.bf16.mxu0 0
          %1777 = vmatpush1.bf16.msra.mxu0 0
          %1778 = vmatprep.subr.bf16.mxu0 0
          %1779 = vmatpush1.bf16.msra.mxu0 0
          %1780 = vmatprep.mubr.bf16.mxu0 0
          %1781 = vmatmul.mubr.bf16.gmra.mrb[0].mxu0 %v1676
          %v1782 = vpop.f32.mrb[0].mxu0
          %v1783 = vadd.f32 %v1698, %v1782
          %v1784 = vpop.f32.mrb[0].mxu0
          %v1785 = vpop.f32.mrb[0].mxu0
          %v1786 = vpop.f32.mrb[0].mxu0
          %1787 = vdwg.mxu0
          %1788 = vst [vmem:[#allocation12] sm:$0x3] %v1783
        $region104: #{tpu_custom_call.1} parent=71 // pred_fallthru
          _
        // Predicated region
        $region105: #{tpu_custom_call.1} parent=71 // pred_check
          %p1789 = pneg %p333
        $region106: #{tpu_custom_call.1} parent=71 // pred_check_branch
          %1791 = sbr.rel (%p1789) target = $region108
        $region107: #{tpu_custom_call.1} parent=71 // pred_region
          %s1793 = ssub.s32 32, 32
          %1794 = vsyncadd [#allocation5], %s1793
          %s1796 = sshll.u32 [#allocation12], 4
          %s1797 = int_to_ptr.vmem [resolvable:$true] %s1796
          %1799 = dma.vmem_to_hbm [thread:$0]  %s1797, 32, %s13, [#allocation5]
        $region108: #{tpu_custom_call.1} parent=71 // pred_fallthru
          _
        // Predicated region
        $region109: #{tpu_custom_call.1} parent=71 // pred_check
          %p1800 = pneg %p333
        $region110: #{tpu_custom_call.1} parent=71 // pred_check_branch
          %1802 = sbr.rel (%p1800) target = $region112
        $region111: #{tpu_custom_call.1} parent=71 // pred_region
          %1803 = dma.done [#allocation5], 32
        $region112: #{tpu_custom_call.1} parent=71 // pred_fallthru
          _
      $region72: #{tpu_custom_call.1} parent=5 // pred_fallthru
        _
      %p1804 = scmp.le.s32.totalorder 2, %s27
      // Predicated region
      $region113: #{tpu_custom_call.1} parent=5 // pred_check
        %p1805 = pneg %p1804
      $region114: #{tpu_custom_call.1} parent=5 // pred_check_branch
        %1807 = sbr.rel (%p1805) target = $region116
      $region115: #{tpu_custom_call.1} parent=5 // pred_region
        %s1808 = ssub.s32 %s27, 2
      $region116: #{tpu_custom_call.1} parent=5 // pred_fallthru
        _
    $region6: #{tpu_custom_call.1} parent=1 // loop_footer
      %s31 = sadd.s32 1, %s27
    $region7: #{tpu_custom_call.1} parent=1 // loop_footer_branch
      %26 = sbr.rel target = $region3
    $region8: #{tpu_custom_call.1} parent=1 // loop_exit
      _
    %1809 = vsyncpa [#allocation4], 1
    %s1810 = scalar_lea.sflag [#allocation4], 1
    %1811 = vsyncpa %s1810, 1
    %1812 = vsyncpa [#allocation7], 1
    %s1813 = scalar_lea.sflag [#allocation7], 1
    %1814 = vsyncpa %s1813, 1
    %1815 = vsyncpa [#allocation10], 1
    %s1816 = scalar_lea.sflag [#allocation10], 1
    %1817 = vsyncpa %s1816, 1
    %1818 = vsyncpa [#allocation5], 1
    %s1819 = scalar_lea.sflag [#allocation5], 1
    %1820 = vsyncpa %s1819, 1

</llo_original>
